<compile_context>
chip_gen: v7x
topology: tpu7x:2x2x1
jax: 0.10.0
libtpu: 0.0.40
codegen_flags: <defaults>
</compile_context>

<pallas_src>
import math

import jax
import jax.numpy as jnp
from jax.experimental import pallas as pl
from jax.experimental.pallas import tpu as pltpu

BN_EPS = 1e-5
PAD_IN = 8          # pad in_channels (3) -> 8 with zero cols/rows (identical math)
PAD_CLASSES = 128   # lane-dense final output; sliced back to `classes` in wrapper
NEG_BIG = -1e30     # "-inf" stand-in: keeps empty-graph rows / padded logits finite

_VMEM = pl.BlockSpec(memory_space=pltpu.MemorySpace.VMEM)


# ---------------------------------------------------------------------------
# The one fused kernel: 5x GCN layer -> scatter_max pool -> FC head -> logsoftmax
# ---------------------------------------------------------------------------
def _fused_forward_kernel(
        adj_ref, x_ref, batch_ref,
        w0, s0, t0, w1, s1, t1, w2, s2, t2, w3, s3, t3, w4, s4, t4,
        fw1, fs1, ft1, fw2, fs2, ft2, fw3, fb3,
        out_ref, pooled_ref):
    adj = adj_ref[...]                                   # [N, N] bf16
    x = x_ref[...].astype(jnp.bfloat16)                  # [N, PAD_IN]

    # ---- 5 GCN layers: ReLU(scale * ((A @ X) @ W) + shift) ------------------
    # (A @ X) @ W is cheaper than A @ (X @ W) whenever Cin <= Cout (all layers).
    # scale/shift are the pre-folded BatchNorm(running stats) + conv bias.
    for w_r, s_r, t_r in ((w0, s0, t0), (w1, s1, t1), (w2, s2, t2),
                          (w3, s3, t3), (w4, s4, t4)):
        ax = jnp.dot(adj, x, preferred_element_type=jnp.float32)
        h = jnp.dot(ax.astype(jnp.bfloat16), w_r[...],
                    preferred_element_type=jnp.float32)
        h = h * s_r[...] + t_r[...]                      # folded bias + BN (f32)
        x = jnp.maximum(h, 0.0).astype(jnp.bfloat16)     # ReLU

    # ---- scatter_max over graph index: direct per-row stores into scratch ---
    xf = x.astype(jnp.float32)                           # [N, 1024]
    b = batch_ref[...]                                   # [N, 1] int32
    num_graphs = pooled_ref.shape[0]
    for g in range(num_graphs):                          # static, tiny
        mask = b == g
        row = jnp.max(jnp.where(mask, xf, NEG_BIG), axis=0, keepdims=True)
        pooled_ref[pl.ds(g, 1), :] = row

    pooled = pooled_ref[...].astype(jnp.bfloat16)        # [G, 1024]

    # ---- FC head: MLP(1024,512) -> MLP(512,128) -> Linear -> LogSoftmax -----
    h = jnp.dot(pooled, fw1[...], preferred_element_type=jnp.float32)
    h = jnp.maximum(h * fs1[...] + ft1[...], 0.0).astype(jnp.bfloat16)
    h = jnp.dot(h, fw2[...], preferred_element_type=jnp.float32)
    h = jnp.maximum(h * fs2[...] + ft2[...], 0.0).astype(jnp.bfloat16)
    logits = jnp.dot(h, fw3[...], preferred_element_type=jnp.float32) + fb3[...]

    zmax = jnp.max(logits, axis=1, keepdims=True)
    z = logits - zmax
    lse = jnp.log(jnp.sum(jnp.exp(z), axis=1, keepdims=True))
    out_ref[...] = z - lse


# ---------------------------------------------------------------------------
# Wrapper: BN/bias folding (constant folding on params), packing, pallas_call
# ---------------------------------------------------------------------------
def _fold_bn(bias, gamma, beta, mean, var):
    """BN(h + bias) with running stats ==  h*scale + shift."""
    scale = gamma * jax.lax.rsqrt(var + BN_EPS)
    shift = beta + (bias - mean) * scale
    return (scale.reshape(1, -1).astype(jnp.float32),
            shift.reshape(1, -1).astype(jnp.float32))


def gcn_classifier_forward(params, pos, adj, batch_2d, num_graphs, classes):
    x = jnp.pad(pos, ((0, 0), (0, PAD_IN - pos.shape[1]))).astype(jnp.float32)
    adj_bf = adj.astype(jnp.bfloat16)

    gcn_args = []
    for (w, b, gamma, beta, mean, var) in params["gcns"]:
        scale, shift = _fold_bn(b, gamma, beta, mean, var)
        gcn_args += [w.astype(jnp.bfloat16), scale, shift]

    (w1, b1, bn1), (w2, b2, bn2), (w3, b3) = params["fc"]
    s1, t1 = _fold_bn(b1, *bn1)
    s2, t2 = _fold_bn(b2, *bn2)
    # Lane-dense final output: pad the last linear to 128 columns; the padded
    # logits get a huge negative bias so they contribute nothing to softmax.
    w3p = jnp.pad(w3, ((0, 0), (0, PAD_CLASSES - classes))).astype(jnp.bfloat16)
    b3p = jnp.pad(b3, (0, PAD_CLASSES - classes),
                  constant_values=NEG_BIG).reshape(1, -1).astype(jnp.float32)
    fc_args = [w1.astype(jnp.bfloat16), s1, t1,
               w2.astype(jnp.bfloat16), s2, t2,
               w3p, b3p]

    c_last = params["gcns"][-1][0].shape[1]  # 1024
    args = [adj_bf, x, batch_2d] + gcn_args + fc_args

    out = pl.pallas_call(
        _fused_forward_kernel,
        out_shape=jax.ShapeDtypeStruct((num_graphs, PAD_CLASSES), jnp.float32),
        in_specs=[_VMEM] * len(args),
        out_specs=_VMEM,
        scratch_shapes=[pltpu.VMEM((num_graphs, c_last), jnp.float32)],
    )(*args)
    # TODO(synk): if N or num_graphs grows, add a node-row grid axis marked
    # "parallel" (v7x dual-TC) and tile/bf16 A_hat against the 64 MiB VMEM.
    return out[:, :classes]


# ---------------------------------------------------------------------------
# Glue: dense normalized adjacency, parameter init
# ---------------------------------------------------------------------------
def build_norm_adj(edge_index, num_nodes):
    src, dst = edge_index[0], edge_index[1]
    a = jnp.zeros((num_nodes, num_nodes), jnp.float32).at[dst, src].set(1.0)
    a = a + jnp.eye(num_nodes, dtype=jnp.float32)          # add self loops
    deg = jnp.sum(a, axis=1)
    dinv = jax.lax.rsqrt(deg)
    return a * dinv[:, None] * dinv[None, :]


def _glorot(key, fin, fout):
    lim = math.sqrt(6.0 / (fin + fout))
    return jax.random.uniform(key, (fin, fout), jnp.float32, -lim, lim)


def _linear(key, fin, fout):
    k1, k2 = jax.random.split(key)
    lim = 1.0 / math.sqrt(fin)
    w = jax.random.uniform(k1, (fin, fout), jnp.float32, -lim, lim)
    b = jax.random.uniform(k2, (fout,), jnp.float32, -lim, lim)
    return w, b


def _bn_params(c):
    return (jnp.ones((c,), jnp.float32), jnp.zeros((c,), jnp.float32),
            jnp.zeros((c,), jnp.float32), jnp.ones((c,), jnp.float32))


def init_params(key, in_channels, classes):
    sizes = [(in_channels, 128), (128, 128), (128, 256), (256, 256), (256, 1024)]
    keys = jax.random.split(key, len(sizes) + 3)
    gcns = []
    for idx, (i, o) in enumerate(sizes):
        w = _glorot(keys[idx], i, o)
        if idx == 0:  # pad contracting dim 3 -> PAD_IN with zero rows (identical result)
            w = jnp.pad(w, ((0, PAD_IN - i), (0, 0)))
        b = jnp.zeros((o,), jnp.float32)
        gamma, beta, mean, var = _bn_params(o)
        gcns.append((w, b, gamma, beta, mean, var))
    w1, b1 = _linear(keys[-3], 1024, 512)
    w2, b2 = _linear(keys[-2], 512, 128)
    w3, b3 = _linear(keys[-1], 128, classes)
    fc = ((w1, b1, _bn_params(512)), (w2, b2, _bn_params(128)), (w3, b3))
    return {"gcns": gcns, "fc": fc}


if __name__ == "__main__":
    in_channels, classes = 3, 10
    nodes_per_graph, num_graphs = 8, 2
    num_nodes = nodes_per_graph * num_graphs

    key = jax.random.PRNGKey(0)
    kpos, kparams = jax.random.split(key)

    # data.pos
    pos = jax.random.normal(kpos, (num_nodes, in_channels), jnp.float32)

    # data.edge_index: deterministic kNN-style ring (k=2) within each graph
    src, dst = [], []
    for g in range(num_graphs):
        base = g * nodes_per_graph
        for i in range(nodes_per_graph):
            for d in (1, 2):
                j = (i + d) % nodes_per_graph
                src += [base + i, base + j]
                dst += [base + j, base + i]
    edge_index = jnp.array([src, dst], dtype=jnp.int32)

    # data.batch
    batch = jnp.repeat(jnp.arange(num_graphs, dtype=jnp.int32), nodes_per_graph)
    batch_2d = batch[:, None]

    adj = build_norm_adj(edge_index, num_nodes)
    params = init_params(kparams, in_channels, classes)

    out = gcn_classifier_forward(params, pos, adj, batch_2d, num_graphs, classes)
    out = jax.block_until_ready(out)

    assert out.shape == (num_graphs, classes)
    # rows of log-softmax must exponentiate-and-sum to ~1
    assert jnp.allclose(jnp.sum(jnp.exp(out), axis=1), 1.0, atol=1e-4)
    assert bool(jnp.all(jnp.isfinite(out)))
    print("KERNEL_OK")
</pallas_src>

<mosaic_0001>
module attributes {stable_mosaic.version = 11 : i64} {
  func.func @_fused_forward_kernel(%arg0: memref<16x16xbf16, #tpu.memory_space<vmem>>, %arg1: memref<16x8xf32, #tpu.memory_space<vmem>>, %arg2: memref<16x1xi32, #tpu.memory_space<vmem>>, %arg3: memref<8x128xbf16, #tpu.memory_space<vmem>>, %arg4: memref<1x128xf32, #tpu.memory_space<vmem>>, %arg5: memref<1x128xf32, #tpu.memory_space<vmem>>, %arg6: memref<128x128xbf16, #tpu.memory_space<vmem>>, %arg7: memref<1x128xf32, #tpu.memory_space<vmem>>, %arg8: memref<1x128xf32, #tpu.memory_space<vmem>>, %arg9: memref<128x256xbf16, #tpu.memory_space<vmem>>, %arg10: memref<1x256xf32, #tpu.memory_space<vmem>>, %arg11: memref<1x256xf32, #tpu.memory_space<vmem>>, %arg12: memref<256x256xbf16, #tpu.memory_space<vmem>>, %arg13: memref<1x256xf32, #tpu.memory_space<vmem>>, %arg14: memref<1x256xf32, #tpu.memory_space<vmem>>, %arg15: memref<256x1024xbf16, #tpu.memory_space<vmem>>, %arg16: memref<1x1024xf32, #tpu.memory_space<vmem>>, %arg17: memref<1x1024xf32, #tpu.memory_space<vmem>>, %arg18: memref<1024x512xbf16, #tpu.memory_space<vmem>>, %arg19: memref<1x512xf32, #tpu.memory_space<vmem>>, %arg20: memref<1x512xf32, #tpu.memory_space<vmem>>, %arg21: memref<512x128xbf16, #tpu.memory_space<vmem>>, %arg22: memref<1x128xf32, #tpu.memory_space<vmem>>, %arg23: memref<1x128xf32, #tpu.memory_space<vmem>>, %arg24: memref<128x128xbf16, #tpu.memory_space<vmem>>, %arg25: memref<1x128xf32, #tpu.memory_space<vmem>>, %arg26: memref<2x128xf32, #tpu.memory_space<vmem>>, %arg27: memref<2x1024xf32, #tpu.memory_space<vmem>>) attributes {dimension_semantics = [], scalar_prefetch = 0 : i64, scratch_operands = 1 : i64, tpu.core_type = #tpu.core_type<tc>} {
    %c0 = arith.constant 0 : index
    %c0_0 = arith.constant 0 : index
    %0 = vector.load %arg0[%c0, %c0_0] : memref<16x16xbf16, #tpu.memory_space<vmem>>, vector<16x16xbf16>
    %c0_1 = arith.constant 0 : index
    %c0_2 = arith.constant 0 : index
    %1 = vector.load %arg1[%c0_1, %c0_2] : memref<16x8xf32, #tpu.memory_space<vmem>>, vector<16x8xf32>
    %2 = arith.truncf %1 : vector<16x8xf32> to vector<16x8xbf16>
    %cst = arith.constant dense<0.000000e+00> : vector<16x8xf32>
    %3 = tpu.matmul %0, %2, %cst {dimension_numbers = #tpu.dot_dimension_numbers<[1], [0], [0], [1], [0, 0, 1, 1], [], []>} : vector<16x16xbf16>, vector<16x8xbf16>, vector<16x8xf32> -> vector<16x8xf32>
    %4 = arith.truncf %3 : vector<16x8xf32> to vector<16x8xbf16>
    %c0_3 = arith.constant 0 : index
    %c0_4 = arith.constant 0 : index
    %5 = vector.load %arg3[%c0_3, %c0_4] : memref<8x128xbf16, #tpu.memory_space<vmem>>, vector<8x128xbf16>
    %cst_5 = arith.constant dense<0.000000e+00> : vector<16x128xf32>
    %6 = tpu.matmul %4, %5, %cst_5 {dimension_numbers = #tpu.dot_dimension_numbers<[1], [0], [0], [1], [0, 0, 1, 1], [], []>} : vector<16x8xbf16>, vector<8x128xbf16>, vector<16x128xf32> -> vector<16x128xf32>
    %c0_6 = arith.constant 0 : index
    %c0_7 = arith.constant 0 : index
    %7 = vector.load %arg4[%c0_6, %c0_7] : memref<1x128xf32, #tpu.memory_space<vmem>>, vector<1x128xf32>
    %8 = vector.broadcast %7 : vector<1x128xf32> to vector<16x128xf32>
    %9 = arith.mulf %6, %8 : vector<16x128xf32>
    %c0_8 = arith.constant 0 : index
    %c0_9 = arith.constant 0 : index
    %10 = vector.load %arg5[%c0_8, %c0_9] : memref<1x128xf32, #tpu.memory_space<vmem>>, vector<1x128xf32>
    %11 = vector.broadcast %10 : vector<1x128xf32> to vector<16x128xf32>
    %12 = arith.addf %9, %11 : vector<16x128xf32>
    %cst_10 = arith.constant 0.000000e+00 : f32
    %13 = vector.broadcast %cst_10 : f32 to vector<16x128xf32>
    %14 = arith.maximumf %12, %13 : vector<16x128xf32>
    %15 = arith.truncf %14 : vector<16x128xf32> to vector<16x128xbf16>
    %cst_11 = arith.constant dense<0.000000e+00> : vector<16x128xf32>
    %16 = tpu.matmul %0, %15, %cst_11 {dimension_numbers = #tpu.dot_dimension_numbers<[1], [0], [0], [1], [0, 0, 1, 1], [], []>} : vector<16x16xbf16>, vector<16x128xbf16>, vector<16x128xf32> -> vector<16x128xf32>
    %17 = arith.truncf %16 : vector<16x128xf32> to vector<16x128xbf16>
    %c0_12 = arith.constant 0 : index
    %c0_13 = arith.constant 0 : index
    %18 = vector.load %arg6[%c0_12, %c0_13] : memref<128x128xbf16, #tpu.memory_space<vmem>>, vector<128x128xbf16>
    %cst_14 = arith.constant dense<0.000000e+00> : vector<16x128xf32>
    %19 = tpu.matmul %17, %18, %cst_14 {dimension_numbers = #tpu.dot_dimension_numbers<[1], [0], [0], [1], [0, 0, 1, 1], [], []>} : vector<16x128xbf16>, vector<128x128xbf16>, vector<16x128xf32> -> vector<16x128xf32>
    %c0_15 = arith.constant 0 : index
    %c0_16 = arith.constant 0 : index
    %20 = vector.load %arg7[%c0_15, %c0_16] : memref<1x128xf32, #tpu.memory_space<vmem>>, vector<1x128xf32>
    %21 = vector.broadcast %20 : vector<1x128xf32> to vector<16x128xf32>
    %22 = arith.mulf %19, %21 : vector<16x128xf32>
    %c0_17 = arith.constant 0 : index
    %c0_18 = arith.constant 0 : index
    %23 = vector.load %arg8[%c0_17, %c0_18] : memref<1x128xf32, #tpu.memory_space<vmem>>, vector<1x128xf32>
    %24 = vector.broadcast %23 : vector<1x128xf32> to vector<16x128xf32>
    %25 = arith.addf %22, %24 : vector<16x128xf32>
    %cst_19 = arith.constant 0.000000e+00 : f32
    %26 = vector.broadcast %cst_19 : f32 to vector<16x128xf32>
    %27 = arith.maximumf %25, %26 : vector<16x128xf32>
    %28 = arith.truncf %27 : vector<16x128xf32> to vector<16x128xbf16>
    %cst_20 = arith.constant dense<0.000000e+00> : vector<16x128xf32>
    %29 = tpu.matmul %0, %28, %cst_20 {dimension_numbers = #tpu.dot_dimension_numbers<[1], [0], [0], [1], [0, 0, 1, 1], [], []>} : vector<16x16xbf16>, vector<16x128xbf16>, vector<16x128xf32> -> vector<16x128xf32>
    %30 = arith.truncf %29 : vector<16x128xf32> to vector<16x128xbf16>
    %c0_21 = arith.constant 0 : index
    %c0_22 = arith.constant 0 : index
    %31 = vector.load %arg9[%c0_21, %c0_22] : memref<128x256xbf16, #tpu.memory_space<vmem>>, vector<128x256xbf16>
    %cst_23 = arith.constant dense<0.000000e+00> : vector<16x256xf32>
    %32 = tpu.matmul %30, %31, %cst_23 {dimension_numbers = #tpu.dot_dimension_numbers<[1], [0], [0], [1], [0, 0, 1, 1], [], []>} : vector<16x128xbf16>, vector<128x256xbf16>, vector<16x256xf32> -> vector<16x256xf32>
    %c0_24 = arith.constant 0 : index
    %c0_25 = arith.constant 0 : index
    %33 = vector.load %arg10[%c0_24, %c0_25] : memref<1x256xf32, #tpu.memory_space<vmem>>, vector<1x256xf32>
    %34 = vector.broadcast %33 : vector<1x256xf32> to vector<16x256xf32>
    %35 = arith.mulf %32, %34 : vector<16x256xf32>
    %c0_26 = arith.constant 0 : index
    %c0_27 = arith.constant 0 : index
    %36 = vector.load %arg11[%c0_26, %c0_27] : memref<1x256xf32, #tpu.memory_space<vmem>>, vector<1x256xf32>
    %37 = vector.broadcast %36 : vector<1x256xf32> to vector<16x256xf32>
    %38 = arith.addf %35, %37 : vector<16x256xf32>
    %cst_28 = arith.constant 0.000000e+00 : f32
    %39 = vector.broadcast %cst_28 : f32 to vector<16x256xf32>
    %40 = arith.maximumf %38, %39 : vector<16x256xf32>
    %41 = arith.truncf %40 : vector<16x256xf32> to vector<16x256xbf16>
    %cst_29 = arith.constant dense<0.000000e+00> : vector<16x256xf32>
    %42 = tpu.matmul %0, %41, %cst_29 {dimension_numbers = #tpu.dot_dimension_numbers<[1], [0], [0], [1], [0, 0, 1, 1], [], []>} : vector<16x16xbf16>, vector<16x256xbf16>, vector<16x256xf32> -> vector<16x256xf32>
    %43 = arith.truncf %42 : vector<16x256xf32> to vector<16x256xbf16>
    %c0_30 = arith.constant 0 : index
    %c0_31 = arith.constant 0 : index
    %44 = vector.load %arg12[%c0_30, %c0_31] : memref<256x256xbf16, #tpu.memory_space<vmem>>, vector<256x256xbf16>
    %cst_32 = arith.constant dense<0.000000e+00> : vector<16x256xf32>
    %45 = tpu.matmul %43, %44, %cst_32 {dimension_numbers = #tpu.dot_dimension_numbers<[1], [0], [0], [1], [0, 0, 1, 1], [], []>} : vector<16x256xbf16>, vector<256x256xbf16>, vector<16x256xf32> -> vector<16x256xf32>
    %c0_33 = arith.constant 0 : index
    %c0_34 = arith.constant 0 : index
    %46 = vector.load %arg13[%c0_33, %c0_34] : memref<1x256xf32, #tpu.memory_space<vmem>>, vector<1x256xf32>
    %47 = vector.broadcast %46 : vector<1x256xf32> to vector<16x256xf32>
    %48 = arith.mulf %45, %47 : vector<16x256xf32>
    %c0_35 = arith.constant 0 : index
    %c0_36 = arith.constant 0 : index
    %49 = vector.load %arg14[%c0_35, %c0_36] : memref<1x256xf32, #tpu.memory_space<vmem>>, vector<1x256xf32>
    %50 = vector.broadcast %49 : vector<1x256xf32> to vector<16x256xf32>
    %51 = arith.addf %48, %50 : vector<16x256xf32>
    %cst_37 = arith.constant 0.000000e+00 : f32
    %52 = vector.broadcast %cst_37 : f32 to vector<16x256xf32>
    %53 = arith.maximumf %51, %52 : vector<16x256xf32>
    %54 = arith.truncf %53 : vector<16x256xf32> to vector<16x256xbf16>
    %cst_38 = arith.constant dense<0.000000e+00> : vector<16x256xf32>
    %55 = tpu.matmul %0, %54, %cst_38 {dimension_numbers = #tpu.dot_dimension_numbers<[1], [0], [0], [1], [0, 0, 1, 1], [], []>} : vector<16x16xbf16>, vector<16x256xbf16>, vector<16x256xf32> -> vector<16x256xf32>
    %56 = arith.truncf %55 : vector<16x256xf32> to vector<16x256xbf16>
    %c0_39 = arith.constant 0 : index
    %c0_40 = arith.constant 0 : index
    %57 = vector.load %arg15[%c0_39, %c0_40] : memref<256x1024xbf16, #tpu.memory_space<vmem>>, vector<256x1024xbf16>
    %cst_41 = arith.constant dense<0.000000e+00> : vector<16x1024xf32>
    %58 = tpu.matmul %56, %57, %cst_41 {dimension_numbers = #tpu.dot_dimension_numbers<[1], [0], [0], [1], [0, 0, 1, 1], [], []>} : vector<16x256xbf16>, vector<256x1024xbf16>, vector<16x1024xf32> -> vector<16x1024xf32>
    %c0_42 = arith.constant 0 : index
    %c0_43 = arith.constant 0 : index
    %59 = vector.load %arg16[%c0_42, %c0_43] : memref<1x1024xf32, #tpu.memory_space<vmem>>, vector<1x1024xf32>
    %60 = vector.broadcast %59 : vector<1x1024xf32> to vector<16x1024xf32>
    %61 = arith.mulf %58, %60 : vector<16x1024xf32>
    %c0_44 = arith.constant 0 : index
    %c0_45 = arith.constant 0 : index
    %62 = vector.load %arg17[%c0_44, %c0_45] : memref<1x1024xf32, #tpu.memory_space<vmem>>, vector<1x1024xf32>
    %63 = vector.broadcast %62 : vector<1x1024xf32> to vector<16x1024xf32>
    %64 = arith.addf %61, %63 : vector<16x1024xf32>
    %cst_46 = arith.constant 0.000000e+00 : f32
    %65 = vector.broadcast %cst_46 : f32 to vector<16x1024xf32>
    %66 = arith.maximumf %64, %65 : vector<16x1024xf32>
    %67 = arith.truncf %66 : vector<16x1024xf32> to vector<16x1024xbf16>
    %68 = arith.extf %67 : vector<16x1024xbf16> to vector<16x1024xf32>
    %c0_47 = arith.constant 0 : index
    %c0_48 = arith.constant 0 : index
    %69 = vector.load %arg2[%c0_47, %c0_48] : memref<16x1xi32, #tpu.memory_space<vmem>>, vector<16x1xi32>
    %c0_i32 = arith.constant 0 : i32
    %70 = vector.broadcast %c0_i32 : i32 to vector<16x1xi32>
    %71 = arith.cmpi eq, %69, %70 : vector<16x1xi32>
    %cst_49 = arith.constant -1.000000e+30 : f32
    %72 = vector.shape_cast %71 : vector<16x1xi1> to vector<16x1xi1>
    %73 = vector.broadcast %72 : vector<16x1xi1> to vector<16x1024xi1>
    %74 = vector.broadcast %cst_49 : f32 to vector<16x1024xf32>
    %75 = arith.select %73, %68, %74 : vector<16x1024xi1>, vector<16x1024xf32>
    %cst_50 = arith.constant dense<0xFF800000> : vector<1024xf32>
    %76 = vector.multi_reduction <maximumf>, %75, %cst_50 [0] : vector<16x1024xf32> to vector<1024xf32>
    %77 = vector.shape_cast %76 : vector<1024xf32> to vector<1x1024xf32>
    %c0_51 = arith.constant 0 : index
    %c0_52 = arith.constant 0 : index
    %78 = vector.load %arg27[%c0_51, %c0_52] : memref<2x1024xf32, #tpu.memory_space<vmem>>, vector<1x1024xf32>
    tpu.vector_store %arg27[%c0_51, %c0_52], %77 {strides = array<i32>} : memref<2x1024xf32, #tpu.memory_space<vmem>>, vector<1x1024xf32>,
    %c1_i32 = arith.constant 1 : i32
    %79 = vector.broadcast %c1_i32 : i32 to vector<16x1xi32>
    %80 = arith.cmpi eq, %69, %79 : vector<16x1xi32>
    %cst_53 = arith.constant -1.000000e+30 : f32
    %81 = vector.shape_cast %80 : vector<16x1xi1> to vector<16x1xi1>
    %82 = vector.broadcast %81 : vector<16x1xi1> to vector<16x1024xi1>
    %83 = vector.broadcast %cst_53 : f32 to vector<16x1024xf32>
    %84 = arith.select %82, %68, %83 : vector<16x1024xi1>, vector<16x1024xf32>
    %cst_54 = arith.constant dense<0xFF800000> : vector<1024xf32>
    %85 = vector.multi_reduction <maximumf>, %84, %cst_54 [0] : vector<16x1024xf32> to vector<1024xf32>
    %86 = vector.shape_cast %85 : vector<1024xf32> to vector<1x1024xf32>
    %c1 = arith.constant 1 : index
    %c0_55 = arith.constant 0 : index
    %87 = vector.load %arg27[%c1, %c0_55] : memref<2x1024xf32, #tpu.memory_space<vmem>>, vector<1x1024xf32>
    tpu.vector_store %arg27[%c1, %c0_55], %86 {strides = array<i32>} : memref<2x1024xf32, #tpu.memory_space<vmem>>, vector<1x1024xf32>,
    %c0_56 = arith.constant 0 : index
    %c0_57 = arith.constant 0 : index
    %88 = vector.load %arg27[%c0_56, %c0_57] : memref<2x1024xf32, #tpu.memory_space<vmem>>, vector<2x1024xf32>
    %89 = arith.truncf %88 : vector<2x1024xf32> to vector<2x1024xbf16>
    %c0_58 = arith.constant 0 : index
    %c0_59 = arith.constant 0 : index
    %90 = vector.load %arg18[%c0_58, %c0_59] : memref<1024x512xbf16, #tpu.memory_space<vmem>>, vector<1024x512xbf16>
    %cst_60 = arith.constant dense<0.000000e+00> : vector<2x512xf32>
    %91 = tpu.matmul %89, %90, %cst_60 {dimension_numbers = #tpu.dot_dimension_numbers<[1], [0], [0], [1], [0, 0, 1, 1], [], []>} : vector<2x1024xbf16>, vector<1024x512xbf16>, vector<2x512xf32> -> vector<2x512xf32>
    %c0_61 = arith.constant 0 : index
    %c0_62 = arith.constant 0 : index
    %92 = vector.load %arg19[%c0_61, %c0_62] : memref<1x512xf32, #tpu.memory_space<vmem>>, vector<1x512xf32>
    %93 = vector.broadcast %92 : vector<1x512xf32> to vector<2x512xf32>
    %94 = arith.mulf %91, %93 : vector<2x512xf32>
    %c0_63 = arith.constant 0 : index
    %c0_64 = arith.constant 0 : index
    %95 = vector.load %arg20[%c0_63, %c0_64] : memref<1x512xf32, #tpu.memory_space<vmem>>, vector<1x512xf32>
    %96 = vector.broadcast %95 : vector<1x512xf32> to vector<2x512xf32>
    %97 = arith.addf %94, %96 : vector<2x512xf32>
    %cst_65 = arith.constant 0.000000e+00 : f32
    %98 = vector.broadcast %cst_65 : f32 to vector<2x512xf32>
    %99 = arith.maximumf %97, %98 : vector<2x512xf32>
    %100 = arith.truncf %99 : vector<2x512xf32> to vector<2x512xbf16>
    %c0_66 = arith.constant 0 : index
    %c0_67 = arith.constant 0 : index
    %101 = vector.load %arg21[%c0_66, %c0_67] : memref<512x128xbf16, #tpu.memory_space<vmem>>, vector<512x128xbf16>
    %cst_68 = arith.constant dense<0.000000e+00> : vector<2x128xf32>
    %102 = tpu.matmul %100, %101, %cst_68 {dimension_numbers = #tpu.dot_dimension_numbers<[1], [0], [0], [1], [0, 0, 1, 1], [], []>} : vector<2x512xbf16>, vector<512x128xbf16>, vector<2x128xf32> -> vector<2x128xf32>
    %c0_69 = arith.constant 0 : index
    %c0_70 = arith.constant 0 : index
    %103 = vector.load %arg22[%c0_69, %c0_70] : memref<1x128xf32, #tpu.memory_space<vmem>>, vector<1x128xf32>
    %104 = vector.broadcast %103 : vector<1x128xf32> to vector<2x128xf32>
    %105 = arith.mulf %102, %104 : vector<2x128xf32>
    %c0_71 = arith.constant 0 : index
    %c0_72 = arith.constant 0 : index
    %106 = vector.load %arg23[%c0_71, %c0_72] : memref<1x128xf32, #tpu.memory_space<vmem>>, vector<1x128xf32>
    %107 = vector.broadcast %106 : vector<1x128xf32> to vector<2x128xf32>
    %108 = arith.addf %105, %107 : vector<2x128xf32>
    %cst_73 = arith.constant 0.000000e+00 : f32
    %109 = vector.broadcast %cst_73 : f32 to vector<2x128xf32>
    %110 = arith.maximumf %108, %109 : vector<2x128xf32>
    %111 = arith.truncf %110 : vector<2x128xf32> to vector<2x128xbf16>
    %c0_74 = arith.constant 0 : index
    %c0_75 = arith.constant 0 : index
    %112 = vector.load %arg24[%c0_74, %c0_75] : memref<128x128xbf16, #tpu.memory_space<vmem>>, vector<128x128xbf16>
    %cst_76 = arith.constant dense<0.000000e+00> : vector<2x128xf32>
    %113 = tpu.matmul %111, %112, %cst_76 {dimension_numbers = #tpu.dot_dimension_numbers<[1], [0], [0], [1], [0, 0, 1, 1], [], []>} : vector<2x128xbf16>, vector<128x128xbf16>, vector<2x128xf32> -> vector<2x128xf32>
    %c0_77 = arith.constant 0 : index
    %c0_78 = arith.constant 0 : index
    %114 = vector.load %arg25[%c0_77, %c0_78] : memref<1x128xf32, #tpu.memory_space<vmem>>, vector<1x128xf32>
    %115 = vector.broadcast %114 : vector<1x128xf32> to vector<2x128xf32>
    %116 = arith.addf %113, %115 : vector<2x128xf32>
    %cst_79 = arith.constant dense<0xFF800000> : vector<2xf32>
    %117 = vector.multi_reduction <maximumf>, %116, %cst_79 [1] : vector<2x128xf32> to vector<2xf32>
    %118 = vector.shape_cast %117 : vector<2xf32> to vector<2x1xf32>
    %119 = vector.broadcast %118 : vector<2x1xf32> to vector<2x128xf32>
    %120 = arith.subf %116, %119 : vector<2x128xf32>
    %121 = math.exp %120 : vector<2x128xf32>
    %cst_80 = arith.constant dense<0.000000e+00> : vector<2xf32>
    %122 = vector.multi_reduction <add>, %121, %cst_80 [1] : vector<2x128xf32> to vector<2xf32>
    %123 = vector.shape_cast %122 : vector<2xf32> to vector<2x1xf32>
    %124 = math.log %123 : vector<2x1xf32>
    %125 = vector.broadcast %124 : vector<2x1xf32> to vector<2x128xf32>
    %126 = arith.subf %120, %125 : vector<2x128xf32>
    %c0_81 = arith.constant 0 : index
    %c0_82 = arith.constant 0 : index
    %127 = vector.load %arg26[%c0_81, %c0_82] : memref<2x128xf32, #tpu.memory_space<vmem>>, vector<2x128xf32>
    tpu.vector_store %arg26[%c0_81, %c0_82], %126 {strides = array<i32>} : memref<2x128xf32, #tpu.memory_space<vmem>>, vector<2x128xf32>,
    return
  }
}

</mosaic_0001>

<llo_original>
// kernel: tpu_custom_call.1
$region0: #{tpu_custom_call.1}
  #allocation0 [shape = 'u32[]', space=smem, size = 0x4, offset = 0x4, fixed_abs, tag = 'smem constant byte address 0x4 - core index']
  #allocation1 [shape = 'u32[144,128]{1,0:T(1,128)}', space=vmem, size = 0x12000, scoped, tag = 'internal scratch']
  #allocation2 [shape = 'f32[2,1024]{1,0:T(2,128)}', space=vmem, size = 0x2000, scoped, tag = 'scratch operand']
  %s0 = inlined_call_operand.vmem [shape: bf16[16,16], index: 0, kind: input, shape index: {}]
  %s1 = inlined_call_operand.vmem [shape: f32[16,8], index: 1, kind: input, shape index: {}]
  %s2 = inlined_call_operand.vmem [shape: s32[16,1], index: 2, kind: input, shape index: {}]
  %s3 = inlined_call_operand.vmem [shape: bf16[8,128], index: 3, kind: input, shape index: {}]
  %s4 = inlined_call_operand.vmem [shape: f32[1,128], index: 4, kind: input, shape index: {}]
  %s5 = inlined_call_operand.vmem [shape: f32[1,128], index: 5, kind: input, shape index: {}]
  %s6 = inlined_call_operand.hbm [shape: bf16[128,128], index: 6, kind: input, shape index: {}]
  %s7 = inlined_call_operand.vmem [shape: f32[1,128], index: 7, kind: input, shape index: {}]
  %s8 = inlined_call_operand.vmem [shape: f32[1,128], index: 8, kind: input, shape index: {}]
  %s9 = inlined_call_operand.hbm [shape: bf16[128,256], index: 9, kind: input, shape index: {}]
  %s10 = inlined_call_operand.vmem [shape: f32[1,256], index: 10, kind: input, shape index: {}]
  %s11 = inlined_call_operand.vmem [shape: f32[1,256], index: 11, kind: input, shape index: {}]
  %s12 = inlined_call_operand.hbm [shape: bf16[256,256], index: 12, kind: input, shape index: {}]
  %s13 = inlined_call_operand.vmem [shape: f32[1,256], index: 13, kind: input, shape index: {}]
  %s14 = inlined_call_operand.vmem [shape: f32[1,256], index: 14, kind: input, shape index: {}]
  %s15 = inlined_call_operand.hbm [shape: bf16[256,1024], index: 15, kind: input, shape index: {}]
  %s16 = inlined_call_operand.vmem [shape: f32[1,1024], index: 16, kind: input, shape index: {}]
  %s17 = inlined_call_operand.vmem [shape: f32[1,1024], index: 17, kind: input, shape index: {}]
  %s18 = inlined_call_operand.hbm [shape: bf16[1024,512], index: 18, kind: input, shape index: {}]
  %s19 = inlined_call_operand.vmem [shape: f32[1,512], index: 19, kind: input, shape index: {}]
  %s20 = inlined_call_operand.vmem [shape: f32[1,512], index: 20, kind: input, shape index: {}]
  %s21 = inlined_call_operand.hbm [shape: bf16[512,128], index: 21, kind: input, shape index: {}]
  %s22 = inlined_call_operand.vmem [shape: f32[1,128], index: 22, kind: input, shape index: {}]
  %s23 = inlined_call_operand.vmem [shape: f32[1,128], index: 23, kind: input, shape index: {}]
  %s24 = inlined_call_operand.vmem [shape: bf16[128,128], index: 24, kind: input, shape index: {}]
  %s25 = inlined_call_operand.vmem [shape: f32[1,128], index: 25, kind: input, shape index: {}]
  %s26 = inlined_call_operand.hbm [shape: f32[2,128], index: 26, kind: output, shape index: {}]
  %s27 = sld [smem:[#allocation0]]
  $region138: #{tpu_custom_call.1} parent=0
    _
  %s29 = ssub.s32 1, %s27
  %s30 = scalar_select 0, %s29, %s27
  $region1: #{tpu_custom_call.1} parent=0
    #allocation3 [shape = 'u8[32768]{0}', space=vmem, size = 0x8000, scoped, tag = 'input window, operand 6, single buffered']
    #allocation4 [shape = 's32[1]{0}', space=sflag, size = 0x4, scoped, tag = 'scoped memory for tpu_custom_call.1']
    #allocation5 [shape = 's32[1]{0}', space=sflag, size = 0x4, scoped, tag = 'scoped memory for tpu_custom_call.1']
    #allocation6 [shape = 'u8[65536]{0}', space=vmem, size = 0x10000, scoped, tag = 'input window, operand 9, single buffered']
    #allocation7 [shape = 's32[1]{0}', space=sflag, size = 0x4, scoped, tag = 'scoped memory for tpu_custom_call.1']
    #allocation8 [shape = 'u8[131072]{0}', space=vmem, size = 0x20000, scoped, tag = 'input window, operand 12, single buffered']
    #allocation9 [shape = 'u8[524288]{0}', space=vmem, size = 0x80000, scoped, tag = 'input window, operand 15, single buffered']
    #allocation10 [shape = 's32[1]{0}', space=sflag, size = 0x4, scoped, tag = 'scoped memory for tpu_custom_call.1']
    #allocation11 [shape = 'u8[1048576]{0}', space=vmem, size = 0x100000, scoped, tag = 'input window, operand 18, single buffered']
    #allocation12 [shape = 'u8[131072]{0}', space=vmem, size = 0x20000, scoped, tag = 'input window, operand 21, single buffered']
    #allocation13 [shape = 's32[1]{0}', space=sflag, size = 0x4, scoped, tag = 'scoped memory for tpu_custom_call.1']
    #allocation14 [shape = 'u8[1024]{0}', space=vmem, size = 0x400, scoped, tag = 'output window, operand 0, single buffered']
    %31 = vsyncpa [#allocation4], 0
    %32 = vsyncpa [#allocation7], 0
    %33 = vsyncpa [#allocation10], 0
    %34 = vsyncpa [#allocation13], 0
    %35 = vsyncpa [#allocation5], 0
    // Predicated region
    $region2: #{tpu_custom_call.1} parent=1 // pred_check
      _
    $region3: #{tpu_custom_call.1} parent=1 // pred_check_branch
      %37 = sbr.rel (0) target = $region5
    $region4: #{tpu_custom_call.1} parent=1 // pred_region
      _
    $region5: #{tpu_custom_call.1} parent=1 // pred_fallthru
      _
    // Predicated region
    $region6: #{tpu_custom_call.1} parent=1 // pred_check
      _
    $region7: #{tpu_custom_call.1} parent=1 // pred_check_branch
      %39 = sbr.rel (0) target = $region9
    $region8: #{tpu_custom_call.1} parent=1 // pred_region
      _
    $region9: #{tpu_custom_call.1} parent=1 // pred_fallthru
      _
    // Predicated region
    $region10: #{tpu_custom_call.1} parent=1 // pred_check
      _
    $region11: #{tpu_custom_call.1} parent=1 // pred_check_branch
      %41 = sbr.rel (0) target = $region13
    $region12: #{tpu_custom_call.1} parent=1 // pred_region
      _
    $region13: #{tpu_custom_call.1} parent=1 // pred_fallthru
      _
    // Predicated region
    $region14: #{tpu_custom_call.1} parent=1 // pred_check
      _
    $region15: #{tpu_custom_call.1} parent=1 // pred_check_branch
      %43 = sbr.rel (0) target = $region17
    $region16: #{tpu_custom_call.1} parent=1 // pred_region
      _
    $region17: #{tpu_custom_call.1} parent=1 // pred_fallthru
      _
    // Predicated region
    $region18: #{tpu_custom_call.1} parent=1 // pred_check
      _
    $region19: #{tpu_custom_call.1} parent=1 // pred_check_branch
      %45 = sbr.rel (0) target = $region21
    $region20: #{tpu_custom_call.1} parent=1 // pred_region
      _
    $region21: #{tpu_custom_call.1} parent=1 // pred_fallthru
      _
    // Predicated region
    $region22: #{tpu_custom_call.1} parent=1 // pred_check
      _
    $region23: #{tpu_custom_call.1} parent=1 // pred_check_branch
      %47 = sbr.rel (0) target = $region25
    $region24: #{tpu_custom_call.1} parent=1 // pred_region
      _
    $region25: #{tpu_custom_call.1} parent=1 // pred_fallthru
      _
    // Predicated region
    $region26: #{tpu_custom_call.1} parent=1 // pred_check
      _
    $region27: #{tpu_custom_call.1} parent=1 // pred_check_branch
      %49 = sbr.rel (0) target = $region29
    $region28: #{tpu_custom_call.1} parent=1 // pred_region
      %s51 = ssub.s32 1024, 1024
      %52 = vsyncadd [#allocation4], %s51
      %s53 = sshll.u32 [#allocation3], 4
      %s54 = int_to_ptr.vmem [resolvable:$true] %s53
      %59 = dma.hbm_to_vmem [thread:$0]  %s6, 1024, %s54, [#allocation4], 64, 64, 4
    $region29: #{tpu_custom_call.1} parent=1 // pred_fallthru
      _
    // Predicated region
    $region30: #{tpu_custom_call.1} parent=1 // pred_check
      _
    $region31: #{tpu_custom_call.1} parent=1 // pred_check_branch
      %61 = sbr.rel (0) target = $region33
    $region32: #{tpu_custom_call.1} parent=1 // pred_region
      _
    $region33: #{tpu_custom_call.1} parent=1 // pred_fallthru
      _
    // Predicated region
    $region34: #{tpu_custom_call.1} parent=1 // pred_check
      _
    $region35: #{tpu_custom_call.1} parent=1 // pred_check_branch
      %63 = sbr.rel (0) target = $region37
    $region36: #{tpu_custom_call.1} parent=1 // pred_region
      _
    $region37: #{tpu_custom_call.1} parent=1 // pred_fallthru
      _
    // Predicated region
    $region38: #{tpu_custom_call.1} parent=1 // pred_check
      _
    $region39: #{tpu_custom_call.1} parent=1 // pred_check_branch
      %65 = sbr.rel (0) target = $region41
    $region40: #{tpu_custom_call.1} parent=1 // pred_region
      %s67 = ssub.s32 2048, 2048
      %68 = vsyncadd [#allocation7], %s67
      %s69 = sshll.u32 [#allocation6], 4
      %s70 = int_to_ptr.vmem [resolvable:$true] %s69
      %75 = dma.hbm_to_vmem [thread:$0]  %s9, 2048, %s70, [#allocation7], 128, 128, 8
    $region41: #{tpu_custom_call.1} parent=1 // pred_fallthru
      _
    // Predicated region
    $region42: #{tpu_custom_call.1} parent=1 // pred_check
      _
    $region43: #{tpu_custom_call.1} parent=1 // pred_check_branch
      %77 = sbr.rel (0) target = $region45
    $region44: #{tpu_custom_call.1} parent=1 // pred_region
      _
    $region45: #{tpu_custom_call.1} parent=1 // pred_fallthru
      _
    // Predicated region
    $region46: #{tpu_custom_call.1} parent=1 // pred_check
      _
    $region47: #{tpu_custom_call.1} parent=1 // pred_check_branch
      %79 = sbr.rel (0) target = $region49
    $region48: #{tpu_custom_call.1} parent=1 // pred_region
      _
    $region49: #{tpu_custom_call.1} parent=1 // pred_fallthru
      _
    // Predicated region
    $region50: #{tpu_custom_call.1} parent=1 // pred_check
      _
    $region51: #{tpu_custom_call.1} parent=1 // pred_check_branch
      %81 = sbr.rel (0) target = $region53
    $region52: #{tpu_custom_call.1} parent=1 // pred_region
      %s83 = ssub.s32 4096, 4096
      %84 = vsyncadd [#allocation7], %s83
      %s85 = sshll.u32 [#allocation8], 4
      %s86 = int_to_ptr.vmem [resolvable:$true] %s85
      %91 = dma.hbm_to_vmem [thread:$0]  %s12, 4096, %s86, [#allocation7], 128, 128, 8
    $region53: #{tpu_custom_call.1} parent=1 // pred_fallthru
      _
    // Predicated region
    $region54: #{tpu_custom_call.1} parent=1 // pred_check
      _
    $region55: #{tpu_custom_call.1} parent=1 // pred_check_branch
      %93 = sbr.rel (0) target = $region57
    $region56: #{tpu_custom_call.1} parent=1 // pred_region
      _
    $region57: #{tpu_custom_call.1} parent=1 // pred_fallthru
      _
    // Predicated region
    $region58: #{tpu_custom_call.1} parent=1 // pred_check
      _
    $region59: #{tpu_custom_call.1} parent=1 // pred_check_branch
      %95 = sbr.rel (0) target = $region61
    $region60: #{tpu_custom_call.1} parent=1 // pred_region
      _
    $region61: #{tpu_custom_call.1} parent=1 // pred_fallthru
      _
    // Predicated region
    $region62: #{tpu_custom_call.1} parent=1 // pred_check
      _
    $region63: #{tpu_custom_call.1} parent=1 // pred_check_branch
      %97 = sbr.rel (0) target = $region65
    $region64: #{tpu_custom_call.1} parent=1 // pred_region
      %s99 = ssub.s32 16384, 16384
      %100 = vsyncadd [#allocation10], %s99
      %s101 = sshll.u32 [#allocation9], 4
      %s102 = int_to_ptr.vmem [resolvable:$true] %s101
      %107 = dma.hbm_to_vmem [thread:$0]  %s15, 16384, %s102, [#allocation10], 512, 512, 32
    $region65: #{tpu_custom_call.1} parent=1 // pred_fallthru
      _
    // Predicated region
    $region66: #{tpu_custom_call.1} parent=1 // pred_check
      _
    $region67: #{tpu_custom_call.1} parent=1 // pred_check_branch
      %109 = sbr.rel (0) target = $region69
    $region68: #{tpu_custom_call.1} parent=1 // pred_region
      _
    $region69: #{tpu_custom_call.1} parent=1 // pred_fallthru
      _
    // Predicated region
    $region70: #{tpu_custom_call.1} parent=1 // pred_check
      _
    $region71: #{tpu_custom_call.1} parent=1 // pred_check_branch
      %111 = sbr.rel (0) target = $region73
    $region72: #{tpu_custom_call.1} parent=1 // pred_region
      _
    $region73: #{tpu_custom_call.1} parent=1 // pred_fallthru
      _
    // Predicated region
    $region74: #{tpu_custom_call.1} parent=1 // pred_check
      _
    $region75: #{tpu_custom_call.1} parent=1 // pred_check_branch
      %113 = sbr.rel (0) target = $region77
    $region76: #{tpu_custom_call.1} parent=1 // pred_region
      %s115 = ssub.s32 32768, 32768
      %116 = vsyncadd [#allocation10], %s115
      %s117 = sshll.u32 [#allocation11], 4
      %s118 = int_to_ptr.vmem [resolvable:$true] %s117
      %123 = dma.hbm_to_vmem [thread:$0]  %s18, 32768, %s118, [#allocation10], 256, 256, 16
    $region77: #{tpu_custom_call.1} parent=1 // pred_fallthru
      _
    // Predicated region
    $region78: #{tpu_custom_call.1} parent=1 // pred_check
      _
    $region79: #{tpu_custom_call.1} parent=1 // pred_check_branch
      %125 = sbr.rel (0) target = $region81
    $region80: #{tpu_custom_call.1} parent=1 // pred_region
      _
    $region81: #{tpu_custom_call.1} parent=1 // pred_fallthru
      _
    // Predicated region
    $region82: #{tpu_custom_call.1} parent=1 // pred_check
      _
    $region83: #{tpu_custom_call.1} parent=1 // pred_check_branch
      %127 = sbr.rel (0) target = $region85
    $region84: #{tpu_custom_call.1} parent=1 // pred_region
      _
    $region85: #{tpu_custom_call.1} parent=1 // pred_fallthru
      _
    // Predicated region
    $region86: #{tpu_custom_call.1} parent=1 // pred_check
      _
    $region87: #{tpu_custom_call.1} parent=1 // pred_check_branch
      %129 = sbr.rel (0) target = $region89
    $region88: #{tpu_custom_call.1} parent=1 // pred_region
      %s131 = ssub.s32 4096, 4096
      %132 = vsyncadd [#allocation13], %s131
      %s133 = sshll.u32 [#allocation12], 4
      %s134 = int_to_ptr.vmem [resolvable:$true] %s133
      %139 = dma.hbm_to_vmem [thread:$0]  %s21, 4096, %s134, [#allocation13], 64, 64, 4
    $region89: #{tpu_custom_call.1} parent=1 // pred_fallthru
      _
    // Predicated region
    $region90: #{tpu_custom_call.1} parent=1 // pred_check
      _
    $region91: #{tpu_custom_call.1} parent=1 // pred_check_branch
      %141 = sbr.rel (0) target = $region93
    $region92: #{tpu_custom_call.1} parent=1 // pred_region
      _
    $region93: #{tpu_custom_call.1} parent=1 // pred_fallthru
      _
    // Predicated region
    $region94: #{tpu_custom_call.1} parent=1 // pred_check
      _
    $region95: #{tpu_custom_call.1} parent=1 // pred_check_branch
      %143 = sbr.rel (0) target = $region97
    $region96: #{tpu_custom_call.1} parent=1 // pred_region
      _
    $region97: #{tpu_custom_call.1} parent=1 // pred_fallthru
      _
    // Predicated region
    $region98: #{tpu_custom_call.1} parent=1 // pred_check
      _
    $region99: #{tpu_custom_call.1} parent=1 // pred_check_branch
      %145 = sbr.rel (0) target = $region101
    $region100: #{tpu_custom_call.1} parent=1 // pred_region
      _
    $region101: #{tpu_custom_call.1} parent=1 // pred_fallthru
      _
    // Predicated region
    $region102: #{tpu_custom_call.1} parent=1 // pred_check
      _
    $region103: #{tpu_custom_call.1} parent=1 // pred_check_branch
      %147 = sbr.rel (0) target = $region105
    $region104: #{tpu_custom_call.1} parent=1 // pred_region
      _
    $region105: #{tpu_custom_call.1} parent=1 // pred_fallthru
      _
    // Predicated region
    $region106: #{tpu_custom_call.1} parent=1 // pred_check
      _
    $region107: #{tpu_custom_call.1} parent=1 // pred_check_branch
      %149 = sbr.rel (0) target = $region109
    $region108: #{tpu_custom_call.1} parent=1 // pred_region
      %150 = dma.done [#allocation4], 1024
    $region109: #{tpu_custom_call.1} parent=1 // pred_fallthru
      _
    // Predicated region
    $region110: #{tpu_custom_call.1} parent=1 // pred_check
      _
    $region111: #{tpu_custom_call.1} parent=1 // pred_check_branch
      %152 = sbr.rel (0) target = $region113
    $region112: #{tpu_custom_call.1} parent=1 // pred_region
      %153 = dma.done [#allocation7], 2048
    $region113: #{tpu_custom_call.1} parent=1 // pred_fallthru
      _
    // Predicated region
    $region114: #{tpu_custom_call.1} parent=1 // pred_check
      _
    $region115: #{tpu_custom_call.1} parent=1 // pred_check_branch
      %155 = sbr.rel (0) target = $region117
    $region116: #{tpu_custom_call.1} parent=1 // pred_region
      %156 = dma.done [#allocation7], 4096
    $region117: #{tpu_custom_call.1} parent=1 // pred_fallthru
      _
    // Predicated region
    $region118: #{tpu_custom_call.1} parent=1 // pred_check
      _
    $region119: #{tpu_custom_call.1} parent=1 // pred_check_branch
      %158 = sbr.rel (0) target = $region121
    $region120: #{tpu_custom_call.1} parent=1 // pred_region
      %159 = dma.done [#allocation10], 16384
    $region121: #{tpu_custom_call.1} parent=1 // pred_fallthru
      _
    // Predicated region
    $region122: #{tpu_custom_call.1} parent=1 // pred_check
      _
    $region123: #{tpu_custom_call.1} parent=1 // pred_check_branch
      %161 = sbr.rel (0) target = $region125
    $region124: #{tpu_custom_call.1} parent=1 // pred_region
      %162 = dma.done [#allocation10], 32768
    $region125: #{tpu_custom_call.1} parent=1 // pred_fallthru
      _
    // Predicated region
    $region126: #{tpu_custom_call.1} parent=1 // pred_check
      _
    $region127: #{tpu_custom_call.1} parent=1 // pred_check_branch
      %164 = sbr.rel (0) target = $region129
    $region128: #{tpu_custom_call.1} parent=1 // pred_region
      %165 = dma.done [#allocation13], 4096
    $region129: #{tpu_custom_call.1} parent=1 // pred_fallthru
      _
    %v167 = vld [vmem:[%s0] sm:$0xf]
    %v168 = vld [vmem:[%s0 + $0x4] sm:$0xf]
    %v169 = vld [vmem:[%s1] sm:$0xff]
    %v170 = vld [vmem:[%s1 + $0x8] sm:$0xff]
    %v171 = vpack.c.bf16 %v170, %v169
    %v174 = vunpack.c.l.b16 %v167
    %v175 = vunpack.c.l.b16 %v168
    %v176 = vpack.c.b16 %v175, %v174
    %vm177 = vcmask 130048
    %v179 = vsel %vm177, %v176, 0
    %181 = vmatprep.subr.bf16.mxu0 0
    %182 = vmatpush1.bf16.msra.mxu0 %v171
    %183 = vmatprep.subr.bf16.mxu0 0
    %184 = vmatpush1.bf16.msra.mxu0 0
    %185 = vmatprep.subr.bf16.mxu0 0
    %186 = vmatpush1.bf16.msra.mxu0 0
    %187 = vmatprep.subr.bf16.mxu0 0
    %188 = vmatpush1.bf16.msra.mxu0 0
    %189 = vmatprep.subr.bf16.mxu0 0
    %190 = vmatpush1.bf16.msra.mxu0 0
    %191 = vmatprep.subr.bf16.mxu0 0
    %192 = vmatpush1.bf16.msra.mxu0 0
    %193 = vmatprep.subr.bf16.mxu0 0
    %194 = vmatpush1.bf16.msra.mxu0 0
    %195 = vmatprep.subr.bf16.mxu0 0
    %196 = vmatpush1.bf16.msra.mxu0 0
    %197 = vmatprep.subr.bf16.mxu0 0
    %198 = vmatpush1.bf16.msra.mxu0 0
    %199 = vmatprep.subr.bf16.mxu0 0
    %200 = vmatpush1.bf16.msra.mxu0 0
    %201 = vmatprep.subr.bf16.mxu0 0
    %202 = vmatpush1.bf16.msra.mxu0 0
    %203 = vmatprep.subr.bf16.mxu0 0
    %204 = vmatpush1.bf16.msra.mxu0 0
    %205 = vmatprep.subr.bf16.mxu0 0
    %206 = vmatpush1.bf16.msra.mxu0 0
    %207 = vmatprep.subr.bf16.mxu0 0
    %208 = vmatpush1.bf16.msra.mxu0 0
    %209 = vmatprep.subr.bf16.mxu0 0
    %210 = vmatpush1.bf16.msra.mxu0 0
    %211 = vmatprep.subr.bf16.mxu0 0
    %212 = vmatpush1.bf16.msra.mxu0 0
    %213 = vmatprep.mubr.bf16.mxu0 0
    %214 = vmatmul.mubr.bf16.gmra.mrb[0].mxu0 %v179
    %v215 = vpop.f32.mrb[0].mxu0
    %v216 = vadd.f32 0.0, %v215
    %v217 = vpop.f32.mrb[0].mxu0
    %v218 = vpop.f32.mrb[0].mxu0
    %v219 = vadd.f32 0.0, %v218
    %v220 = vpop.f32.mrb[0].mxu0
    %221 = vdwg.mxu0
    %v222 = vpack.c.bf16 %v219, %v216
    %v223 = vld [vmem:[%s3] sm:$0xf]
    %vm224 = vcmask 64512
    %v226 = vsel %vm224, %v222, 0
    %vm228 = vcmask 1043456
    %v230 = vsel %vm228, %v223, 0
    %232 = vmatprep.subr.bf16.mxu0 0
    %233 = vmatpush1.bf16.msra.mxu0 %v230
    %234 = vmatprep.subr.bf16.mxu0 0
    %235 = vmatpush1.bf16.msra.mxu0 0
    %236 = vmatprep.subr.bf16.mxu0 0
    %237 = vmatpush1.bf16.msra.mxu0 0
    %238 = vmatprep.subr.bf16.mxu0 0
    %239 = vmatpush1.bf16.msra.mxu0 0
    %240 = vmatprep.subr.bf16.mxu0 0
    %241 = vmatpush1.bf16.msra.mxu0 0
    %242 = vmatprep.subr.bf16.mxu0 0
    %243 = vmatpush1.bf16.msra.mxu0 0
    %244 = vmatprep.subr.bf16.mxu0 0
    %245 = vmatpush1.bf16.msra.mxu0 0
    %246 = vmatprep.subr.bf16.mxu0 0
    %247 = vmatpush1.bf16.msra.mxu0 0
    %248 = vmatprep.subr.bf16.mxu0 0
    %249 = vmatpush1.bf16.msra.mxu0 0
    %250 = vmatprep.subr.bf16.mxu0 0
    %251 = vmatpush1.bf16.msra.mxu0 0
    %252 = vmatprep.subr.bf16.mxu0 0
    %253 = vmatpush1.bf16.msra.mxu0 0
    %254 = vmatprep.subr.bf16.mxu0 0
    %255 = vmatpush1.bf16.msra.mxu0 0
    %256 = vmatprep.subr.bf16.mxu0 0
    %257 = vmatpush1.bf16.msra.mxu0 0
    %258 = vmatprep.subr.bf16.mxu0 0
    %259 = vmatpush1.bf16.msra.mxu0 0
    %260 = vmatprep.subr.bf16.mxu0 0
    %261 = vmatpush1.bf16.msra.mxu0 0
    %262 = vmatprep.subr.bf16.mxu0 0
    %263 = vmatpush1.bf16.msra.mxu0 0
    %264 = vmatprep.mubr.bf16.mxu0 0
    %265 = vmatmul.mubr.bf16.gmra.mrb[0].mxu0 %v226
    %v266 = vpop.f32.mrb[0].mxu0
    %v267 = vadd.f32 0.0, %v266
    %v268 = vpop.f32.mrb[0].mxu0
    %v269 = vpop.f32.mrb[0].mxu0
    %v270 = vadd.f32 0.0, %v269
    %v271 = vpop.f32.mrb[0].mxu0
    %272 = vdwg.mxu0
    %v273 = vld [vmem:[%s4] sm:$0x1]
    %v275 = vlaneseq
    %v276 = vshrl.u32 %v275, 7
    %v277 = vsub.s32 0, %v276
    %v278 = vrot.slane %v273, %v277
    %v280 = vmul.f32 %v267, %v278
    %v281 = vmul.f32 %v270, %v278
    %v282 = vld [vmem:[%s5] sm:$0x1]
    %v284 = vlaneseq
    %v285 = vshrl.u32 %v284, 7
    %v286 = vsub.s32 0, %v285
    %v287 = vrot.slane %v282, %v286
    %v289 = vadd.f32 %v280, %v287
    %v290 = vadd.f32 %v281, %v287
    %v291 = vmax.f32 %v289, 0.0
    %v292 = vmax.f32 %v290, 0.0
    %v293 = vpack.c.bf16 %v292, %v291
    %294 = vmatprep.subr.bf16.mxu0 0
    %295 = vmatpush1.bf16.msra.mxu0 %v293
    %296 = vmatprep.subr.bf16.mxu0 0
    %297 = vmatpush1.bf16.msra.mxu0 0
    %298 = vmatprep.subr.bf16.mxu0 0
    %299 = vmatpush1.bf16.msra.mxu0 0
    %300 = vmatprep.subr.bf16.mxu0 0
    %301 = vmatpush1.bf16.msra.mxu0 0
    %302 = vmatprep.subr.bf16.mxu0 0
    %303 = vmatpush1.bf16.msra.mxu0 0
    %304 = vmatprep.subr.bf16.mxu0 0
    %305 = vmatpush1.bf16.msra.mxu0 0
    %306 = vmatprep.subr.bf16.mxu0 0
    %307 = vmatpush1.bf16.msra.mxu0 0
    %308 = vmatprep.subr.bf16.mxu0 0
    %309 = vmatpush1.bf16.msra.mxu0 0
    %310 = vmatprep.subr.bf16.mxu0 0
    %311 = vmatpush1.bf16.msra.mxu0 0
    %312 = vmatprep.subr.bf16.mxu0 0
    %313 = vmatpush1.bf16.msra.mxu0 0
    %314 = vmatprep.subr.bf16.mxu0 0
    %315 = vmatpush1.bf16.msra.mxu0 0
    %316 = vmatprep.subr.bf16.mxu0 0
    %317 = vmatpush1.bf16.msra.mxu0 0
    %318 = vmatprep.subr.bf16.mxu0 0
    %319 = vmatpush1.bf16.msra.mxu0 0
    %320 = vmatprep.subr.bf16.mxu0 0
    %321 = vmatpush1.bf16.msra.mxu0 0
    %322 = vmatprep.subr.bf16.mxu0 0
    %323 = vmatpush1.bf16.msra.mxu0 0
    %324 = vmatprep.subr.bf16.mxu0 0
    %325 = vmatpush1.bf16.msra.mxu0 0
    %326 = vmatprep.mubr.bf16.mxu0 0
    %327 = vmatmul.mubr.bf16.gmra.mrb[0].mxu0 %v179
    %v328 = vpop.f32.mrb[0].mxu0
    %v329 = vadd.f32 0.0, %v328
    %v330 = vpop.f32.mrb[0].mxu0
    %v331 = vpop.f32.mrb[0].mxu0
    %v332 = vadd.f32 0.0, %v331
    %v333 = vpop.f32.mrb[0].mxu0
    %334 = vdwg.mxu0
    %v335 = vpack.c.bf16 %v332, %v329
    %v336 = vld [vmem:[#allocation3] sm:$0xf]
    %v337 = vld [vmem:[#allocation3 + $0x4] sm:$0xf]
    %v338 = vld [vmem:[#allocation3 + $0x8] sm:$0xf]
    %v339 = vld [vmem:[#allocation3 + $0xc] sm:$0xf]
    %v340 = vld [vmem:[#allocation3 + $0x10] sm:$0xf]
    %v341 = vld [vmem:[#allocation3 + $0x14] sm:$0xf]
    %v342 = vld [vmem:[#allocation3 + $0x18] sm:$0xf]
    %v343 = vld [vmem:[#allocation3 + $0x1c] sm:$0xf]
    %v344 = vld [vmem:[#allocation3 + $0x20] sm:$0xf]
    %v345 = vld [vmem:[#allocation3 + $0x24] sm:$0xf]
    %v346 = vld [vmem:[#allocation3 + $0x28] sm:$0xf]
    %v347 = vld [vmem:[#allocation3 + $0x2c] sm:$0xf]
    %v348 = vld [vmem:[#allocation3 + $0x30] sm:$0xf]
    %v349 = vld [vmem:[#allocation3 + $0x34] sm:$0xf]
    %v350 = vld [vmem:[#allocation3 + $0x38] sm:$0xf]
    %v351 = vld [vmem:[#allocation3 + $0x3c] sm:$0xf]
    %v368 = vunpack.c.l.b16 %v336
    %v369 = vunpack.c.l.b16 %v337
    %v370 = vunpack.c.l.b16 %v338
    %v371 = vunpack.c.l.b16 %v339
    %v372 = vunpack.c.l.b16 %v340
    %v373 = vunpack.c.l.b16 %v341
    %v374 = vunpack.c.l.b16 %v342
    %v375 = vunpack.c.l.b16 %v343
    %v376 = vunpack.c.l.b16 %v344
    %v377 = vunpack.c.l.b16 %v345
    %v378 = vunpack.c.l.b16 %v346
    %v379 = vunpack.c.l.b16 %v347
    %v380 = vunpack.c.l.b16 %v348
    %v381 = vunpack.c.l.b16 %v349
    %v382 = vunpack.c.l.b16 %v350
    %v383 = vunpack.c.l.b16 %v351
    %v384 = vpack.c.b16 %v369, %v368
    %v385 = vpack.c.b16 %v371, %v370
    %v386 = vpack.c.b16 %v373, %v372
    %v387 = vpack.c.b16 %v375, %v374
    %v388 = vpack.c.b16 %v377, %v376
    %v389 = vpack.c.b16 %v379, %v378
    %v390 = vpack.c.b16 %v381, %v380
    %v391 = vpack.c.b16 %v383, %v382
    %400 = vmatprep.subr.bf16.mxu0 0
    %401 = vmatpush1.bf16.msra.mxu0 %v384
    %402 = vmatprep.subr.bf16.mxu0 0
    %403 = vmatpush1.bf16.msra.mxu0 %v385
    %404 = vmatprep.subr.bf16.mxu0 0
    %405 = vmatpush1.bf16.msra.mxu0 %v386
    %406 = vmatprep.subr.bf16.mxu0 0
    %407 = vmatpush1.bf16.msra.mxu0 %v387
    %408 = vmatprep.subr.bf16.mxu0 0
    %409 = vmatpush1.bf16.msra.mxu0 %v388
    %410 = vmatprep.subr.bf16.mxu0 0
    %411 = vmatpush1.bf16.msra.mxu0 %v389
    %412 = vmatprep.subr.bf16.mxu0 0
    %413 = vmatpush1.bf16.msra.mxu0 %v390
    %414 = vmatprep.subr.bf16.mxu0 0
    %415 = vmatpush1.bf16.msra.mxu0 %v391
    %416 = vmatprep.subr.bf16.mxu0 0
    %417 = vmatpush1.bf16.msra.mxu0 0
    %418 = vmatprep.subr.bf16.mxu0 0
    %419 = vmatpush1.bf16.msra.mxu0 0
    %420 = vmatprep.subr.bf16.mxu0 0
    %421 = vmatpush1.bf16.msra.mxu0 0
    %422 = vmatprep.subr.bf16.mxu0 0
    %423 = vmatpush1.bf16.msra.mxu0 0
    %424 = vmatprep.subr.bf16.mxu0 0
    %425 = vmatpush1.bf16.msra.mxu0 0
    %426 = vmatprep.subr.bf16.mxu0 0
    %427 = vmatpush1.bf16.msra.mxu0 0
    %428 = vmatprep.subr.bf16.mxu0 0
    %429 = vmatpush1.bf16.msra.mxu0 0
    %430 = vmatprep.subr.bf16.mxu0 0
    %431 = vmatpush1.bf16.msra.mxu0 0
    %432 = vmatprep.mubr.bf16.mxu0 0
    %433 = vmatmul.mubr.bf16.gmra.mrb[0].mxu0 %v335
    %v434 = vpop.f32.mrb[0].mxu0
    %v435 = vadd.f32 0.0, %v434
    %v436 = vpop.f32.mrb[0].mxu0
    %v437 = vpop.f32.mrb[0].mxu0
    %v438 = vadd.f32 0.0, %v437
    %v439 = vpop.f32.mrb[0].mxu0
    %440 = vdwg.mxu0
    %v441 = vld [vmem:[%s7] sm:$0x1]
    %v443 = vlaneseq
    %v444 = vshrl.u32 %v443, 7
    %v445 = vsub.s32 0, %v444
    %v446 = vrot.slane %v441, %v445
    %v448 = vmul.f32 %v435, %v446
    %v449 = vmul.f32 %v438, %v446
    %v450 = vld [vmem:[%s8] sm:$0x1]
    %v452 = vlaneseq
    %v453 = vshrl.u32 %v452, 7
    %v454 = vsub.s32 0, %v453
    %v455 = vrot.slane %v450, %v454
    %v457 = vadd.f32 %v448, %v455
    %v458 = vadd.f32 %v449, %v455
    %v459 = vmax.f32 %v457, 0.0
    %v460 = vmax.f32 %v458, 0.0
    %v461 = vpack.c.bf16 %v460, %v459
    %462 = vmatprep.subr.bf16.mxu0 0
    %463 = vmatpush1.bf16.msra.mxu0 %v461
    %464 = vmatprep.subr.bf16.mxu0 0
    %465 = vmatpush1.bf16.msra.mxu0 0
    %466 = vmatprep.subr.bf16.mxu0 0
    %467 = vmatpush1.bf16.msra.mxu0 0
    %468 = vmatprep.subr.bf16.mxu0 0
    %469 = vmatpush1.bf16.msra.mxu0 0
    %470 = vmatprep.subr.bf16.mxu0 0
    %471 = vmatpush1.bf16.msra.mxu0 0
    %472 = vmatprep.subr.bf16.mxu0 0
    %473 = vmatpush1.bf16.msra.mxu0 0
    %474 = vmatprep.subr.bf16.mxu0 0
    %475 = vmatpush1.bf16.msra.mxu0 0
    %476 = vmatprep.subr.bf16.mxu0 0
    %477 = vmatpush1.bf16.msra.mxu0 0
    %478 = vmatprep.subr.bf16.mxu0 0
    %479 = vmatpush1.bf16.msra.mxu0 0
    %480 = vmatprep.subr.bf16.mxu0 0
    %481 = vmatpush1.bf16.msra.mxu0 0
    %482 = vmatprep.subr.bf16.mxu0 0
    %483 = vmatpush1.bf16.msra.mxu0 0
    %484 = vmatprep.subr.bf16.mxu0 0
    %485 = vmatpush1.bf16.msra.mxu0 0
    %486 = vmatprep.subr.bf16.mxu0 0
    %487 = vmatpush1.bf16.msra.mxu0 0
    %488 = vmatprep.subr.bf16.mxu0 0
    %489 = vmatpush1.bf16.msra.mxu0 0
    %490 = vmatprep.subr.bf16.mxu0 0
    %491 = vmatpush1.bf16.msra.mxu0 0
    %492 = vmatprep.subr.bf16.mxu0 0
    %493 = vmatpush1.bf16.msra.mxu0 0
    %494 = vmatprep.mubr.bf16.mxu0 0
    %495 = vmatmul.mubr.bf16.gmra.mrb[0].mxu0 %v179
    %v496 = vpop.f32.mrb[0].mxu0
    %v497 = vadd.f32 0.0, %v496
    %v498 = vpop.f32.mrb[0].mxu0
    %v499 = vpop.f32.mrb[0].mxu0
    %v500 = vadd.f32 0.0, %v499
    %v501 = vpop.f32.mrb[0].mxu0
    %502 = vdwg.mxu0
    %v503 = vpack.c.bf16 %v500, %v497
    %v504 = vld [vmem:[#allocation6] sm:$0xff]
    %v505 = vld [vmem:[#allocation6 + $0x8] sm:$0xff]
    %v506 = vld [vmem:[#allocation6 + $0x10] sm:$0xff]
    %v507 = vld [vmem:[#allocation6 + $0x18] sm:$0xff]
    %v508 = vld [vmem:[#allocation6 + $0x20] sm:$0xff]
    %v509 = vld [vmem:[#allocation6 + $0x28] sm:$0xff]
    %v510 = vld [vmem:[#allocation6 + $0x30] sm:$0xff]
    %v511 = vld [vmem:[#allocation6 + $0x38] sm:$0xff]
    %v512 = vld [vmem:[#allocation6 + $0x40] sm:$0xff]
    %v513 = vld [vmem:[#allocation6 + $0x48] sm:$0xff]
    %v514 = vld [vmem:[#allocation6 + $0x50] sm:$0xff]
    %v515 = vld [vmem:[#allocation6 + $0x58] sm:$0xff]
    %v516 = vld [vmem:[#allocation6 + $0x60] sm:$0xff]
    %v517 = vld [vmem:[#allocation6 + $0x68] sm:$0xff]
    %v518 = vld [vmem:[#allocation6 + $0x70] sm:$0xff]
    %v519 = vld [vmem:[#allocation6 + $0x78] sm:$0xff]
    %v536 = vunpack.c.l.b16 %v504
    %v537 = vunpack.c.h.b16 %v504
    %v538 = vunpack.c.l.b16 %v505
    %v539 = vunpack.c.h.b16 %v505
    %v540 = vunpack.c.l.b16 %v506
    %v541 = vunpack.c.h.b16 %v506
    %v542 = vunpack.c.l.b16 %v507
    %v543 = vunpack.c.h.b16 %v507
    %v544 = vunpack.c.l.b16 %v508
    %v545 = vunpack.c.h.b16 %v508
    %v546 = vunpack.c.l.b16 %v509
    %v547 = vunpack.c.h.b16 %v509
    %v548 = vunpack.c.l.b16 %v510
    %v549 = vunpack.c.h.b16 %v510
    %v550 = vunpack.c.l.b16 %v511
    %v551 = vunpack.c.h.b16 %v511
    %v552 = vunpack.c.l.b16 %v512
    %v553 = vunpack.c.h.b16 %v512
    %v554 = vunpack.c.l.b16 %v513
    %v555 = vunpack.c.h.b16 %v513
    %v556 = vunpack.c.l.b16 %v514
    %v557 = vunpack.c.h.b16 %v514
    %v558 = vunpack.c.l.b16 %v515
    %v559 = vunpack.c.h.b16 %v515
    %v560 = vunpack.c.l.b16 %v516
    %v561 = vunpack.c.h.b16 %v516
    %v562 = vunpack.c.l.b16 %v517
    %v563 = vunpack.c.h.b16 %v517
    %v564 = vunpack.c.l.b16 %v518
    %v565 = vunpack.c.h.b16 %v518
    %v566 = vunpack.c.l.b16 %v519
    %v567 = vunpack.c.h.b16 %v519
    %v568 = vpack.c.b16 %v538, %v536
    %v569 = vpack.c.b16 %v539, %v537
    %v570 = vpack.c.b16 %v542, %v540
    %v571 = vpack.c.b16 %v543, %v541
    %v572 = vpack.c.b16 %v546, %v544
    %v573 = vpack.c.b16 %v547, %v545
    %v574 = vpack.c.b16 %v550, %v548
    %v575 = vpack.c.b16 %v551, %v549
    %v576 = vpack.c.b16 %v554, %v552
    %v577 = vpack.c.b16 %v555, %v553
    %v578 = vpack.c.b16 %v558, %v556
    %v579 = vpack.c.b16 %v559, %v557
    %v580 = vpack.c.b16 %v562, %v560
    %v581 = vpack.c.b16 %v563, %v561
    %v582 = vpack.c.b16 %v566, %v564
    %v583 = vpack.c.b16 %v567, %v565
    %600 = vmatprep.subr.bf16.mxu0 %v569
    %601 = vmatpush1.bf16.msra.mxu0 %v568
    %602 = vmatprep.subr.bf16.mxu0 %v571
    %603 = vmatpush1.bf16.msra.mxu0 %v570
    %604 = vmatprep.subr.bf16.mxu0 %v573
    %605 = vmatpush1.bf16.msra.mxu0 %v572
    %606 = vmatprep.subr.bf16.mxu0 %v575
    %607 = vmatpush1.bf16.msra.mxu0 %v574
    %608 = vmatprep.subr.bf16.mxu0 %v577
    %609 = vmatpush1.bf16.msra.mxu0 %v576
    %610 = vmatprep.subr.bf16.mxu0 %v579
    %611 = vmatpush1.bf16.msra.mxu0 %v578
    %612 = vmatprep.subr.bf16.mxu0 %v581
    %613 = vmatpush1.bf16.msra.mxu0 %v580
    %614 = vmatprep.subr.bf16.mxu0 %v583
    %615 = vmatpush1.bf16.msra.mxu0 %v582
    %616 = vmatprep.subr.bf16.mxu0 0
    %617 = vmatpush1.bf16.msra.mxu0 0
    %618 = vmatprep.subr.bf16.mxu0 0
    %619 = vmatpush1.bf16.msra.mxu0 0
    %620 = vmatprep.subr.bf16.mxu0 0
    %621 = vmatpush1.bf16.msra.mxu0 0
    %622 = vmatprep.subr.bf16.mxu0 0
    %623 = vmatpush1.bf16.msra.mxu0 0
    %624 = vmatprep.subr.bf16.mxu0 0
    %625 = vmatpush1.bf16.msra.mxu0 0
    %626 = vmatprep.subr.bf16.mxu0 0
    %627 = vmatpush1.bf16.msra.mxu0 0
    %628 = vmatprep.subr.bf16.mxu0 0
    %629 = vmatpush1.bf16.msra.mxu0 0
    %630 = vmatprep.subr.bf16.mxu0 0
    %631 = vmatpush1.bf16.msra.mxu0 0
    %632 = vmatprep.mubr.bf16.mxu0 0
    %633 = vmatmul.mubr.bf16.gmra.mrb[0].mxu0 %v503
    %v634 = vpop.f32.mrb[0].mxu0
    %v635 = vadd.f32 0.0, %v634
    %v636 = vpop.f32.mrb[0].mxu0
    %v637 = vadd.f32 0.0, %v636
    %v638 = vpop.f32.mrb[0].mxu0
    %v639 = vadd.f32 0.0, %v638
    %v640 = vpop.f32.mrb[0].mxu0
    %v641 = vadd.f32 0.0, %v640
    %642 = vdwg.mxu0
    %v643 = vld [vmem:[%s10] sm:$0x3]
    %v645 = vlaneseq
    %v646 = vshrl.u32 %v645, 7
    %v647 = vsub.s32 0, %v646
    %v648 = vrot.slane %v643, %v647
    %v649 = vlaneseq
    %v650 = vshrl.u32 %v649, 7
    %v651 = vsub.s32 1, %v650
    %v652 = vrot.slane %v643, %v651
    %v655 = vmul.f32 %v635, %v648
    %v656 = vmul.f32 %v637, %v652
    %v657 = vmul.f32 %v639, %v648
    %v658 = vmul.f32 %v641, %v652
    %v659 = vld [vmem:[%s11] sm:$0x3]
    %v661 = vlaneseq
    %v662 = vshrl.u32 %v661, 7
    %v663 = vsub.s32 0, %v662
    %v664 = vrot.slane %v659, %v663
    %v665 = vlaneseq
    %v666 = vshrl.u32 %v665, 7
    %v667 = vsub.s32 1, %v666
    %v668 = vrot.slane %v659, %v667
    %v671 = vadd.f32 %v655, %v664
    %v672 = vadd.f32 %v656, %v668
    %v673 = vadd.f32 %v657, %v664
    %v674 = vadd.f32 %v658, %v668
    %v675 = vmax.f32 %v671, 0.0
    %v676 = vmax.f32 %v672, 0.0
    %v677 = vmax.f32 %v673, 0.0
    %v678 = vmax.f32 %v674, 0.0
    %v679 = vpack.c.bf16 %v677, %v675
    %v680 = vpack.c.bf16 %v678, %v676
    %681 = vmatprep.subr.bf16.mxu0 %v680
    %682 = vmatpush1.bf16.msra.mxu0 %v679
    %683 = vmatprep.subr.bf16.mxu0 0
    %684 = vmatpush1.bf16.msra.mxu0 0
    %685 = vmatprep.subr.bf16.mxu0 0
    %686 = vmatpush1.bf16.msra.mxu0 0
    %687 = vmatprep.subr.bf16.mxu0 0
    %688 = vmatpush1.bf16.msra.mxu0 0
    %689 = vmatprep.subr.bf16.mxu0 0
    %690 = vmatpush1.bf16.msra.mxu0 0
    %691 = vmatprep.subr.bf16.mxu0 0
    %692 = vmatpush1.bf16.msra.mxu0 0
    %693 = vmatprep.subr.bf16.mxu0 0
    %694 = vmatpush1.bf16.msra.mxu0 0
    %695 = vmatprep.subr.bf16.mxu0 0
    %696 = vmatpush1.bf16.msra.mxu0 0
    %697 = vmatprep.subr.bf16.mxu0 0
    %698 = vmatpush1.bf16.msra.mxu0 0
    %699 = vmatprep.subr.bf16.mxu0 0
    %700 = vmatpush1.bf16.msra.mxu0 0
    %701 = vmatprep.subr.bf16.mxu0 0
    %702 = vmatpush1.bf16.msra.mxu0 0
    %703 = vmatprep.subr.bf16.mxu0 0
    %704 = vmatpush1.bf16.msra.mxu0 0
    %705 = vmatprep.subr.bf16.mxu0 0
    %706 = vmatpush1.bf16.msra.mxu0 0
    %707 = vmatprep.subr.bf16.mxu0 0
    %708 = vmatpush1.bf16.msra.mxu0 0
    %709 = vmatprep.subr.bf16.mxu0 0
    %710 = vmatpush1.bf16.msra.mxu0 0
    %711 = vmatprep.subr.bf16.mxu0 0
    %712 = vmatpush1.bf16.msra.mxu0 0
    %713 = vmatprep.mubr.bf16.mxu0 0
    %714 = vmatmul.mubr.bf16.gmra.mrb[0].mxu0 %v179
    %v715 = vpop.f32.mrb[0].mxu0
    %v716 = vadd.f32 0.0, %v715
    %v717 = vpop.f32.mrb[0].mxu0
    %v718 = vadd.f32 0.0, %v717
    %v719 = vpop.f32.mrb[0].mxu0
    %v720 = vadd.f32 0.0, %v719
    %v721 = vpop.f32.mrb[0].mxu0
    %v722 = vadd.f32 0.0, %v721
    %723 = vdwg.mxu0
    %v724 = vpack.c.bf16 %v720, %v716
    %v725 = vpack.c.bf16 %v722, %v718
    %v726 = vld [vmem:[#allocation8] sm:$0xff]
    %v727 = vld [vmem:[#allocation8 + $0x8] sm:$0xff]
    %v728 = vld [vmem:[#allocation8 + $0x10] sm:$0xff]
    %v729 = vld [vmem:[#allocation8 + $0x18] sm:$0xff]
    %v730 = vld [vmem:[#allocation8 + $0x20] sm:$0xff]
    %v731 = vld [vmem:[#allocation8 + $0x28] sm:$0xff]
    %v732 = vld [vmem:[#allocation8 + $0x30] sm:$0xff]
    %v733 = vld [vmem:[#allocation8 + $0x38] sm:$0xff]
    %v734 = vld [vmem:[#allocation8 + $0x40] sm:$0xff]
    %v735 = vld [vmem:[#allocation8 + $0x48] sm:$0xff]
    %v736 = vld [vmem:[#allocation8 + $0x50] sm:$0xff]
    %v737 = vld [vmem:[#allocation8 + $0x58] sm:$0xff]
    %v738 = vld [vmem:[#allocation8 + $0x60] sm:$0xff]
    %v739 = vld [vmem:[#allocation8 + $0x68] sm:$0xff]
    %v740 = vld [vmem:[#allocation8 + $0x70] sm:$0xff]
    %v741 = vld [vmem:[#allocation8 + $0x78] sm:$0xff]
    %v742 = vld [vmem:[#allocation8 + $0x80] sm:$0xff]
    %v743 = vld [vmem:[#allocation8 + $0x88] sm:$0xff]
    %v744 = vld [vmem:[#allocation8 + $0x90] sm:$0xff]
    %v745 = vld [vmem:[#allocation8 + $0x98] sm:$0xff]
    %v746 = vld [vmem:[#allocation8 + $0xa0] sm:$0xff]
    %v747 = vld [vmem:[#allocation8 + $0xa8] sm:$0xff]
    %v748 = vld [vmem:[#allocation8 + $0xb0] sm:$0xff]
    %v749 = vld [vmem:[#allocation8 + $0xb8] sm:$0xff]
    %v750 = vld [vmem:[#allocation8 + $0xc0] sm:$0xff]
    %v751 = vld [vmem:[#allocation8 + $0xc8] sm:$0xff]
    %v752 = vld [vmem:[#allocation8 + $0xd0] sm:$0xff]
    %v753 = vld [vmem:[#allocation8 + $0xd8] sm:$0xff]
    %v754 = vld [vmem:[#allocation8 + $0xe0] sm:$0xff]
    %v755 = vld [vmem:[#allocation8 + $0xe8] sm:$0xff]
    %v756 = vld [vmem:[#allocation8 + $0xf0] sm:$0xff]
    %v757 = vld [vmem:[#allocation8 + $0xf8] sm:$0xff]
    %v790 = vunpack.c.l.b16 %v726
    %v791 = vunpack.c.h.b16 %v726
    %v792 = vunpack.c.l.b16 %v727
    %v793 = vunpack.c.h.b16 %v727
    %v794 = vunpack.c.l.b16 %v728
    %v795 = vunpack.c.h.b16 %v728
    %v796 = vunpack.c.l.b16 %v729
    %v797 = vunpack.c.h.b16 %v729
    %v798 = vunpack.c.l.b16 %v730
    %v799 = vunpack.c.h.b16 %v730
    %v800 = vunpack.c.l.b16 %v731
    %v801 = vunpack.c.h.b16 %v731
    %v802 = vunpack.c.l.b16 %v732
    %v803 = vunpack.c.h.b16 %v732
    %v804 = vunpack.c.l.b16 %v733
    %v805 = vunpack.c.h.b16 %v733
    %v806 = vunpack.c.l.b16 %v734
    %v807 = vunpack.c.h.b16 %v734
    %v808 = vunpack.c.l.b16 %v735
    %v809 = vunpack.c.h.b16 %v735
    %v810 = vunpack.c.l.b16 %v736
    %v811 = vunpack.c.h.b16 %v736
    %v812 = vunpack.c.l.b16 %v737
    %v813 = vunpack.c.h.b16 %v737
    %v814 = vunpack.c.l.b16 %v738
    %v815 = vunpack.c.h.b16 %v738
    %v816 = vunpack.c.l.b16 %v739
    %v817 = vunpack.c.h.b16 %v739
    %v818 = vunpack.c.l.b16 %v740
    %v819 = vunpack.c.h.b16 %v740
    %v820 = vunpack.c.l.b16 %v741
    %v821 = vunpack.c.h.b16 %v741
    %v822 = vunpack.c.l.b16 %v742
    %v823 = vunpack.c.h.b16 %v742
    %v824 = vunpack.c.l.b16 %v743
    %v825 = vunpack.c.h.b16 %v743
    %v826 = vunpack.c.l.b16 %v744
    %v827 = vunpack.c.h.b16 %v744
    %v828 = vunpack.c.l.b16 %v745
    %v829 = vunpack.c.h.b16 %v745
    %v830 = vunpack.c.l.b16 %v746
    %v831 = vunpack.c.h.b16 %v746
    %v832 = vunpack.c.l.b16 %v747
    %v833 = vunpack.c.h.b16 %v747
    %v834 = vunpack.c.l.b16 %v748
    %v835 = vunpack.c.h.b16 %v748
    %v836 = vunpack.c.l.b16 %v749
    %v837 = vunpack.c.h.b16 %v749
    %v838 = vunpack.c.l.b16 %v750
    %v839 = vunpack.c.h.b16 %v750
    %v840 = vunpack.c.l.b16 %v751
    %v841 = vunpack.c.h.b16 %v751
    %v842 = vunpack.c.l.b16 %v752
    %v843 = vunpack.c.h.b16 %v752
    %v844 = vunpack.c.l.b16 %v753
    %v845 = vunpack.c.h.b16 %v753
    %v846 = vunpack.c.l.b16 %v754
    %v847 = vunpack.c.h.b16 %v754
    %v848 = vunpack.c.l.b16 %v755
    %v849 = vunpack.c.h.b16 %v755
    %v850 = vunpack.c.l.b16 %v756
    %v851 = vunpack.c.h.b16 %v756
    %v852 = vunpack.c.l.b16 %v757
    %v853 = vunpack.c.h.b16 %v757
    %v854 = vpack.c.b16 %v792, %v790
    %v855 = vpack.c.b16 %v793, %v791
    %v856 = vpack.c.b16 %v796, %v794
    %v857 = vpack.c.b16 %v797, %v795
    %v858 = vpack.c.b16 %v800, %v798
    %v859 = vpack.c.b16 %v801, %v799
    %v860 = vpack.c.b16 %v804, %v802
    %v861 = vpack.c.b16 %v805, %v803
    %v862 = vpack.c.b16 %v808, %v806
    %v863 = vpack.c.b16 %v809, %v807
    %v864 = vpack.c.b16 %v812, %v810
    %v865 = vpack.c.b16 %v813, %v811
    %v866 = vpack.c.b16 %v816, %v814
    %v867 = vpack.c.b16 %v817, %v815
    %v868 = vpack.c.b16 %v820, %v818
    %v869 = vpack.c.b16 %v821, %v819
    %v870 = vpack.c.b16 %v824, %v822
    %v871 = vpack.c.b16 %v825, %v823
    %v872 = vpack.c.b16 %v828, %v826
    %v873 = vpack.c.b16 %v829, %v827
    %v874 = vpack.c.b16 %v832, %v830
    %v875 = vpack.c.b16 %v833, %v831
    %v876 = vpack.c.b16 %v836, %v834
    %v877 = vpack.c.b16 %v837, %v835
    %v878 = vpack.c.b16 %v840, %v838
    %v879 = vpack.c.b16 %v841, %v839
    %v880 = vpack.c.b16 %v844, %v842
    %v881 = vpack.c.b16 %v845, %v843
    %v882 = vpack.c.b16 %v848, %v846
    %v883 = vpack.c.b16 %v849, %v847
    %v884 = vpack.c.b16 %v852, %v850
    %v885 = vpack.c.b16 %v853, %v851
    %918 = vmatprep.subr.bf16.mxu0 %v855
    %919 = vmatpush1.bf16.msra.mxu0 %v854
    %920 = vmatprep.subr.bf16.mxu0 %v857
    %921 = vmatpush1.bf16.msra.mxu0 %v856
    %922 = vmatprep.subr.bf16.mxu0 %v859
    %923 = vmatpush1.bf16.msra.mxu0 %v858
    %924 = vmatprep.subr.bf16.mxu0 %v861
    %925 = vmatpush1.bf16.msra.mxu0 %v860
    %926 = vmatprep.subr.bf16.mxu0 %v863
    %927 = vmatpush1.bf16.msra.mxu0 %v862
    %928 = vmatprep.subr.bf16.mxu0 %v865
    %929 = vmatpush1.bf16.msra.mxu0 %v864
    %930 = vmatprep.subr.bf16.mxu0 %v867
    %931 = vmatpush1.bf16.msra.mxu0 %v866
    %932 = vmatprep.subr.bf16.mxu0 %v869
    %933 = vmatpush1.bf16.msra.mxu0 %v868
    %934 = vmatprep.subr.bf16.mxu0 %v871
    %935 = vmatpush1.bf16.msra.mxu0 %v870
    %936 = vmatprep.subr.bf16.mxu0 %v873
    %937 = vmatpush1.bf16.msra.mxu0 %v872
    %938 = vmatprep.subr.bf16.mxu0 %v875
    %939 = vmatpush1.bf16.msra.mxu0 %v874
    %940 = vmatprep.subr.bf16.mxu0 %v877
    %941 = vmatpush1.bf16.msra.mxu0 %v876
    %942 = vmatprep.subr.bf16.mxu0 %v879
    %943 = vmatpush1.bf16.msra.mxu0 %v878
    %944 = vmatprep.subr.bf16.mxu0 %v881
    %945 = vmatpush1.bf16.msra.mxu0 %v880
    %946 = vmatprep.subr.bf16.mxu0 %v883
    %947 = vmatpush1.bf16.msra.mxu0 %v882
    %948 = vmatprep.subr.bf16.mxu0 %v885
    %949 = vmatpush1.bf16.msra.mxu0 %v884
    %950 = vmatprep.mubr.bf16.mxu0 %v725
    %951 = vmatmul.mubr.bf16.gmra.mrb[0].mxu0 %v724
    %v952 = vpop.f32.mrb[0].mxu0
    %v953 = vadd.f32 0.0, %v952
    %v954 = vpop.f32.mrb[0].mxu0
    %v955 = vadd.f32 0.0, %v954
    %v956 = vpop.f32.mrb[0].mxu0
    %v957 = vadd.f32 0.0, %v956
    %v958 = vpop.f32.mrb[0].mxu0
    %v959 = vadd.f32 0.0, %v958
    %960 = vdwg.mxu0
    %v961 = vld [vmem:[%s13] sm:$0x3]
    %v963 = vlaneseq
    %v964 = vshrl.u32 %v963, 7
    %v965 = vsub.s32 0, %v964
    %v966 = vrot.slane %v961, %v965
    %v967 = vlaneseq
    %v968 = vshrl.u32 %v967, 7
    %v969 = vsub.s32 1, %v968
    %v970 = vrot.slane %v961, %v969
    %v973 = vmul.f32 %v953, %v966
    %v974 = vmul.f32 %v955, %v970
    %v975 = vmul.f32 %v957, %v966
    %v976 = vmul.f32 %v959, %v970
    %v977 = vld [vmem:[%s14] sm:$0x3]
    %v979 = vlaneseq
    %v980 = vshrl.u32 %v979, 7
    %v981 = vsub.s32 0, %v980
    %v982 = vrot.slane %v977, %v981
    %v983 = vlaneseq
    %v984 = vshrl.u32 %v983, 7
    %v985 = vsub.s32 1, %v984
    %v986 = vrot.slane %v977, %v985
    %v989 = vadd.f32 %v973, %v982
    %v990 = vadd.f32 %v974, %v986
    %v991 = vadd.f32 %v975, %v982
    %v992 = vadd.f32 %v976, %v986
    %v993 = vmax.f32 %v989, 0.0
    %v994 = vmax.f32 %v990, 0.0
    %v995 = vmax.f32 %v991, 0.0
    %v996 = vmax.f32 %v992, 0.0
    %v997 = vpack.c.bf16 %v995, %v993
    %v998 = vpack.c.bf16 %v996, %v994
    %999 = vmatprep.subr.bf16.mxu0 %v998
    %1000 = vmatpush1.bf16.msra.mxu0 %v997
    %1001 = vmatprep.subr.bf16.mxu0 0
    %1002 = vmatpush1.bf16.msra.mxu0 0
    %1003 = vmatprep.subr.bf16.mxu0 0
    %1004 = vmatpush1.bf16.msra.mxu0 0
    %1005 = vmatprep.subr.bf16.mxu0 0
    %1006 = vmatpush1.bf16.msra.mxu0 0
    %1007 = vmatprep.subr.bf16.mxu0 0
    %1008 = vmatpush1.bf16.msra.mxu0 0
    %1009 = vmatprep.subr.bf16.mxu0 0
    %1010 = vmatpush1.bf16.msra.mxu0 0
    %1011 = vmatprep.subr.bf16.mxu0 0
    %1012 = vmatpush1.bf16.msra.mxu0 0
    %1013 = vmatprep.subr.bf16.mxu0 0
    %1014 = vmatpush1.bf16.msra.mxu0 0
    %1015 = vmatprep.subr.bf16.mxu0 0
    %1016 = vmatpush1.bf16.msra.mxu0 0
    %1017 = vmatprep.subr.bf16.mxu0 0
    %1018 = vmatpush1.bf16.msra.mxu0 0
    %1019 = vmatprep.subr.bf16.mxu0 0
    %1020 = vmatpush1.bf16.msra.mxu0 0
    %1021 = vmatprep.subr.bf16.mxu0 0
    %1022 = vmatpush1.bf16.msra.mxu0 0
    %1023 = vmatprep.subr.bf16.mxu0 0
    %1024 = vmatpush1.bf16.msra.mxu0 0
    %1025 = vmatprep.subr.bf16.mxu0 0
    %1026 = vmatpush1.bf16.msra.mxu0 0
    %1027 = vmatprep.subr.bf16.mxu0 0
    %1028 = vmatpush1.bf16.msra.mxu0 0
    %1029 = vmatprep.subr.bf16.mxu0 0
    %1030 = vmatpush1.bf16.msra.mxu0 0
    %1031 = vmatprep.mubr.bf16.mxu0 0
    %1032 = vmatmul.mubr.bf16.gmra.mrb[0].mxu0 %v179
    %v1033 = vpop.f32.mrb[0].mxu0
    %v1034 = vadd.f32 0.0, %v1033
    %v1035 = vpop.f32.mrb[0].mxu0
    %v1036 = vadd.f32 0.0, %v1035
    %v1037 = vpop.f32.mrb[0].mxu0
    %v1038 = vadd.f32 0.0, %v1037
    %v1039 = vpop.f32.mrb[0].mxu0
    %v1040 = vadd.f32 0.0, %v1039
    %1041 = vdwg.mxu0
    %v1042 = vpack.c.bf16 %v1038, %v1034
    %v1043 = vpack.c.bf16 %v1040, %v1036
    %v1044 = vld [vmem:[#allocation9] sm:$0xff]
    %v1045 = vld [vmem:[#allocation9 + $0x8] sm:$0xff]
    %v1046 = vld [vmem:[#allocation9 + $0x10] sm:$0xff]
    %v1047 = vld [vmem:[#allocation9 + $0x18] sm:$0xff]
    %v1048 = vld [vmem:[#allocation9 + $0x20] sm:$0xff]
    %v1049 = vld [vmem:[#allocation9 + $0x28] sm:$0xff]
    %v1050 = vld [vmem:[#allocation9 + $0x30] sm:$0xff]
    %v1051 = vld [vmem:[#allocation9 + $0x38] sm:$0xff]
    %v1052 = vld [vmem:[#allocation9 + $0x40] sm:$0xff]
    %v1053 = vld [vmem:[#allocation9 + $0x48] sm:$0xff]
    %v1054 = vld [vmem:[#allocation9 + $0x50] sm:$0xff]
    %v1055 = vld [vmem:[#allocation9 + $0x58] sm:$0xff]
    %v1056 = vld [vmem:[#allocation9 + $0x60] sm:$0xff]
    %v1057 = vld [vmem:[#allocation9 + $0x68] sm:$0xff]
    %v1058 = vld [vmem:[#allocation9 + $0x70] sm:$0xff]
    %v1059 = vld [vmem:[#allocation9 + $0x78] sm:$0xff]
    %v1060 = vld [vmem:[#allocation9 + $0x80] sm:$0xff]
    %v1061 = vld [vmem:[#allocation9 + $0x88] sm:$0xff]
    %v1062 = vld [vmem:[#allocation9 + $0x90] sm:$0xff]
    %v1063 = vld [vmem:[#allocation9 + $0x98] sm:$0xff]
    %v1064 = vld [vmem:[#allocation9 + $0xa0] sm:$0xff]
    %v1065 = vld [vmem:[#allocation9 + $0xa8] sm:$0xff]
    %v1066 = vld [vmem:[#allocation9 + $0xb0] sm:$0xff]
    %v1067 = vld [vmem:[#allocation9 + $0xb8] sm:$0xff]
    %v1068 = vld [vmem:[#allocation9 + $0xc0] sm:$0xff]
    %v1069 = vld [vmem:[#allocation9 + $0xc8] sm:$0xff]
    %v1070 = vld [vmem:[#allocation9 + $0xd0] sm:$0xff]
    %v1071 = vld [vmem:[#allocation9 + $0xd8] sm:$0xff]
    %v1072 = vld [vmem:[#allocation9 + $0xe0] sm:$0xff]
    %v1073 = vld [vmem:[#allocation9 + $0xe8] sm:$0xff]
    %v1074 = vld [vmem:[#allocation9 + $0xf0] sm:$0xff]
    %v1075 = vld [vmem:[#allocation9 + $0xf8] sm:$0xff]
    %v1076 = vld [vmem:[#allocation9 + $0x100] sm:$0xff]
    %v1077 = vld [vmem:[#allocation9 + $0x108] sm:$0xff]
    %v1078 = vld [vmem:[#allocation9 + $0x110] sm:$0xff]
    %v1079 = vld [vmem:[#allocation9 + $0x118] sm:$0xff]
    %v1080 = vld [vmem:[#allocation9 + $0x120] sm:$0xff]
    %v1081 = vld [vmem:[#allocation9 + $0x128] sm:$0xff]
    %v1082 = vld [vmem:[#allocation9 + $0x130] sm:$0xff]
    %v1083 = vld [vmem:[#allocation9 + $0x138] sm:$0xff]
    %v1084 = vld [vmem:[#allocation9 + $0x140] sm:$0xff]
    %v1085 = vld [vmem:[#allocation9 + $0x148] sm:$0xff]
    %v1086 = vld [vmem:[#allocation9 + $0x150] sm:$0xff]
    %v1087 = vld [vmem:[#allocation9 + $0x158] sm:$0xff]
    %v1088 = vld [vmem:[#allocation9 + $0x160] sm:$0xff]
    %v1089 = vld [vmem:[#allocation9 + $0x168] sm:$0xff]
    %v1090 = vld [vmem:[#allocation9 + $0x170] sm:$0xff]
    %v1091 = vld [vmem:[#allocation9 + $0x178] sm:$0xff]
    %v1092 = vld [vmem:[#allocation9 + $0x180] sm:$0xff]
    %v1093 = vld [vmem:[#allocation9 + $0x188] sm:$0xff]
    %v1094 = vld [vmem:[#allocation9 + $0x190] sm:$0xff]
    %v1095 = vld [vmem:[#allocation9 + $0x198] sm:$0xff]
    %v1096 = vld [vmem:[#allocation9 + $0x1a0] sm:$0xff]
    %v1097 = vld [vmem:[#allocation9 + $0x1a8] sm:$0xff]
    %v1098 = vld [vmem:[#allocation9 + $0x1b0] sm:$0xff]
    %v1099 = vld [vmem:[#allocation9 + $0x1b8] sm:$0xff]
    %v1100 = vld [vmem:[#allocation9 + $0x1c0] sm:$0xff]
    %v1101 = vld [vmem:[#allocation9 + $0x1c8] sm:$0xff]
    %v1102 = vld [vmem:[#allocation9 + $0x1d0] sm:$0xff]
    %v1103 = vld [vmem:[#allocation9 + $0x1d8] sm:$0xff]
    %v1104 = vld [vmem:[#allocation9 + $0x1e0] sm:$0xff]
    %v1105 = vld [vmem:[#allocation9 + $0x1e8] sm:$0xff]
    %v1106 = vld [vmem:[#allocation9 + $0x1f0] sm:$0xff]
    %v1107 = vld [vmem:[#allocation9 + $0x1f8] sm:$0xff]
    %v1108 = vld [vmem:[#allocation9 + $0x200] sm:$0xff]
    %v1109 = vld [vmem:[#allocation9 + $0x208] sm:$0xff]
    %v1110 = vld [vmem:[#allocation9 + $0x210] sm:$0xff]
    %v1111 = vld [vmem:[#allocation9 + $0x218] sm:$0xff]
    %v1112 = vld [vmem:[#allocation9 + $0x220] sm:$0xff]
    %v1113 = vld [vmem:[#allocation9 + $0x228] sm:$0xff]
    %v1114 = vld [vmem:[#allocation9 + $0x230] sm:$0xff]
    %v1115 = vld [vmem:[#allocation9 + $0x238] sm:$0xff]
    %v1116 = vld [vmem:[#allocation9 + $0x240] sm:$0xff]
    %v1117 = vld [vmem:[#allocation9 + $0x248] sm:$0xff]
    %v1118 = vld [vmem:[#allocation9 + $0x250] sm:$0xff]
    %v1119 = vld [vmem:[#allocation9 + $0x258] sm:$0xff]
    %v1120 = vld [vmem:[#allocation9 + $0x260] sm:$0xff]
    %v1121 = vld [vmem:[#allocation9 + $0x268] sm:$0xff]
    %v1122 = vld [vmem:[#allocation9 + $0x270] sm:$0xff]
    %v1123 = vld [vmem:[#allocation9 + $0x278] sm:$0xff]
    %v1124 = vld [vmem:[#allocation9 + $0x280] sm:$0xff]
    %v1125 = vld [vmem:[#allocation9 + $0x288] sm:$0xff]
    %v1126 = vld [vmem:[#allocation9 + $0x290] sm:$0xff]
    %v1127 = vld [vmem:[#allocation9 + $0x298] sm:$0xff]
    %v1128 = vld [vmem:[#allocation9 + $0x2a0] sm:$0xff]
    %v1129 = vld [vmem:[#allocation9 + $0x2a8] sm:$0xff]
    %v1130 = vld [vmem:[#allocation9 + $0x2b0] sm:$0xff]
    %v1131 = vld [vmem:[#allocation9 + $0x2b8] sm:$0xff]
    %v1132 = vld [vmem:[#allocation9 + $0x2c0] sm:$0xff]
    %v1133 = vld [vmem:[#allocation9 + $0x2c8] sm:$0xff]
    %v1134 = vld [vmem:[#allocation9 + $0x2d0] sm:$0xff]
    %v1135 = vld [vmem:[#allocation9 + $0x2d8] sm:$0xff]
    %v1136 = vld [vmem:[#allocation9 + $0x2e0] sm:$0xff]
    %v1137 = vld [vmem:[#allocation9 + $0x2e8] sm:$0xff]
    %v1138 = vld [vmem:[#allocation9 + $0x2f0] sm:$0xff]
    %v1139 = vld [vmem:[#allocation9 + $0x2f8] sm:$0xff]
    %v1140 = vld [vmem:[#allocation9 + $0x300] sm:$0xff]
    %v1141 = vld [vmem:[#allocation9 + $0x308] sm:$0xff]
    %v1142 = vld [vmem:[#allocation9 + $0x310] sm:$0xff]
    %v1143 = vld [vmem:[#allocation9 + $0x318] sm:$0xff]
    %v1144 = vld [vmem:[#allocation9 + $0x320] sm:$0xff]
    %v1145 = vld [vmem:[#allocation9 + $0x328] sm:$0xff]
    %v1146 = vld [vmem:[#allocation9 + $0x330] sm:$0xff]
    %v1147 = vld [vmem:[#allocation9 + $0x338] sm:$0xff]
    %v1148 = vld [vmem:[#allocation9 + $0x340] sm:$0xff]
    %v1149 = vld [vmem:[#allocation9 + $0x348] sm:$0xff]
    %v1150 = vld [vmem:[#allocation9 + $0x350] sm:$0xff]
    %v1151 = vld [vmem:[#allocation9 + $0x358] sm:$0xff]
    %v1152 = vld [vmem:[#allocation9 + $0x360] sm:$0xff]
    %v1153 = vld [vmem:[#allocation9 + $0x368] sm:$0xff]
    %v1154 = vld [vmem:[#allocation9 + $0x370] sm:$0xff]
    %v1155 = vld [vmem:[#allocation9 + $0x378] sm:$0xff]
    %v1156 = vld [vmem:[#allocation9 + $0x380] sm:$0xff]
    %v1157 = vld [vmem:[#allocation9 + $0x388] sm:$0xff]
    %v1158 = vld [vmem:[#allocation9 + $0x390] sm:$0xff]
    %v1159 = vld [vmem:[#allocation9 + $0x398] sm:$0xff]
    %v1160 = vld [vmem:[#allocation9 + $0x3a0] sm:$0xff]
    %v1161 = vld [vmem:[#allocation9 + $0x3a8] sm:$0xff]
    %v1162 = vld [vmem:[#allocation9 + $0x3b0] sm:$0xff]
    %v1163 = vld [vmem:[#allocation9 + $0x3b8] sm:$0xff]
    %v1164 = vld [vmem:[#allocation9 + $0x3c0] sm:$0xff]
    %v1165 = vld [vmem:[#allocation9 + $0x3c8] sm:$0xff]
    %v1166 = vld [vmem:[#allocation9 + $0x3d0] sm:$0xff]
    %v1167 = vld [vmem:[#allocation9 + $0x3d8] sm:$0xff]
    %v1168 = vld [vmem:[#allocation9 + $0x3e0] sm:$0xff]
    %v1169 = vld [vmem:[#allocation9 + $0x3e8] sm:$0xff]
    %v1170 = vld [vmem:[#allocation9 + $0x3f0] sm:$0xff]
    %v1171 = vld [vmem:[#allocation9 + $0x3f8] sm:$0xff]
    %v1300 = vunpack.c.l.b16 %v1044
    %v1301 = vunpack.c.h.b16 %v1044
    %v1302 = vunpack.c.l.b16 %v1045
    %v1303 = vunpack.c.h.b16 %v1045
    %v1304 = vunpack.c.l.b16 %v1046
    %v1305 = vunpack.c.h.b16 %v1046
    %v1306 = vunpack.c.l.b16 %v1047
    %v1307 = vunpack.c.h.b16 %v1047
    %v1308 = vunpack.c.l.b16 %v1048
    %v1309 = vunpack.c.h.b16 %v1048
    %v1310 = vunpack.c.l.b16 %v1049
    %v1311 = vunpack.c.h.b16 %v1049
    %v1312 = vunpack.c.l.b16 %v1050
    %v1313 = vunpack.c.h.b16 %v1050
    %v1314 = vunpack.c.l.b16 %v1051
    %v1315 = vunpack.c.h.b16 %v1051
    %v1316 = vunpack.c.l.b16 %v1052
    %v1317 = vunpack.c.h.b16 %v1052
    %v1318 = vunpack.c.l.b16 %v1053
    %v1319 = vunpack.c.h.b16 %v1053
    %v1320 = vunpack.c.l.b16 %v1054
    %v1321 = vunpack.c.h.b16 %v1054
    %v1322 = vunpack.c.l.b16 %v1055
    %v1323 = vunpack.c.h.b16 %v1055
    %v1324 = vunpack.c.l.b16 %v1056
    %v1325 = vunpack.c.h.b16 %v1056
    %v1326 = vunpack.c.l.b16 %v1057
    %v1327 = vunpack.c.h.b16 %v1057
    %v1328 = vunpack.c.l.b16 %v1058
    %v1329 = vunpack.c.h.b16 %v1058
    %v1330 = vunpack.c.l.b16 %v1059
    %v1331 = vunpack.c.h.b16 %v1059
    %v1332 = vunpack.c.l.b16 %v1060
    %v1333 = vunpack.c.h.b16 %v1060
    %v1334 = vunpack.c.l.b16 %v1061
    %v1335 = vunpack.c.h.b16 %v1061
    %v1336 = vunpack.c.l.b16 %v1062
    %v1337 = vunpack.c.h.b16 %v1062
    %v1338 = vunpack.c.l.b16 %v1063
    %v1339 = vunpack.c.h.b16 %v1063
    %v1340 = vunpack.c.l.b16 %v1064
    %v1341 = vunpack.c.h.b16 %v1064
    %v1342 = vunpack.c.l.b16 %v1065
    %v1343 = vunpack.c.h.b16 %v1065
    %v1344 = vunpack.c.l.b16 %v1066
    %v1345 = vunpack.c.h.b16 %v1066
    %v1346 = vunpack.c.l.b16 %v1067
    %v1347 = vunpack.c.h.b16 %v1067
    %v1348 = vunpack.c.l.b16 %v1068
    %v1349 = vunpack.c.h.b16 %v1068
    %v1350 = vunpack.c.l.b16 %v1069
    %v1351 = vunpack.c.h.b16 %v1069
    %v1352 = vunpack.c.l.b16 %v1070
    %v1353 = vunpack.c.h.b16 %v1070
    %v1354 = vunpack.c.l.b16 %v1071
    %v1355 = vunpack.c.h.b16 %v1071
    %v1356 = vunpack.c.l.b16 %v1072
    %v1357 = vunpack.c.h.b16 %v1072
    %v1358 = vunpack.c.l.b16 %v1073
    %v1359 = vunpack.c.h.b16 %v1073
    %v1360 = vunpack.c.l.b16 %v1074
    %v1361 = vunpack.c.h.b16 %v1074
    %v1362 = vunpack.c.l.b16 %v1075
    %v1363 = vunpack.c.h.b16 %v1075
    %v1364 = vunpack.c.l.b16 %v1076
    %v1365 = vunpack.c.h.b16 %v1076
    %v1366 = vunpack.c.l.b16 %v1077
    %v1367 = vunpack.c.h.b16 %v1077
    %v1368 = vunpack.c.l.b16 %v1078
    %v1369 = vunpack.c.h.b16 %v1078
    %v1370 = vunpack.c.l.b16 %v1079
    %v1371 = vunpack.c.h.b16 %v1079
    %v1372 = vunpack.c.l.b16 %v1080
    %v1373 = vunpack.c.h.b16 %v1080
    %v1374 = vunpack.c.l.b16 %v1081
    %v1375 = vunpack.c.h.b16 %v1081
    %v1376 = vunpack.c.l.b16 %v1082
    %v1377 = vunpack.c.h.b16 %v1082
    %v1378 = vunpack.c.l.b16 %v1083
    %v1379 = vunpack.c.h.b16 %v1083
    %v1380 = vunpack.c.l.b16 %v1084
    %v1381 = vunpack.c.h.b16 %v1084
    %v1382 = vunpack.c.l.b16 %v1085
    %v1383 = vunpack.c.h.b16 %v1085
    %v1384 = vunpack.c.l.b16 %v1086
    %v1385 = vunpack.c.h.b16 %v1086
    %v1386 = vunpack.c.l.b16 %v1087
    %v1387 = vunpack.c.h.b16 %v1087
    %v1388 = vunpack.c.l.b16 %v1088
    %v1389 = vunpack.c.h.b16 %v1088
    %v1390 = vunpack.c.l.b16 %v1089
    %v1391 = vunpack.c.h.b16 %v1089
    %v1392 = vunpack.c.l.b16 %v1090
    %v1393 = vunpack.c.h.b16 %v1090
    %v1394 = vunpack.c.l.b16 %v1091
    %v1395 = vunpack.c.h.b16 %v1091
    %v1396 = vunpack.c.l.b16 %v1092
    %v1397 = vunpack.c.h.b16 %v1092
    %v1398 = vunpack.c.l.b16 %v1093
    %v1399 = vunpack.c.h.b16 %v1093
    %v1400 = vunpack.c.l.b16 %v1094
    %v1401 = vunpack.c.h.b16 %v1094
    %v1402 = vunpack.c.l.b16 %v1095
    %v1403 = vunpack.c.h.b16 %v1095
    %v1404 = vunpack.c.l.b16 %v1096
    %v1405 = vunpack.c.h.b16 %v1096
    %v1406 = vunpack.c.l.b16 %v1097
    %v1407 = vunpack.c.h.b16 %v1097
    %v1408 = vunpack.c.l.b16 %v1098
    %v1409 = vunpack.c.h.b16 %v1098
    %v1410 = vunpack.c.l.b16 %v1099
    %v1411 = vunpack.c.h.b16 %v1099
    %v1412 = vunpack.c.l.b16 %v1100
    %v1413 = vunpack.c.h.b16 %v1100
    %v1414 = vunpack.c.l.b16 %v1101
    %v1415 = vunpack.c.h.b16 %v1101
    %v1416 = vunpack.c.l.b16 %v1102
    %v1417 = vunpack.c.h.b16 %v1102
    %v1418 = vunpack.c.l.b16 %v1103
    %v1419 = vunpack.c.h.b16 %v1103
    %v1420 = vunpack.c.l.b16 %v1104
    %v1421 = vunpack.c.h.b16 %v1104
    %v1422 = vunpack.c.l.b16 %v1105
    %v1423 = vunpack.c.h.b16 %v1105
    %v1424 = vunpack.c.l.b16 %v1106
    %v1425 = vunpack.c.h.b16 %v1106
    %v1426 = vunpack.c.l.b16 %v1107
    %v1427 = vunpack.c.h.b16 %v1107
    %v1428 = vunpack.c.l.b16 %v1108
    %v1429 = vunpack.c.h.b16 %v1108
    %v1430 = vunpack.c.l.b16 %v1109
    %v1431 = vunpack.c.h.b16 %v1109
    %v1432 = vunpack.c.l.b16 %v1110
    %v1433 = vunpack.c.h.b16 %v1110
    %v1434 = vunpack.c.l.b16 %v1111
    %v1435 = vunpack.c.h.b16 %v1111
    %v1436 = vunpack.c.l.b16 %v1112
    %v1437 = vunpack.c.h.b16 %v1112
    %v1438 = vunpack.c.l.b16 %v1113
    %v1439 = vunpack.c.h.b16 %v1113
    %v1440 = vunpack.c.l.b16 %v1114
    %v1441 = vunpack.c.h.b16 %v1114
    %v1442 = vunpack.c.l.b16 %v1115
    %v1443 = vunpack.c.h.b16 %v1115
    %v1444 = vunpack.c.l.b16 %v1116
    %v1445 = vunpack.c.h.b16 %v1116
    %v1446 = vunpack.c.l.b16 %v1117
    %v1447 = vunpack.c.h.b16 %v1117
    %v1448 = vunpack.c.l.b16 %v1118
    %v1449 = vunpack.c.h.b16 %v1118
    %v1450 = vunpack.c.l.b16 %v1119
    %v1451 = vunpack.c.h.b16 %v1119
    %v1452 = vunpack.c.l.b16 %v1120
    %v1453 = vunpack.c.h.b16 %v1120
    %v1454 = vunpack.c.l.b16 %v1121
    %v1455 = vunpack.c.h.b16 %v1121
    %v1456 = vunpack.c.l.b16 %v1122
    %v1457 = vunpack.c.h.b16 %v1122
    %v1458 = vunpack.c.l.b16 %v1123
    %v1459 = vunpack.c.h.b16 %v1123
    %v1460 = vunpack.c.l.b16 %v1124
    %v1461 = vunpack.c.h.b16 %v1124
    %v1462 = vunpack.c.l.b16 %v1125
    %v1463 = vunpack.c.h.b16 %v1125
    %v1464 = vunpack.c.l.b16 %v1126
    %v1465 = vunpack.c.h.b16 %v1126
    %v1466 = vunpack.c.l.b16 %v1127
    %v1467 = vunpack.c.h.b16 %v1127
    %v1468 = vunpack.c.l.b16 %v1128
    %v1469 = vunpack.c.h.b16 %v1128
    %v1470 = vunpack.c.l.b16 %v1129
    %v1471 = vunpack.c.h.b16 %v1129
    %v1472 = vunpack.c.l.b16 %v1130
    %v1473 = vunpack.c.h.b16 %v1130
    %v1474 = vunpack.c.l.b16 %v1131
    %v1475 = vunpack.c.h.b16 %v1131
    %v1476 = vunpack.c.l.b16 %v1132
    %v1477 = vunpack.c.h.b16 %v1132
    %v1478 = vunpack.c.l.b16 %v1133
    %v1479 = vunpack.c.h.b16 %v1133
    %v1480 = vunpack.c.l.b16 %v1134
    %v1481 = vunpack.c.h.b16 %v1134
    %v1482 = vunpack.c.l.b16 %v1135
    %v1483 = vunpack.c.h.b16 %v1135
    %v1484 = vunpack.c.l.b16 %v1136
    %v1485 = vunpack.c.h.b16 %v1136
    %v1486 = vunpack.c.l.b16 %v1137
    %v1487 = vunpack.c.h.b16 %v1137
    %v1488 = vunpack.c.l.b16 %v1138
    %v1489 = vunpack.c.h.b16 %v1138
    %v1490 = vunpack.c.l.b16 %v1139
    %v1491 = vunpack.c.h.b16 %v1139
    %v1492 = vunpack.c.l.b16 %v1140
    %v1493 = vunpack.c.h.b16 %v1140
    %v1494 = vunpack.c.l.b16 %v1141
    %v1495 = vunpack.c.h.b16 %v1141
    %v1496 = vunpack.c.l.b16 %v1142
    %v1497 = vunpack.c.h.b16 %v1142
    %v1498 = vunpack.c.l.b16 %v1143
    %v1499 = vunpack.c.h.b16 %v1143
    %v1500 = vunpack.c.l.b16 %v1144
    %v1501 = vunpack.c.h.b16 %v1144
    %v1502 = vunpack.c.l.b16 %v1145
    %v1503 = vunpack.c.h.b16 %v1145
    %v1504 = vunpack.c.l.b16 %v1146
    %v1505 = vunpack.c.h.b16 %v1146
    %v1506 = vunpack.c.l.b16 %v1147
    %v1507 = vunpack.c.h.b16 %v1147
    %v1508 = vunpack.c.l.b16 %v1148
    %v1509 = vunpack.c.h.b16 %v1148
    %v1510 = vunpack.c.l.b16 %v1149
    %v1511 = vunpack.c.h.b16 %v1149
    %v1512 = vunpack.c.l.b16 %v1150
    %v1513 = vunpack.c.h.b16 %v1150
    %v1514 = vunpack.c.l.b16 %v1151
    %v1515 = vunpack.c.h.b16 %v1151
    %v1516 = vunpack.c.l.b16 %v1152
    %v1517 = vunpack.c.h.b16 %v1152
    %v1518 = vunpack.c.l.b16 %v1153
    %v1519 = vunpack.c.h.b16 %v1153
    %v1520 = vunpack.c.l.b16 %v1154
    %v1521 = vunpack.c.h.b16 %v1154
    %v1522 = vunpack.c.l.b16 %v1155
    %v1523 = vunpack.c.h.b16 %v1155
    %v1524 = vunpack.c.l.b16 %v1156
    %v1525 = vunpack.c.h.b16 %v1156
    %v1526 = vunpack.c.l.b16 %v1157
    %v1527 = vunpack.c.h.b16 %v1157
    %v1528 = vunpack.c.l.b16 %v1158
    %v1529 = vunpack.c.h.b16 %v1158
    %v1530 = vunpack.c.l.b16 %v1159
    %v1531 = vunpack.c.h.b16 %v1159
    %v1532 = vunpack.c.l.b16 %v1160
    %v1533 = vunpack.c.h.b16 %v1160
    %v1534 = vunpack.c.l.b16 %v1161
    %v1535 = vunpack.c.h.b16 %v1161
    %v1536 = vunpack.c.l.b16 %v1162
    %v1537 = vunpack.c.h.b16 %v1162
    %v1538 = vunpack.c.l.b16 %v1163
    %v1539 = vunpack.c.h.b16 %v1163
    %v1540 = vunpack.c.l.b16 %v1164
    %v1541 = vunpack.c.h.b16 %v1164
    %v1542 = vunpack.c.l.b16 %v1165
    %v1543 = vunpack.c.h.b16 %v1165
    %v1544 = vunpack.c.l.b16 %v1166
    %v1545 = vunpack.c.h.b16 %v1166
    %v1546 = vunpack.c.l.b16 %v1167
    %v1547 = vunpack.c.h.b16 %v1167
    %v1548 = vunpack.c.l.b16 %v1168
    %v1549 = vunpack.c.h.b16 %v1168
    %v1550 = vunpack.c.l.b16 %v1169
    %v1551 = vunpack.c.h.b16 %v1169
    %v1552 = vunpack.c.l.b16 %v1170
    %v1553 = vunpack.c.h.b16 %v1170
    %v1554 = vunpack.c.l.b16 %v1171
    %v1555 = vunpack.c.h.b16 %v1171
    %v1556 = vpack.c.b16 %v1308, %v1300
    %v1557 = vpack.c.b16 %v1309, %v1301
    %v1558 = vpack.c.b16 %v1310, %v1302
    %v1559 = vpack.c.b16 %v1311, %v1303
    %v1560 = vpack.c.b16 %v1312, %v1304
    %v1561 = vpack.c.b16 %v1313, %v1305
    %v1562 = vpack.c.b16 %v1314, %v1306
    %v1563 = vpack.c.b16 %v1315, %v1307
    %v1564 = vpack.c.b16 %v1324, %v1316
    %v1565 = vpack.c.b16 %v1325, %v1317
    %v1566 = vpack.c.b16 %v1326, %v1318
    %v1567 = vpack.c.b16 %v1327, %v1319
    %v1568 = vpack.c.b16 %v1328, %v1320
    %v1569 = vpack.c.b16 %v1329, %v1321
    %v1570 = vpack.c.b16 %v1330, %v1322
    %v1571 = vpack.c.b16 %v1331, %v1323
    %v1572 = vpack.c.b16 %v1340, %v1332
    %v1573 = vpack.c.b16 %v1341, %v1333
    %v1574 = vpack.c.b16 %v1342, %v1334
    %v1575 = vpack.c.b16 %v1343, %v1335
    %v1576 = vpack.c.b16 %v1344, %v1336
    %v1577 = vpack.c.b16 %v1345, %v1337
    %v1578 = vpack.c.b16 %v1346, %v1338
    %v1579 = vpack.c.b16 %v1347, %v1339
    %v1580 = vpack.c.b16 %v1356, %v1348
    %v1581 = vpack.c.b16 %v1357, %v1349
    %v1582 = vpack.c.b16 %v1358, %v1350
    %v1583 = vpack.c.b16 %v1359, %v1351
    %v1584 = vpack.c.b16 %v1360, %v1352
    %v1585 = vpack.c.b16 %v1361, %v1353
    %v1586 = vpack.c.b16 %v1362, %v1354
    %v1587 = vpack.c.b16 %v1363, %v1355
    %v1588 = vpack.c.b16 %v1372, %v1364
    %v1589 = vpack.c.b16 %v1373, %v1365
    %v1590 = vpack.c.b16 %v1374, %v1366
    %v1591 = vpack.c.b16 %v1375, %v1367
    %v1592 = vpack.c.b16 %v1376, %v1368
    %v1593 = vpack.c.b16 %v1377, %v1369
    %v1594 = vpack.c.b16 %v1378, %v1370
    %v1595 = vpack.c.b16 %v1379, %v1371
    %v1596 = vpack.c.b16 %v1388, %v1380
    %v1597 = vpack.c.b16 %v1389, %v1381
    %v1598 = vpack.c.b16 %v1390, %v1382
    %v1599 = vpack.c.b16 %v1391, %v1383
    %v1600 = vpack.c.b16 %v1392, %v1384
    %v1601 = vpack.c.b16 %v1393, %v1385
    %v1602 = vpack.c.b16 %v1394, %v1386
    %v1603 = vpack.c.b16 %v1395, %v1387
    %v1604 = vpack.c.b16 %v1404, %v1396
    %v1605 = vpack.c.b16 %v1405, %v1397
    %v1606 = vpack.c.b16 %v1406, %v1398
    %v1607 = vpack.c.b16 %v1407, %v1399
    %v1608 = vpack.c.b16 %v1408, %v1400
    %v1609 = vpack.c.b16 %v1409, %v1401
    %v1610 = vpack.c.b16 %v1410, %v1402
    %v1611 = vpack.c.b16 %v1411, %v1403
    %v1612 = vpack.c.b16 %v1420, %v1412
    %v1613 = vpack.c.b16 %v1421, %v1413
    %v1614 = vpack.c.b16 %v1422, %v1414
    %v1615 = vpack.c.b16 %v1423, %v1415
    %v1616 = vpack.c.b16 %v1424, %v1416
    %v1617 = vpack.c.b16 %v1425, %v1417
    %v1618 = vpack.c.b16 %v1426, %v1418
    %v1619 = vpack.c.b16 %v1427, %v1419
    %v1620 = vpack.c.b16 %v1436, %v1428
    %v1621 = vpack.c.b16 %v1437, %v1429
    %v1622 = vpack.c.b16 %v1438, %v1430
    %v1623 = vpack.c.b16 %v1439, %v1431
    %v1624 = vpack.c.b16 %v1440, %v1432
    %v1625 = vpack.c.b16 %v1441, %v1433
    %v1626 = vpack.c.b16 %v1442, %v1434
    %v1627 = vpack.c.b16 %v1443, %v1435
    %v1628 = vpack.c.b16 %v1452, %v1444
    %v1629 = vpack.c.b16 %v1453, %v1445
    %v1630 = vpack.c.b16 %v1454, %v1446
    %v1631 = vpack.c.b16 %v1455, %v1447
    %v1632 = vpack.c.b16 %v1456, %v1448
    %v1633 = vpack.c.b16 %v1457, %v1449
    %v1634 = vpack.c.b16 %v1458, %v1450
    %v1635 = vpack.c.b16 %v1459, %v1451
    %v1636 = vpack.c.b16 %v1468, %v1460
    %v1637 = vpack.c.b16 %v1469, %v1461
    %v1638 = vpack.c.b16 %v1470, %v1462
    %v1639 = vpack.c.b16 %v1471, %v1463
    %v1640 = vpack.c.b16 %v1472, %v1464
    %v1641 = vpack.c.b16 %v1473, %v1465
    %v1642 = vpack.c.b16 %v1474, %v1466
    %v1643 = vpack.c.b16 %v1475, %v1467
    %v1644 = vpack.c.b16 %v1484, %v1476
    %v1645 = vpack.c.b16 %v1485, %v1477
    %v1646 = vpack.c.b16 %v1486, %v1478
    %v1647 = vpack.c.b16 %v1487, %v1479
    %v1648 = vpack.c.b16 %v1488, %v1480
    %v1649 = vpack.c.b16 %v1489, %v1481
    %v1650 = vpack.c.b16 %v1490, %v1482
    %v1651 = vpack.c.b16 %v1491, %v1483
    %v1652 = vpack.c.b16 %v1500, %v1492
    %v1653 = vpack.c.b16 %v1501, %v1493
    %v1654 = vpack.c.b16 %v1502, %v1494
    %v1655 = vpack.c.b16 %v1503, %v1495
    %v1656 = vpack.c.b16 %v1504, %v1496
    %v1657 = vpack.c.b16 %v1505, %v1497
    %v1658 = vpack.c.b16 %v1506, %v1498
    %v1659 = vpack.c.b16 %v1507, %v1499
    %v1660 = vpack.c.b16 %v1516, %v1508
    %v1661 = vpack.c.b16 %v1517, %v1509
    %v1662 = vpack.c.b16 %v1518, %v1510
    %v1663 = vpack.c.b16 %v1519, %v1511
    %v1664 = vpack.c.b16 %v1520, %v1512
    %v1665 = vpack.c.b16 %v1521, %v1513
    %v1666 = vpack.c.b16 %v1522, %v1514
    %v1667 = vpack.c.b16 %v1523, %v1515
    %v1668 = vpack.c.b16 %v1532, %v1524
    %v1669 = vpack.c.b16 %v1533, %v1525
    %v1670 = vpack.c.b16 %v1534, %v1526
    %v1671 = vpack.c.b16 %v1535, %v1527
    %v1672 = vpack.c.b16 %v1536, %v1528
    %v1673 = vpack.c.b16 %v1537, %v1529
    %v1674 = vpack.c.b16 %v1538, %v1530
    %v1675 = vpack.c.b16 %v1539, %v1531
    %v1676 = vpack.c.b16 %v1548, %v1540
    %v1677 = vpack.c.b16 %v1549, %v1541
    %v1678 = vpack.c.b16 %v1550, %v1542
    %v1679 = vpack.c.b16 %v1551, %v1543
    %v1680 = vpack.c.b16 %v1552, %v1544
    %v1681 = vpack.c.b16 %v1553, %v1545
    %v1682 = vpack.c.b16 %v1554, %v1546
    %v1683 = vpack.c.b16 %v1555, %v1547
    %1812 = vmatprep.subr.bf16.mxu0 %v1557
    %1813 = vmatpush1.bf16.msra.mxu0 %v1556
    %1814 = vmatprep.subr.bf16.mxu0 %v1565
    %1815 = vmatpush1.bf16.msra.mxu0 %v1564
    %1816 = vmatprep.subr.bf16.mxu0 %v1573
    %1817 = vmatpush1.bf16.msra.mxu0 %v1572
    %1818 = vmatprep.subr.bf16.mxu0 %v1581
    %1819 = vmatpush1.bf16.msra.mxu0 %v1580
    %1820 = vmatprep.subr.bf16.mxu0 %v1589
    %1821 = vmatpush1.bf16.msra.mxu0 %v1588
    %1822 = vmatprep.subr.bf16.mxu0 %v1597
    %1823 = vmatpush1.bf16.msra.mxu0 %v1596
    %1824 = vmatprep.subr.bf16.mxu0 %v1605
    %1825 = vmatpush1.bf16.msra.mxu0 %v1604
    %1826 = vmatprep.subr.bf16.mxu0 %v1613
    %1827 = vmatpush1.bf16.msra.mxu0 %v1612
    %1828 = vmatprep.subr.bf16.mxu0 %v1621
    %1829 = vmatpush1.bf16.msra.mxu0 %v1620
    %1830 = vmatprep.subr.bf16.mxu0 %v1629
    %1831 = vmatpush1.bf16.msra.mxu0 %v1628
    %1832 = vmatprep.subr.bf16.mxu0 %v1637
    %1833 = vmatpush1.bf16.msra.mxu0 %v1636
    %1834 = vmatprep.subr.bf16.mxu0 %v1645
    %1835 = vmatpush1.bf16.msra.mxu0 %v1644
    %1836 = vmatprep.subr.bf16.mxu0 %v1653
    %1837 = vmatpush1.bf16.msra.mxu0 %v1652
    %1838 = vmatprep.subr.bf16.mxu0 %v1661
    %1839 = vmatpush1.bf16.msra.mxu0 %v1660
    %1840 = vmatprep.subr.bf16.mxu0 %v1669
    %1841 = vmatpush1.bf16.msra.mxu0 %v1668
    %1842 = vmatprep.subr.bf16.mxu0 %v1677
    %1843 = vmatpush1.bf16.msra.mxu0 %v1676
    %1844 = vmatprep.mubr.bf16.mxu0 %v1043
    %1845 = vmatmul.mubr.bf16.gmra.mrb[0].mxu0 %v1042
    %v1846 = vpop.f32.mrb[0].mxu0
    %v1847 = vadd.f32 0.0, %v1846
    %v1848 = vpop.f32.mrb[0].mxu0
    %v1849 = vadd.f32 0.0, %v1848
    %v1850 = vpop.f32.mrb[0].mxu0
    %v1851 = vadd.f32 0.0, %v1850
    %v1852 = vpop.f32.mrb[0].mxu0
    %v1853 = vadd.f32 0.0, %v1852
    %1854 = vdwg.mxu0
    %1855 = vmatprep.subr.bf16.mxu0 %v1559
    %1856 = vmatpush1.bf16.msra.mxu0 %v1558
    %1857 = vmatprep.subr.bf16.mxu0 %v1567
    %1858 = vmatpush1.bf16.msra.mxu0 %v1566
    %1859 = vmatprep.subr.bf16.mxu0 %v1575
    %1860 = vmatpush1.bf16.msra.mxu0 %v1574
    %1861 = vmatprep.subr.bf16.mxu0 %v1583
    %1862 = vmatpush1.bf16.msra.mxu0 %v1582
    %1863 = vmatprep.subr.bf16.mxu0 %v1591
    %1864 = vmatpush1.bf16.msra.mxu0 %v1590
    %1865 = vmatprep.subr.bf16.mxu0 %v1599
    %1866 = vmatpush1.bf16.msra.mxu0 %v1598
    %1867 = vmatprep.subr.bf16.mxu0 %v1607
    %1868 = vmatpush1.bf16.msra.mxu0 %v1606
    %1869 = vmatprep.subr.bf16.mxu0 %v1615
    %1870 = vmatpush1.bf16.msra.mxu0 %v1614
    %1871 = vmatprep.subr.bf16.mxu0 %v1623
    %1872 = vmatpush1.bf16.msra.mxu0 %v1622
    %1873 = vmatprep.subr.bf16.mxu0 %v1631
    %1874 = vmatpush1.bf16.msra.mxu0 %v1630
    %1875 = vmatprep.subr.bf16.mxu0 %v1639
    %1876 = vmatpush1.bf16.msra.mxu0 %v1638
    %1877 = vmatprep.subr.bf16.mxu0 %v1647
    %1878 = vmatpush1.bf16.msra.mxu0 %v1646
    %1879 = vmatprep.subr.bf16.mxu0 %v1655
    %1880 = vmatpush1.bf16.msra.mxu0 %v1654
    %1881 = vmatprep.subr.bf16.mxu0 %v1663
    %1882 = vmatpush1.bf16.msra.mxu0 %v1662
    %1883 = vmatprep.subr.bf16.mxu0 %v1671
    %1884 = vmatpush1.bf16.msra.mxu0 %v1670
    %1885 = vmatprep.subr.bf16.mxu0 %v1679
    %1886 = vmatpush1.bf16.msra.mxu0 %v1678
    %1887 = vmatprep.mubr.bf16.mxu0 %v1043
    %1888 = vmatmul.mubr.bf16.gmra.mrb[0].mxu0 %v1042
    %v1889 = vpop.f32.mrb[0].mxu0
    %v1890 = vadd.f32 0.0, %v1889
    %v1891 = vpop.f32.mrb[0].mxu0
    %v1892 = vadd.f32 0.0, %v1891
    %v1893 = vpop.f32.mrb[0].mxu0
    %v1894 = vadd.f32 0.0, %v1893
    %v1895 = vpop.f32.mrb[0].mxu0
    %v1896 = vadd.f32 0.0, %v1895
    %1897 = vdwg.mxu0
    %1898 = vmatprep.subr.bf16.mxu0 %v1561
    %1899 = vmatpush1.bf16.msra.mxu0 %v1560
    %1900 = vmatprep.subr.bf16.mxu0 %v1569
    %1901 = vmatpush1.bf16.msra.mxu0 %v1568
    %1902 = vmatprep.subr.bf16.mxu0 %v1577
    %1903 = vmatpush1.bf16.msra.mxu0 %v1576
    %1904 = vmatprep.subr.bf16.mxu0 %v1585
    %1905 = vmatpush1.bf16.msra.mxu0 %v1584
    %1906 = vmatprep.subr.bf16.mxu0 %v1593
    %1907 = vmatpush1.bf16.msra.mxu0 %v1592
    %1908 = vmatprep.subr.bf16.mxu0 %v1601
    %1909 = vmatpush1.bf16.msra.mxu0 %v1600
    %1910 = vmatprep.subr.bf16.mxu0 %v1609
    %1911 = vmatpush1.bf16.msra.mxu0 %v1608
    %1912 = vmatprep.subr.bf16.mxu0 %v1617
    %1913 = vmatpush1.bf16.msra.mxu0 %v1616
    %1914 = vmatprep.subr.bf16.mxu0 %v1625
    %1915 = vmatpush1.bf16.msra.mxu0 %v1624
    %1916 = vmatprep.subr.bf16.mxu0 %v1633
    %1917 = vmatpush1.bf16.msra.mxu0 %v1632
    %1918 = vmatprep.subr.bf16.mxu0 %v1641
    %1919 = vmatpush1.bf16.msra.mxu0 %v1640
    %1920 = vmatprep.subr.bf16.mxu0 %v1649
    %1921 = vmatpush1.bf16.msra.mxu0 %v1648
    %1922 = vmatprep.subr.bf16.mxu0 %v1657
    %1923 = vmatpush1.bf16.msra.mxu0 %v1656
    %1924 = vmatprep.subr.bf16.mxu0 %v1665
    %1925 = vmatpush1.bf16.msra.mxu0 %v1664
    %1926 = vmatprep.subr.bf16.mxu0 %v1673
    %1927 = vmatpush1.bf16.msra.mxu0 %v1672
    %1928 = vmatprep.subr.bf16.mxu0 %v1681
    %1929 = vmatpush1.bf16.msra.mxu0 %v1680
    %1930 = vmatprep.mubr.bf16.mxu0 %v1043
    %1931 = vmatmul.mubr.bf16.gmra.mrb[0].mxu0 %v1042
    %v1932 = vpop.f32.mrb[0].mxu0
    %v1933 = vadd.f32 0.0, %v1932
    %v1934 = vpop.f32.mrb[0].mxu0
    %v1935 = vadd.f32 0.0, %v1934
    %v1936 = vpop.f32.mrb[0].mxu0
    %v1937 = vadd.f32 0.0, %v1936
    %v1938 = vpop.f32.mrb[0].mxu0
    %v1939 = vadd.f32 0.0, %v1938
    %1940 = vdwg.mxu0
    %1941 = vmatprep.subr.bf16.mxu0 %v1563
    %1942 = vmatpush1.bf16.msra.mxu0 %v1562
    %1943 = vmatprep.subr.bf16.mxu0 %v1571
    %1944 = vmatpush1.bf16.msra.mxu0 %v1570
    %1945 = vmatprep.subr.bf16.mxu0 %v1579
    %1946 = vmatpush1.bf16.msra.mxu0 %v1578
    %1947 = vmatprep.subr.bf16.mxu0 %v1587
    %1948 = vmatpush1.bf16.msra.mxu0 %v1586
    %1949 = vmatprep.subr.bf16.mxu0 %v1595
    %1950 = vmatpush1.bf16.msra.mxu0 %v1594
    %1951 = vmatprep.subr.bf16.mxu0 %v1603
    %1952 = vmatpush1.bf16.msra.mxu0 %v1602
    %1953 = vmatprep.subr.bf16.mxu0 %v1611
    %1954 = vmatpush1.bf16.msra.mxu0 %v1610
    %1955 = vmatprep.subr.bf16.mxu0 %v1619
    %1956 = vmatpush1.bf16.msra.mxu0 %v1618
    %1957 = vmatprep.subr.bf16.mxu0 %v1627
    %1958 = vmatpush1.bf16.msra.mxu0 %v1626
    %1959 = vmatprep.subr.bf16.mxu0 %v1635
    %1960 = vmatpush1.bf16.msra.mxu0 %v1634
    %1961 = vmatprep.subr.bf16.mxu0 %v1643
    %1962 = vmatpush1.bf16.msra.mxu0 %v1642
    %1963 = vmatprep.subr.bf16.mxu0 %v1651
    %1964 = vmatpush1.bf16.msra.mxu0 %v1650
    %1965 = vmatprep.subr.bf16.mxu0 %v1659
    %1966 = vmatpush1.bf16.msra.mxu0 %v1658
    %1967 = vmatprep.subr.bf16.mxu0 %v1667
    %1968 = vmatpush1.bf16.msra.mxu0 %v1666
    %1969 = vmatprep.subr.bf16.mxu0 %v1675
    %1970 = vmatpush1.bf16.msra.mxu0 %v1674
    %1971 = vmatprep.subr.bf16.mxu0 %v1683
    %1972 = vmatpush1.bf16.msra.mxu0 %v1682
    %1973 = vmatprep.mubr.bf16.mxu0 %v1043
    %1974 = vmatmul.mubr.bf16.gmra.mrb[0].mxu0 %v1042
    %v1975 = vpop.f32.mrb[0].mxu0
    %v1976 = vadd.f32 0.0, %v1975
    %v1977 = vpop.f32.mrb[0].mxu0
    %v1978 = vadd.f32 0.0, %v1977
    %v1979 = vpop.f32.mrb[0].mxu0
    %v1980 = vadd.f32 0.0, %v1979
    %v1981 = vpop.f32.mrb[0].mxu0
    %v1982 = vadd.f32 0.0, %v1981
    %1983 = vdwg.mxu0
    %v1984 = vld [vmem:[%s16] sm:$0xff]
    %v1986 = vlaneseq
    %v1987 = vshrl.u32 %v1986, 7
    %v1988 = vsub.s32 0, %v1987
    %v1989 = vrot.slane %v1984, %v1988
    %v1990 = vlaneseq
    %v1991 = vshrl.u32 %v1990, 7
    %v1992 = vsub.s32 1, %v1991
    %v1993 = vrot.slane %v1984, %v1992
    %v1994 = vlaneseq
    %v1995 = vshrl.u32 %v1994, 7
    %v1996 = vsub.s32 2, %v1995
    %v1997 = vrot.slane %v1984, %v1996
    %v1998 = vlaneseq
    %v1999 = vshrl.u32 %v1998, 7
    %v2000 = vsub.s32 3, %v1999
    %v2001 = vrot.slane %v1984, %v2000
    %v2002 = vlaneseq
    %v2003 = vshrl.u32 %v2002, 7
    %v2004 = vsub.s32 4, %v2003
    %v2005 = vrot.slane %v1984, %v2004
    %v2006 = vlaneseq
    %v2007 = vshrl.u32 %v2006, 7
    %v2008 = vsub.s32 5, %v2007
    %v2009 = vrot.slane %v1984, %v2008
    %v2010 = vlaneseq
    %v2011 = vshrl.u32 %v2010, 7
    %v2012 = vsub.s32 6, %v2011
    %v2013 = vrot.slane %v1984, %v2012
    %v2014 = vlaneseq
    %v2015 = vshrl.u32 %v2014, 7
    %v2016 = vsub.s32 7, %v2015
    %v2017 = vrot.slane %v1984, %v2016
    %v2026 = vmul.f32 %v1847, %v1989
    %v2027 = vmul.f32 %v1849, %v1993
    %v2028 = vmul.f32 %v1890, %v1997
    %v2029 = vmul.f32 %v1892, %v2001
    %v2030 = vmul.f32 %v1933, %v2005
    %v2031 = vmul.f32 %v1935, %v2009
    %v2032 = vmul.f32 %v1976, %v2013
    %v2033 = vmul.f32 %v1978, %v2017
    %v2034 = vmul.f32 %v1851, %v1989
    %v2035 = vmul.f32 %v1853, %v1993
    %v2036 = vmul.f32 %v1894, %v1997
    %v2037 = vmul.f32 %v1896, %v2001
    %v2038 = vmul.f32 %v1937, %v2005
    %v2039 = vmul.f32 %v1939, %v2009
    %v2040 = vmul.f32 %v1980, %v2013
    %v2041 = vmul.f32 %v1982, %v2017
    %v2042 = vld [vmem:[%s17] sm:$0xff]
    %v2044 = vlaneseq
    %v2045 = vshrl.u32 %v2044, 7
    %v2046 = vsub.s32 0, %v2045
    %v2047 = vrot.slane %v2042, %v2046
    %v2048 = vlaneseq
    %v2049 = vshrl.u32 %v2048, 7
    %v2050 = vsub.s32 1, %v2049
    %v2051 = vrot.slane %v2042, %v2050
    %v2052 = vlaneseq
    %v2053 = vshrl.u32 %v2052, 7
    %v2054 = vsub.s32 2, %v2053
    %v2055 = vrot.slane %v2042, %v2054
    %v2056 = vlaneseq
    %v2057 = vshrl.u32 %v2056, 7
    %v2058 = vsub.s32 3, %v2057
    %v2059 = vrot.slane %v2042, %v2058
    %v2060 = vlaneseq
    %v2061 = vshrl.u32 %v2060, 7
    %v2062 = vsub.s32 4, %v2061
    %v2063 = vrot.slane %v2042, %v2062
    %v2064 = vlaneseq
    %v2065 = vshrl.u32 %v2064, 7
    %v2066 = vsub.s32 5, %v2065
    %v2067 = vrot.slane %v2042, %v2066
    %v2068 = vlaneseq
    %v2069 = vshrl.u32 %v2068, 7
    %v2070 = vsub.s32 6, %v2069
    %v2071 = vrot.slane %v2042, %v2070
    %v2072 = vlaneseq
    %v2073 = vshrl.u32 %v2072, 7
    %v2074 = vsub.s32 7, %v2073
    %v2075 = vrot.slane %v2042, %v2074
    %v2084 = vadd.f32 %v2026, %v2047
    %v2085 = vadd.f32 %v2027, %v2051
    %v2086 = vadd.f32 %v2028, %v2055
    %v2087 = vadd.f32 %v2029, %v2059
    %v2088 = vadd.f32 %v2030, %v2063
    %v2089 = vadd.f32 %v2031, %v2067
    %v2090 = vadd.f32 %v2032, %v2071
    %v2091 = vadd.f32 %v2033, %v2075
    %v2092 = vadd.f32 %v2034, %v2047
    %v2093 = vadd.f32 %v2035, %v2051
    %v2094 = vadd.f32 %v2036, %v2055
    %v2095 = vadd.f32 %v2037, %v2059
    %v2096 = vadd.f32 %v2038, %v2063
    %v2097 = vadd.f32 %v2039, %v2067
    %v2098 = vadd.f32 %v2040, %v2071
    %v2099 = vadd.f32 %v2041, %v2075
    %v2100 = vmax.f32 %v2084, 0.0
    %v2101 = vmax.f32 %v2085, 0.0
    %v2102 = vmax.f32 %v2086, 0.0
    %v2103 = vmax.f32 %v2087, 0.0
    %v2104 = vmax.f32 %v2088, 0.0
    %v2105 = vmax.f32 %v2089, 0.0
    %v2106 = vmax.f32 %v2090, 0.0
    %v2107 = vmax.f32 %v2091, 0.0
    %v2108 = vmax.f32 %v2092, 0.0
    %v2109 = vmax.f32 %v2093, 0.0
    %v2110 = vmax.f32 %v2094, 0.0
    %v2111 = vmax.f32 %v2095, 0.0
    %v2112 = vmax.f32 %v2096, 0.0
    %v2113 = vmax.f32 %v2097, 0.0
    %v2114 = vmax.f32 %v2098, 0.0
    %v2115 = vmax.f32 %v2099, 0.0
    %v2116 = vpack.c.bf16 %v2108, %v2100
    %v2117 = vpack.c.bf16 %v2109, %v2101
    %v2118 = vpack.c.bf16 %v2110, %v2102
    %v2119 = vpack.c.bf16 %v2111, %v2103
    %v2120 = vpack.c.bf16 %v2112, %v2104
    %v2121 = vpack.c.bf16 %v2113, %v2105
    %v2122 = vpack.c.bf16 %v2114, %v2106
    %v2123 = vpack.c.bf16 %v2115, %v2107
    %v2124 = vunpack.c.l.bf16 %v2116
    %v2125 = vunpack.c.l.bf16 %v2117
    %v2126 = vunpack.c.l.bf16 %v2118
    %v2127 = vunpack.c.l.bf16 %v2119
    %v2128 = vunpack.c.l.bf16 %v2120
    %v2129 = vunpack.c.l.bf16 %v2121
    %v2130 = vunpack.c.l.bf16 %v2122
    %v2131 = vunpack.c.l.bf16 %v2123
    %v2132 = vunpack.c.h.bf16 %v2116
    %v2133 = vunpack.c.h.bf16 %v2117
    %v2134 = vunpack.c.h.bf16 %v2118
    %v2135 = vunpack.c.h.bf16 %v2119
    %v2136 = vunpack.c.h.bf16 %v2120
    %v2137 = vunpack.c.h.bf16 %v2121
    %v2138 = vunpack.c.h.bf16 %v2122
    %v2139 = vunpack.c.h.bf16 %v2123
    %v2140 = vld [vmem:[%s2] sm:$0xff]
    %v2141 = vld [vmem:[%s2 + $0x8] sm:$0xff]
    %vm2142 = vcmp.eq.s32.totalorder %v2140, 0
    %vm2143 = vcmp.eq.s32.totalorder %v2141, 0
    %v2144 = vsel %vm2142, 1, 0
    %v2145 = vsel %vm2143, 1, 0
    %2146 = vset.pattern.permute.xlu0 0
    %2147 = vperm.xlu0 %2146, %v2144
    %v2148 = vpop.permute.xlu0 %2147
    %2149 = vset.pattern.permute.xlu0 0
    %2150 = vperm.xlu0 %2149, %v2145
    %v2151 = vpop.permute.xlu0 %2150
    %vm2152 = vcmp.eq.s32.totalorder %v2148, 1
    %vm2153 = vcmp.eq.s32.totalorder %v2151, 1
    %v2154 = vsel %vm2152, %v2124, -1e+30
    %v2155 = vsel %vm2152, %v2125, -1e+30
    %v2156 = vsel %vm2152, %v2126, -1e+30
    %v2157 = vsel %vm2152, %v2127, -1e+30
    %v2158 = vsel %vm2152, %v2128, -1e+30
    %v2159 = vsel %vm2152, %v2129, -1e+30
    %v2160 = vsel %vm2152, %v2130, -1e+30
    %v2161 = vsel %vm2152, %v2131, -1e+30
    %v2162 = vsel %vm2153, %v2132, -1e+30
    %v2163 = vsel %vm2153, %v2133, -1e+30
    %v2164 = vsel %vm2153, %v2134, -1e+30
    %v2165 = vsel %vm2153, %v2135, -1e+30
    %v2166 = vsel %vm2153, %v2136, -1e+30
    %v2167 = vsel %vm2153, %v2137, -1e+30
    %v2168 = vsel %vm2153, %v2138, -1e+30
    %v2169 = vsel %vm2153, %v2139, -1e+30
    %v2170 = vmax.f32 %v2154, %v2162
    %v2171 = vrot.slane %v2170, 4
    %v2172 = vmax.f32 %v2170, %v2171
    %v2173 = vrot.slane %v2172, 2
    %v2174 = vmax.f32 %v2172, %v2173
    %v2175 = vrot.slane %v2174, 1
    %v2176 = vmax.f32 %v2174, %v2175
    %v2177 = vmax.f32 %v2155, %v2163
    %v2178 = vrot.slane %v2177, 4
    %v2179 = vmax.f32 %v2177, %v2178
    %v2180 = vrot.slane %v2179, 2
    %v2181 = vmax.f32 %v2179, %v2180
    %v2182 = vrot.slane %v2181, 1
    %v2183 = vmax.f32 %v2181, %v2182
    %v2184 = vmax.f32 %v2156, %v2164
    %v2185 = vrot.slane %v2184, 4
    %v2186 = vmax.f32 %v2184, %v2185
    %v2187 = vrot.slane %v2186, 2
    %v2188 = vmax.f32 %v2186, %v2187
    %v2189 = vrot.slane %v2188, 1
    %v2190 = vmax.f32 %v2188, %v2189
    %v2191 = vmax.f32 %v2157, %v2165
    %v2192 = vrot.slane %v2191, 4
    %v2193 = vmax.f32 %v2191, %v2192
    %v2194 = vrot.slane %v2193, 2
    %v2195 = vmax.f32 %v2193, %v2194
    %v2196 = vrot.slane %v2195, 1
    %v2197 = vmax.f32 %v2195, %v2196
    %v2198 = vmax.f32 %v2158, %v2166
    %v2199 = vrot.slane %v2198, 4
    %v2200 = vmax.f32 %v2198, %v2199
    %v2201 = vrot.slane %v2200, 2
    %v2202 = vmax.f32 %v2200, %v2201
    %v2203 = vrot.slane %v2202, 1
    %v2204 = vmax.f32 %v2202, %v2203
    %v2205 = vmax.f32 %v2159, %v2167
    %v2206 = vrot.slane %v2205, 4
    %v2207 = vmax.f32 %v2205, %v2206
    %v2208 = vrot.slane %v2207, 2
    %v2209 = vmax.f32 %v2207, %v2208
    %v2210 = vrot.slane %v2209, 1
    %v2211 = vmax.f32 %v2209, %v2210
    %v2212 = vmax.f32 %v2160, %v2168
    %v2213 = vrot.slane %v2212, 4
    %v2214 = vmax.f32 %v2212, %v2213
    %v2215 = vrot.slane %v2214, 2
    %v2216 = vmax.f32 %v2214, %v2215
    %v2217 = vrot.slane %v2216, 1
    %v2218 = vmax.f32 %v2216, %v2217
    %v2219 = vmax.f32 %v2161, %v2169
    %v2220 = vrot.slane %v2219, 4
    %v2221 = vmax.f32 %v2219, %v2220
    %v2222 = vrot.slane %v2221, 2
    %v2223 = vmax.f32 %v2221, %v2222
    %v2224 = vrot.slane %v2223, 1
    %v2225 = vmax.f32 %v2223, %v2224
    %v2234 = vcombine.low %v2176, %v2183
    %v2235 = vcombine.low %v2190, %v2197
    %v2236 = vcombine.low %v2204, %v2211
    %v2237 = vcombine.low %v2218, %v2225
    %v2239 = vunpack.c.l.s4 1966171168
    %v2240 = vunpack.c.0.s8 %v2239
    %v2241 = vlaneseq
    %v2242 = vshrl.u32 %v2241, 7
    %v2243 = vsub.s32 %v2240, %v2242
    %v2244 = vrot.slane %v2234, %v2243
    %v2246 = vunpack.c.l.s4 1966171168
    %v2247 = vunpack.c.0.s8 %v2246
    %v2248 = vlaneseq
    %v2249 = vshrl.u32 %v2248, 7
    %v2250 = vsub.s32 %v2247, %v2249
    %v2251 = vrot.slane %v2235, %v2250
    %v2253 = vunpack.c.l.s4 1966171168
    %v2254 = vunpack.c.0.s8 %v2253
    %v2255 = vlaneseq
    %v2256 = vshrl.u32 %v2255, 7
    %v2257 = vsub.s32 %v2254, %v2256
    %v2258 = vrot.slane %v2236, %v2257
    %v2260 = vunpack.c.l.s4 1966171168
    %v2261 = vunpack.c.0.s8 %v2260
    %v2262 = vlaneseq
    %v2263 = vshrl.u32 %v2262, 7
    %v2264 = vsub.s32 %v2261, %v2263
    %v2265 = vrot.slane %v2237, %v2264
    %v2266 = vcombine.low %v2244, %v2251
    %v2267 = vcombine.low %v2258, %v2265
    %v2269 = vunpack.c.l.s4 1966171168
    %v2270 = vunpack.c.0.s8 %v2269
    %v2271 = vlaneseq
    %v2272 = vshrl.u32 %v2271, 7
    %v2273 = vsub.s32 %v2270, %v2272
    %v2274 = vrot.slane %v2266, %v2273
    %v2276 = vunpack.c.l.s4 1966171168
    %v2277 = vunpack.c.0.s8 %v2276
    %v2278 = vlaneseq
    %v2279 = vshrl.u32 %v2278, 7
    %v2280 = vsub.s32 %v2277, %v2279
    %v2281 = vrot.slane %v2267, %v2280
    %v2282 = vcombine.low %v2274, %v2281
    %2284 = vst [vmem:[#allocation2] ss:$2 sm:$0xff] %v2282
    %vm2285 = vcmp.eq.s32.totalorder %v2140, 1
    %vm2286 = vcmp.eq.s32.totalorder %v2141, 1
    %v2287 = vsel %vm2285, 1, 0
    %v2288 = vsel %vm2286, 1, 0
    %2289 = vset.pattern.permute.xlu0 0
    %2290 = vperm.xlu0 %2289, %v2287
    %v2291 = vpop.permute.xlu0 %2290
    %2292 = vset.pattern.permute.xlu0 0
    %2293 = vperm.xlu0 %2292, %v2288
    %v2294 = vpop.permute.xlu0 %2293
    %vm2295 = vcmp.eq.s32.totalorder %v2291, 1
    %vm2296 = vcmp.eq.s32.totalorder %v2294, 1
    %v2297 = vsel %vm2295, %v2124, -1e+30
    %v2298 = vsel %vm2295, %v2125, -1e+30
    %v2299 = vsel %vm2295, %v2126, -1e+30
    %v2300 = vsel %vm2295, %v2127, -1e+30
    %v2301 = vsel %vm2295, %v2128, -1e+30
    %v2302 = vsel %vm2295, %v2129, -1e+30
    %v2303 = vsel %vm2295, %v2130, -1e+30
    %v2304 = vsel %vm2295, %v2131, -1e+30
    %v2305 = vsel %vm2296, %v2132, -1e+30
    %v2306 = vsel %vm2296, %v2133, -1e+30
    %v2307 = vsel %vm2296, %v2134, -1e+30
    %v2308 = vsel %vm2296, %v2135, -1e+30
    %v2309 = vsel %vm2296, %v2136, -1e+30
    %v2310 = vsel %vm2296, %v2137, -1e+30
    %v2311 = vsel %vm2296, %v2138, -1e+30
    %v2312 = vsel %vm2296, %v2139, -1e+30
    %v2313 = vmax.f32 %v2297, %v2305
    %v2314 = vrot.slane %v2313, 4
    %v2315 = vmax.f32 %v2313, %v2314
    %v2316 = vrot.slane %v2315, 2
    %v2317 = vmax.f32 %v2315, %v2316
    %v2318 = vrot.slane %v2317, 1
    %v2319 = vmax.f32 %v2317, %v2318
    %v2320 = vmax.f32 %v2298, %v2306
    %v2321 = vrot.slane %v2320, 4
    %v2322 = vmax.f32 %v2320, %v2321
    %v2323 = vrot.slane %v2322, 2
    %v2324 = vmax.f32 %v2322, %v2323
    %v2325 = vrot.slane %v2324, 1
    %v2326 = vmax.f32 %v2324, %v2325
    %v2327 = vmax.f32 %v2299, %v2307
    %v2328 = vrot.slane %v2327, 4
    %v2329 = vmax.f32 %v2327, %v2328
    %v2330 = vrot.slane %v2329, 2
    %v2331 = vmax.f32 %v2329, %v2330
    %v2332 = vrot.slane %v2331, 1
    %v2333 = vmax.f32 %v2331, %v2332
    %v2334 = vmax.f32 %v2300, %v2308
    %v2335 = vrot.slane %v2334, 4
    %v2336 = vmax.f32 %v2334, %v2335
    %v2337 = vrot.slane %v2336, 2
    %v2338 = vmax.f32 %v2336, %v2337
    %v2339 = vrot.slane %v2338, 1
    %v2340 = vmax.f32 %v2338, %v2339
    %v2341 = vmax.f32 %v2301, %v2309
    %v2342 = vrot.slane %v2341, 4
    %v2343 = vmax.f32 %v2341, %v2342
    %v2344 = vrot.slane %v2343, 2
    %v2345 = vmax.f32 %v2343, %v2344
    %v2346 = vrot.slane %v2345, 1
    %v2347 = vmax.f32 %v2345, %v2346
    %v2348 = vmax.f32 %v2302, %v2310
    %v2349 = vrot.slane %v2348, 4
    %v2350 = vmax.f32 %v2348, %v2349
    %v2351 = vrot.slane %v2350, 2
    %v2352 = vmax.f32 %v2350, %v2351
    %v2353 = vrot.slane %v2352, 1
    %v2354 = vmax.f32 %v2352, %v2353
    %v2355 = vmax.f32 %v2303, %v2311
    %v2356 = vrot.slane %v2355, 4
    %v2357 = vmax.f32 %v2355, %v2356
    %v2358 = vrot.slane %v2357, 2
    %v2359 = vmax.f32 %v2357, %v2358
    %v2360 = vrot.slane %v2359, 1
    %v2361 = vmax.f32 %v2359, %v2360
    %v2362 = vmax.f32 %v2304, %v2312
    %v2363 = vrot.slane %v2362, 4
    %v2364 = vmax.f32 %v2362, %v2363
    %v2365 = vrot.slane %v2364, 2
    %v2366 = vmax.f32 %v2364, %v2365
    %v2367 = vrot.slane %v2366, 1
    %v2368 = vmax.f32 %v2366, %v2367
    %v2377 = vcombine.low %v2319, %v2326
    %v2378 = vcombine.low %v2333, %v2340
    %v2379 = vcombine.low %v2347, %v2354
    %v2380 = vcombine.low %v2361, %v2368
    %v2382 = vunpack.c.l.s4 1966171168
    %v2383 = vunpack.c.0.s8 %v2382
    %v2384 = vlaneseq
    %v2385 = vshrl.u32 %v2384, 7
    %v2386 = vsub.s32 %v2383, %v2385
    %v2387 = vrot.slane %v2377, %v2386
    %v2389 = vunpack.c.l.s4 1966171168
    %v2390 = vunpack.c.0.s8 %v2389
    %v2391 = vlaneseq
    %v2392 = vshrl.u32 %v2391, 7
    %v2393 = vsub.s32 %v2390, %v2392
    %v2394 = vrot.slane %v2378, %v2393
    %v2396 = vunpack.c.l.s4 1966171168
    %v2397 = vunpack.c.0.s8 %v2396
    %v2398 = vlaneseq
    %v2399 = vshrl.u32 %v2398, 7
    %v2400 = vsub.s32 %v2397, %v2399
    %v2401 = vrot.slane %v2379, %v2400
    %v2403 = vunpack.c.l.s4 1966171168
    %v2404 = vunpack.c.0.s8 %v2403
    %v2405 = vlaneseq
    %v2406 = vshrl.u32 %v2405, 7
    %v2407 = vsub.s32 %v2404, %v2406
    %v2408 = vrot.slane %v2380, %v2407
    %v2409 = vcombine.low %v2387, %v2394
    %v2410 = vcombine.low %v2401, %v2408
    %v2412 = vunpack.c.l.s4 1966171168
    %v2413 = vunpack.c.0.s8 %v2412
    %v2414 = vlaneseq
    %v2415 = vshrl.u32 %v2414, 7
    %v2416 = vsub.s32 %v2413, %v2415
    %v2417 = vrot.slane %v2409, %v2416
    %v2419 = vunpack.c.l.s4 1966171168
    %v2420 = vunpack.c.0.s8 %v2419
    %v2421 = vlaneseq
    %v2422 = vshrl.u32 %v2421, 7
    %v2423 = vsub.s32 %v2420, %v2422
    %v2424 = vrot.slane %v2410, %v2423
    %v2425 = vcombine.low %v2417, %v2424
    %s2427 = scalar_lea.vmem [#allocation2], 1
    %2428 = vst [vmem:[%s2427] ss:$2 sm:$0xff] %v2425
    %v2429 = vld [vmem:[#allocation2] sm:$0xff]
    %v2430 = vld [vmem:[#allocation2 + $0x8] sm:$0xff]
    %v2433 = vcombine.high %v2429, %v2429
    %v2435 = vunpack.c.l.s4 1983009808
    %v2436 = vunpack.c.0.s8 %v2435
    %v2437 = vlaneseq
    %v2438 = vshrl.u32 %v2437, 7
    %v2439 = vsub.s32 %v2436, %v2438
    %v2440 = vrot.slane %v2429, %v2439
    %v2442 = vunpack.c.l.s4 1983009808
    %v2443 = vunpack.c.0.s8 %v2442
    %v2444 = vlaneseq
    %v2445 = vshrl.u32 %v2444, 7
    %v2446 = vsub.s32 %v2443, %v2445
    %v2447 = vrot.slane %v2433, %v2446
    %v2448 = vcombine.high %v2440, %v2440
    %v2449 = vcombine.high %v2447, %v2447
    %v2450 = vcombine.high %v2430, %v2430
    %v2452 = vunpack.c.l.s4 1983009808
    %v2453 = vunpack.c.0.s8 %v2452
    %v2454 = vlaneseq
    %v2455 = vshrl.u32 %v2454, 7
    %v2456 = vsub.s32 %v2453, %v2455
    %v2457 = vrot.slane %v2430, %v2456
    %v2459 = vunpack.c.l.s4 1983009808
    %v2460 = vunpack.c.0.s8 %v2459
    %v2461 = vlaneseq
    %v2462 = vshrl.u32 %v2461, 7
    %v2463 = vsub.s32 %v2460, %v2462
    %v2464 = vrot.slane %v2450, %v2463
    %v2465 = vcombine.high %v2457, %v2457
    %v2466 = vcombine.high %v2464, %v2464
    %v2475 = vpack.c.bf16 %v2440, %v2440
    %v2476 = vpack.c.bf16 %v2448, %v2448
    %v2477 = vpack.c.bf16 %v2447, %v2447
    %v2478 = vpack.c.bf16 %v2449, %v2449
    %v2479 = vpack.c.bf16 %v2457, %v2457
    %v2480 = vpack.c.bf16 %v2465, %v2465
    %v2481 = vpack.c.bf16 %v2464, %v2464
    %v2482 = vpack.c.bf16 %v2466, %v2466
    %v2483 = vld [vmem:[#allocation11] sm:$0xff]
    %v2484 = vld [vmem:[#allocation11 + $0x8] sm:$0xff]
    %v2485 = vld [vmem:[#allocation11 + $0x10] sm:$0xff]
    %v2486 = vld [vmem:[#allocation11 + $0x18] sm:$0xff]
    %v2487 = vld [vmem:[#allocation11 + $0x20] sm:$0xff]
    %v2488 = vld [vmem:[#allocation11 + $0x28] sm:$0xff]
    %v2489 = vld [vmem:[#allocation11 + $0x30] sm:$0xff]
    %v2490 = vld [vmem:[#allocation11 + $0x38] sm:$0xff]
    %v2491 = vld [vmem:[#allocation11 + $0x40] sm:$0xff]
    %v2492 = vld [vmem:[#allocation11 + $0x48] sm:$0xff]
    %v2493 = vld [vmem:[#allocation11 + $0x50] sm:$0xff]
    %v2494 = vld [vmem:[#allocation11 + $0x58] sm:$0xff]
    %v2495 = vld [vmem:[#allocation11 + $0x60] sm:$0xff]
    %v2496 = vld [vmem:[#allocation11 + $0x68] sm:$0xff]
    %v2497 = vld [vmem:[#allocation11 + $0x70] sm:$0xff]
    %v2498 = vld [vmem:[#allocation11 + $0x78] sm:$0xff]
    %v2499 = vld [vmem:[#allocation11 + $0x80] sm:$0xff]
    %v2500 = vld [vmem:[#allocation11 + $0x88] sm:$0xff]
    %v2501 = vld [vmem:[#allocation11 + $0x90] sm:$0xff]
    %v2502 = vld [vmem:[#allocation11 + $0x98] sm:$0xff]
    %v2503 = vld [vmem:[#allocation11 + $0xa0] sm:$0xff]
    %v2504 = vld [vmem:[#allocation11 + $0xa8] sm:$0xff]
    %v2505 = vld [vmem:[#allocation11 + $0xb0] sm:$0xff]
    %v2506 = vld [vmem:[#allocation11 + $0xb8] sm:$0xff]
    %v2507 = vld [vmem:[#allocation11 + $0xc0] sm:$0xff]
    %v2508 = vld [vmem:[#allocation11 + $0xc8] sm:$0xff]
    %v2509 = vld [vmem:[#allocation11 + $0xd0] sm:$0xff]
    %v2510 = vld [vmem:[#allocation11 + $0xd8] sm:$0xff]
    %v2511 = vld [vmem:[#allocation11 + $0xe0] sm:$0xff]
    %v2512 = vld [vmem:[#allocation11 + $0xe8] sm:$0xff]
    %v2513 = vld [vmem:[#allocation11 + $0xf0] sm:$0xff]
    %v2514 = vld [vmem:[#allocation11 + $0xf8] sm:$0xff]
    %v2515 = vld [vmem:[#allocation11 + $0x100] sm:$0xff]
    %v2516 = vld [vmem:[#allocation11 + $0x108] sm:$0xff]
    %v2517 = vld [vmem:[#allocation11 + $0x110] sm:$0xff]
    %v2518 = vld [vmem:[#allocation11 + $0x118] sm:$0xff]
    %v2519 = vld [vmem:[#allocation11 + $0x120] sm:$0xff]
    %v2520 = vld [vmem:[#allocation11 + $0x128] sm:$0xff]
    %v2521 = vld [vmem:[#allocation11 + $0x130] sm:$0xff]
    %v2522 = vld [vmem:[#allocation11 + $0x138] sm:$0xff]
    %v2523 = vld [vmem:[#allocation11 + $0x140] sm:$0xff]
    %v2524 = vld [vmem:[#allocation11 + $0x148] sm:$0xff]
    %v2525 = vld [vmem:[#allocation11 + $0x150] sm:$0xff]
    %v2526 = vld [vmem:[#allocation11 + $0x158] sm:$0xff]
    %v2527 = vld [vmem:[#allocation11 + $0x160] sm:$0xff]
    %v2528 = vld [vmem:[#allocation11 + $0x168] sm:$0xff]
    %v2529 = vld [vmem:[#allocation11 + $0x170] sm:$0xff]
    %v2530 = vld [vmem:[#allocation11 + $0x178] sm:$0xff]
    %v2531 = vld [vmem:[#allocation11 + $0x180] sm:$0xff]
    %v2532 = vld [vmem:[#allocation11 + $0x188] sm:$0xff]
    %v2533 = vld [vmem:[#allocation11 + $0x190] sm:$0xff]
    %v2534 = vld [vmem:[#allocation11 + $0x198] sm:$0xff]
    %v2535 = vld [vmem:[#allocation11 + $0x1a0] sm:$0xff]
    %v2536 = vld [vmem:[#allocation11 + $0x1a8] sm:$0xff]
    %v2537 = vld [vmem:[#allocation11 + $0x1b0] sm:$0xff]
    %v2538 = vld [vmem:[#allocation11 + $0x1b8] sm:$0xff]
    %v2539 = vld [vmem:[#allocation11 + $0x1c0] sm:$0xff]
    %v2540 = vld [vmem:[#allocation11 + $0x1c8] sm:$0xff]
    %v2541 = vld [vmem:[#allocation11 + $0x1d0] sm:$0xff]
    %v2542 = vld [vmem:[#allocation11 + $0x1d8] sm:$0xff]
    %v2543 = vld [vmem:[#allocation11 + $0x1e0] sm:$0xff]
    %v2544 = vld [vmem:[#allocation11 + $0x1e8] sm:$0xff]
    %v2545 = vld [vmem:[#allocation11 + $0x1f0] sm:$0xff]
    %v2546 = vld [vmem:[#allocation11 + $0x1f8] sm:$0xff]
    %v2547 = vld [vmem:[#allocation11 + $0x200] sm:$0xff]
    %v2548 = vld [vmem:[#allocation11 + $0x208] sm:$0xff]
    %v2549 = vld [vmem:[#allocation11 + $0x210] sm:$0xff]
    %v2550 = vld [vmem:[#allocation11 + $0x218] sm:$0xff]
    %v2551 = vld [vmem:[#allocation11 + $0x220] sm:$0xff]
    %v2552 = vld [vmem:[#allocation11 + $0x228] sm:$0xff]
    %v2553 = vld [vmem:[#allocation11 + $0x230] sm:$0xff]
    %v2554 = vld [vmem:[#allocation11 + $0x238] sm:$0xff]
    %v2555 = vld [vmem:[#allocation11 + $0x240] sm:$0xff]
    %v2556 = vld [vmem:[#allocation11 + $0x248] sm:$0xff]
    %v2557 = vld [vmem:[#allocation11 + $0x250] sm:$0xff]
    %v2558 = vld [vmem:[#allocation11 + $0x258] sm:$0xff]
    %v2559 = vld [vmem:[#allocation11 + $0x260] sm:$0xff]
    %v2560 = vld [vmem:[#allocation11 + $0x268] sm:$0xff]
    %v2561 = vld [vmem:[#allocation11 + $0x270] sm:$0xff]
    %v2562 = vld [vmem:[#allocation11 + $0x278] sm:$0xff]
    %v2563 = vld [vmem:[#allocation11 + $0x280] sm:$0xff]
    %v2564 = vld [vmem:[#allocation11 + $0x288] sm:$0xff]
    %v2565 = vld [vmem:[#allocation11 + $0x290] sm:$0xff]
    %v2566 = vld [vmem:[#allocation11 + $0x298] sm:$0xff]
    %v2567 = vld [vmem:[#allocation11 + $0x2a0] sm:$0xff]
    %v2568 = vld [vmem:[#allocation11 + $0x2a8] sm:$0xff]
    %v2569 = vld [vmem:[#allocation11 + $0x2b0] sm:$0xff]
    %v2570 = vld [vmem:[#allocation11 + $0x2b8] sm:$0xff]
    %v2571 = vld [vmem:[#allocation11 + $0x2c0] sm:$0xff]
    %v2572 = vld [vmem:[#allocation11 + $0x2c8] sm:$0xff]
    %v2573 = vld [vmem:[#allocation11 + $0x2d0] sm:$0xff]
    %v2574 = vld [vmem:[#allocation11 + $0x2d8] sm:$0xff]
    %v2575 = vld [vmem:[#allocation11 + $0x2e0] sm:$0xff]
    %v2576 = vld [vmem:[#allocation11 + $0x2e8] sm:$0xff]
    %v2577 = vld [vmem:[#allocation11 + $0x2f0] sm:$0xff]
    %v2578 = vld [vmem:[#allocation11 + $0x2f8] sm:$0xff]
    %v2579 = vld [vmem:[#allocation11 + $0x300] sm:$0xff]
    %v2580 = vld [vmem:[#allocation11 + $0x308] sm:$0xff]
    %v2581 = vld [vmem:[#allocation11 + $0x310] sm:$0xff]
    %v2582 = vld [vmem:[#allocation11 + $0x318] sm:$0xff]
    %v2583 = vld [vmem:[#allocation11 + $0x320] sm:$0xff]
    %v2584 = vld [vmem:[#allocation11 + $0x328] sm:$0xff]
    %v2585 = vld [vmem:[#allocation11 + $0x330] sm:$0xff]
    %v2586 = vld [vmem:[#allocation11 + $0x338] sm:$0xff]
    %v2587 = vld [vmem:[#allocation11 + $0x340] sm:$0xff]
    %v2588 = vld [vmem:[#allocation11 + $0x348] sm:$0xff]
    %v2589 = vld [vmem:[#allocation11 + $0x350] sm:$0xff]
    %v2590 = vld [vmem:[#allocation11 + $0x358] sm:$0xff]
    %v2591 = vld [vmem:[#allocation11 + $0x360] sm:$0xff]
    %v2592 = vld [vmem:[#allocation11 + $0x368] sm:$0xff]
    %v2593 = vld [vmem:[#allocation11 + $0x370] sm:$0xff]
    %v2594 = vld [vmem:[#allocation11 + $0x378] sm:$0xff]
    %v2595 = vld [vmem:[#allocation11 + $0x380] sm:$0xff]
    %v2596 = vld [vmem:[#allocation11 + $0x388] sm:$0xff]
    %v2597 = vld [vmem:[#allocation11 + $0x390] sm:$0xff]
    %v2598 = vld [vmem:[#allocation11 + $0x398] sm:$0xff]
    %v2599 = vld [vmem:[#allocation11 + $0x3a0] sm:$0xff]
    %v2600 = vld [vmem:[#allocation11 + $0x3a8] sm:$0xff]
    %v2601 = vld [vmem:[#allocation11 + $0x3b0] sm:$0xff]
    %v2602 = vld [vmem:[#allocation11 + $0x3b8] sm:$0xff]
    %v2603 = vld [vmem:[#allocation11 + $0x3c0] sm:$0xff]
    %v2604 = vld [vmem:[#allocation11 + $0x3c8] sm:$0xff]
    %v2605 = vld [vmem:[#allocation11 + $0x3d0] sm:$0xff]
    %v2606 = vld [vmem:[#allocation11 + $0x3d8] sm:$0xff]
    %v2607 = vld [vmem:[#allocation11 + $0x3e0] sm:$0xff]
    %v2608 = vld [vmem:[#allocation11 + $0x3e8] sm:$0xff]
    %v2609 = vld [vmem:[#allocation11 + $0x3f0] sm:$0xff]
    %v2610 = vld [vmem:[#allocation11 + $0x3f8] sm:$0xff]
    %v2611 = vld [vmem:[#allocation11 + $0x400] sm:$0xff]
    %v2612 = vld [vmem:[#allocation11 + $0x408] sm:$0xff]
    %v2613 = vld [vmem:[#allocation11 + $0x410] sm:$0xff]
    %v2614 = vld [vmem:[#allocation11 + $0x418] sm:$0xff]
    %v2615 = vld [vmem:[#allocation11 + $0x420] sm:$0xff]
    %v2616 = vld [vmem:[#allocation11 + $0x428] sm:$0xff]
    %v2617 = vld [vmem:[#allocation11 + $0x430] sm:$0xff]
    %v2618 = vld [vmem:[#allocation11 + $0x438] sm:$0xff]
    %v2619 = vld [vmem:[#allocation11 + $0x440] sm:$0xff]
    %v2620 = vld [vmem:[#allocation11 + $0x448] sm:$0xff]
    %v2621 = vld [vmem:[#allocation11 + $0x450] sm:$0xff]
    %v2622 = vld [vmem:[#allocation11 + $0x458] sm:$0xff]
    %v2623 = vld [vmem:[#allocation11 + $0x460] sm:$0xff]
    %v2624 = vld [vmem:[#allocation11 + $0x468] sm:$0xff]
    %v2625 = vld [vmem:[#allocation11 + $0x470] sm:$0xff]
    %v2626 = vld [vmem:[#allocation11 + $0x478] sm:$0xff]
    %v2627 = vld [vmem:[#allocation11 + $0x480] sm:$0xff]
    %v2628 = vld [vmem:[#allocation11 + $0x488] sm:$0xff]
    %v2629 = vld [vmem:[#allocation11 + $0x490] sm:$0xff]
    %v2630 = vld [vmem:[#allocation11 + $0x498] sm:$0xff]
    %v2631 = vld [vmem:[#allocation11 + $0x4a0] sm:$0xff]
    %v2632 = vld [vmem:[#allocation11 + $0x4a8] sm:$0xff]
    %v2633 = vld [vmem:[#allocation11 + $0x4b0] sm:$0xff]
    %v2634 = vld [vmem:[#allocation11 + $0x4b8] sm:$0xff]
    %v2635 = vld [vmem:[#allocation11 + $0x4c0] sm:$0xff]
    %v2636 = vld [vmem:[#allocation11 + $0x4c8] sm:$0xff]
    %v2637 = vld [vmem:[#allocation11 + $0x4d0] sm:$0xff]
    %v2638 = vld [vmem:[#allocation11 + $0x4d8] sm:$0xff]
    %v2639 = vld [vmem:[#allocation11 + $0x4e0] sm:$0xff]
    %v2640 = vld [vmem:[#allocation11 + $0x4e8] sm:$0xff]
    %v2641 = vld [vmem:[#allocation11 + $0x4f0] sm:$0xff]
    %v2642 = vld [vmem:[#allocation11 + $0x4f8] sm:$0xff]
    %v2643 = vld [vmem:[#allocation11 + $0x500] sm:$0xff]
    %v2644 = vld [vmem:[#allocation11 + $0x508] sm:$0xff]
    %v2645 = vld [vmem:[#allocation11 + $0x510] sm:$0xff]
    %v2646 = vld [vmem:[#allocation11 + $0x518] sm:$0xff]
    %v2647 = vld [vmem:[#allocation11 + $0x520] sm:$0xff]
    %v2648 = vld [vmem:[#allocation11 + $0x528] sm:$0xff]
    %v2649 = vld [vmem:[#allocation11 + $0x530] sm:$0xff]
    %v2650 = vld [vmem:[#allocation11 + $0x538] sm:$0xff]
    %v2651 = vld [vmem:[#allocation11 + $0x540] sm:$0xff]
    %v2652 = vld [vmem:[#allocation11 + $0x548] sm:$0xff]
    %v2653 = vld [vmem:[#allocation11 + $0x550] sm:$0xff]
    %v2654 = vld [vmem:[#allocation11 + $0x558] sm:$0xff]
    %v2655 = vld [vmem:[#allocation11 + $0x560] sm:$0xff]
    %v2656 = vld [vmem:[#allocation11 + $0x568] sm:$0xff]
    %v2657 = vld [vmem:[#allocation11 + $0x570] sm:$0xff]
    %v2658 = vld [vmem:[#allocation11 + $0x578] sm:$0xff]
    %v2659 = vld [vmem:[#allocation11 + $0x580] sm:$0xff]
    %v2660 = vld [vmem:[#allocation11 + $0x588] sm:$0xff]
    %v2661 = vld [vmem:[#allocation11 + $0x590] sm:$0xff]
    %v2662 = vld [vmem:[#allocation11 + $0x598] sm:$0xff]
    %v2663 = vld [vmem:[#allocation11 + $0x5a0] sm:$0xff]
    %v2664 = vld [vmem:[#allocation11 + $0x5a8] sm:$0xff]
    %v2665 = vld [vmem:[#allocation11 + $0x5b0] sm:$0xff]
    %v2666 = vld [vmem:[#allocation11 + $0x5b8] sm:$0xff]
    %v2667 = vld [vmem:[#allocation11 + $0x5c0] sm:$0xff]
    %v2668 = vld [vmem:[#allocation11 + $0x5c8] sm:$0xff]
    %v2669 = vld [vmem:[#allocation11 + $0x5d0] sm:$0xff]
    %v2670 = vld [vmem:[#allocation11 + $0x5d8] sm:$0xff]
    %v2671 = vld [vmem:[#allocation11 + $0x5e0] sm:$0xff]
    %v2672 = vld [vmem:[#allocation11 + $0x5e8] sm:$0xff]
    %v2673 = vld [vmem:[#allocation11 + $0x5f0] sm:$0xff]
    %v2674 = vld [vmem:[#allocation11 + $0x5f8] sm:$0xff]
    %v2675 = vld [vmem:[#allocation11 + $0x600] sm:$0xff]
    %v2676 = vld [vmem:[#allocation11 + $0x608] sm:$0xff]
    %v2677 = vld [vmem:[#allocation11 + $0x610] sm:$0xff]
    %v2678 = vld [vmem:[#allocation11 + $0x618] sm:$0xff]
    %v2679 = vld [vmem:[#allocation11 + $0x620] sm:$0xff]
    %v2680 = vld [vmem:[#allocation11 + $0x628] sm:$0xff]
    %v2681 = vld [vmem:[#allocation11 + $0x630] sm:$0xff]
    %v2682 = vld [vmem:[#allocation11 + $0x638] sm:$0xff]
    %v2683 = vld [vmem:[#allocation11 + $0x640] sm:$0xff]
    %v2684 = vld [vmem:[#allocation11 + $0x648] sm:$0xff]
    %v2685 = vld [vmem:[#allocation11 + $0x650] sm:$0xff]
    %v2686 = vld [vmem:[#allocation11 + $0x658] sm:$0xff]
    %v2687 = vld [vmem:[#allocation11 + $0x660] sm:$0xff]
    %v2688 = vld [vmem:[#allocation11 + $0x668] sm:$0xff]
    %v2689 = vld [vmem:[#allocation11 + $0x670] sm:$0xff]
    %v2690 = vld [vmem:[#allocation11 + $0x678] sm:$0xff]
    %v2691 = vld [vmem:[#allocation11 + $0x680] sm:$0xff]
    %v2692 = vld [vmem:[#allocation11 + $0x688] sm:$0xff]
    %v2693 = vld [vmem:[#allocation11 + $0x690] sm:$0xff]
    %v2694 = vld [vmem:[#allocation11 + $0x698] sm:$0xff]
    %v2695 = vld [vmem:[#allocation11 + $0x6a0] sm:$0xff]
    %v2696 = vld [vmem:[#allocation11 + $0x6a8] sm:$0xff]
    %v2697 = vld [vmem:[#allocation11 + $0x6b0] sm:$0xff]
    %v2698 = vld [vmem:[#allocation11 + $0x6b8] sm:$0xff]
    %v2699 = vld [vmem:[#allocation11 + $0x6c0] sm:$0xff]
    %v2700 = vld [vmem:[#allocation11 + $0x6c8] sm:$0xff]
    %v2701 = vld [vmem:[#allocation11 + $0x6d0] sm:$0xff]
    %v2702 = vld [vmem:[#allocation11 + $0x6d8] sm:$0xff]
    %v2703 = vld [vmem:[#allocation11 + $0x6e0] sm:$0xff]
    %v2704 = vld [vmem:[#allocation11 + $0x6e8] sm:$0xff]
    %v2705 = vld [vmem:[#allocation11 + $0x6f0] sm:$0xff]
    %v2706 = vld [vmem:[#allocation11 + $0x6f8] sm:$0xff]
    %v2707 = vld [vmem:[#allocation11 + $0x700] sm:$0xff]
    %v2708 = vld [vmem:[#allocation11 + $0x708] sm:$0xff]
    %v2709 = vld [vmem:[#allocation11 + $0x710] sm:$0xff]
    %v2710 = vld [vmem:[#allocation11 + $0x718] sm:$0xff]
    %v2711 = vld [vmem:[#allocation11 + $0x720] sm:$0xff]
    %v2712 = vld [vmem:[#allocation11 + $0x728] sm:$0xff]
    %v2713 = vld [vmem:[#allocation11 + $0x730] sm:$0xff]
    %v2714 = vld [vmem:[#allocation11 + $0x738] sm:$0xff]
    %v2715 = vld [vmem:[#allocation11 + $0x740] sm:$0xff]
    %v2716 = vld [vmem:[#allocation11 + $0x748] sm:$0xff]
    %v2717 = vld [vmem:[#allocation11 + $0x750] sm:$0xff]
    %v2718 = vld [vmem:[#allocation11 + $0x758] sm:$0xff]
    %v2719 = vld [vmem:[#allocation11 + $0x760] sm:$0xff]
    %v2720 = vld [vmem:[#allocation11 + $0x768] sm:$0xff]
    %v2721 = vld [vmem:[#allocation11 + $0x770] sm:$0xff]
    %v2722 = vld [vmem:[#allocation11 + $0x778] sm:$0xff]
    %v2723 = vld [vmem:[#allocation11 + $0x780] sm:$0xff]
    %v2724 = vld [vmem:[#allocation11 + $0x788] sm:$0xff]
    %v2725 = vld [vmem:[#allocation11 + $0x790] sm:$0xff]
    %v2726 = vld [vmem:[#allocation11 + $0x798] sm:$0xff]
    %v2727 = vld [vmem:[#allocation11 + $0x7a0] sm:$0xff]
    %v2728 = vld [vmem:[#allocation11 + $0x7a8] sm:$0xff]
    %v2729 = vld [vmem:[#allocation11 + $0x7b0] sm:$0xff]
    %v2730 = vld [vmem:[#allocation11 + $0x7b8] sm:$0xff]
    %v2731 = vld [vmem:[#allocation11 + $0x7c0] sm:$0xff]
    %v2732 = vld [vmem:[#allocation11 + $0x7c8] sm:$0xff]
    %v2733 = vld [vmem:[#allocation11 + $0x7d0] sm:$0xff]
    %v2734 = vld [vmem:[#allocation11 + $0x7d8] sm:$0xff]
    %v2735 = vld [vmem:[#allocation11 + $0x7e0] sm:$0xff]
    %v2736 = vld [vmem:[#allocation11 + $0x7e8] sm:$0xff]
    %v2737 = vld [vmem:[#allocation11 + $0x7f0] sm:$0xff]
    %v2738 = vld [vmem:[#allocation11 + $0x7f8] sm:$0xff]
    %v2995 = vunpack.c.l.b16 %v2483
    %v2996 = vunpack.c.h.b16 %v2483
    %v2997 = vunpack.c.l.b16 %v2484
    %v2998 = vunpack.c.h.b16 %v2484
    %v2999 = vunpack.c.l.b16 %v2485
    %v3000 = vunpack.c.h.b16 %v2485
    %v3001 = vunpack.c.l.b16 %v2486
    %v3002 = vunpack.c.h.b16 %v2486
    %v3003 = vunpack.c.l.b16 %v2487
    %v3004 = vunpack.c.h.b16 %v2487
    %v3005 = vunpack.c.l.b16 %v2488
    %v3006 = vunpack.c.h.b16 %v2488
    %v3007 = vunpack.c.l.b16 %v2489
    %v3008 = vunpack.c.h.b16 %v2489
    %v3009 = vunpack.c.l.b16 %v2490
    %v3010 = vunpack.c.h.b16 %v2490
    %v3011 = vunpack.c.l.b16 %v2491
    %v3012 = vunpack.c.h.b16 %v2491
    %v3013 = vunpack.c.l.b16 %v2492
    %v3014 = vunpack.c.h.b16 %v2492
    %v3015 = vunpack.c.l.b16 %v2493
    %v3016 = vunpack.c.h.b16 %v2493
    %v3017 = vunpack.c.l.b16 %v2494
    %v3018 = vunpack.c.h.b16 %v2494
    %v3019 = vunpack.c.l.b16 %v2495
    %v3020 = vunpack.c.h.b16 %v2495
    %v3021 = vunpack.c.l.b16 %v2496
    %v3022 = vunpack.c.h.b16 %v2496
    %v3023 = vunpack.c.l.b16 %v2497
    %v3024 = vunpack.c.h.b16 %v2497
    %v3025 = vunpack.c.l.b16 %v2498
    %v3026 = vunpack.c.h.b16 %v2498
    %v3027 = vunpack.c.l.b16 %v2499
    %v3028 = vunpack.c.h.b16 %v2499
    %v3029 = vunpack.c.l.b16 %v2500
    %v3030 = vunpack.c.h.b16 %v2500
    %v3031 = vunpack.c.l.b16 %v2501
    %v3032 = vunpack.c.h.b16 %v2501
    %v3033 = vunpack.c.l.b16 %v2502
    %v3034 = vunpack.c.h.b16 %v2502
    %v3035 = vunpack.c.l.b16 %v2503
    %v3036 = vunpack.c.h.b16 %v2503
    %v3037 = vunpack.c.l.b16 %v2504
    %v3038 = vunpack.c.h.b16 %v2504
    %v3039 = vunpack.c.l.b16 %v2505
    %v3040 = vunpack.c.h.b16 %v2505
    %v3041 = vunpack.c.l.b16 %v2506
    %v3042 = vunpack.c.h.b16 %v2506
    %v3043 = vunpack.c.l.b16 %v2507
    %v3044 = vunpack.c.h.b16 %v2507
    %v3045 = vunpack.c.l.b16 %v2508
    %v3046 = vunpack.c.h.b16 %v2508
    %v3047 = vunpack.c.l.b16 %v2509
    %v3048 = vunpack.c.h.b16 %v2509
    %v3049 = vunpack.c.l.b16 %v2510
    %v3050 = vunpack.c.h.b16 %v2510
    %v3051 = vunpack.c.l.b16 %v2511
    %v3052 = vunpack.c.h.b16 %v2511
    %v3053 = vunpack.c.l.b16 %v2512
    %v3054 = vunpack.c.h.b16 %v2512
    %v3055 = vunpack.c.l.b16 %v2513
    %v3056 = vunpack.c.h.b16 %v2513
    %v3057 = vunpack.c.l.b16 %v2514
    %v3058 = vunpack.c.h.b16 %v2514
    %v3059 = vunpack.c.l.b16 %v2515
    %v3060 = vunpack.c.h.b16 %v2515
    %v3061 = vunpack.c.l.b16 %v2516
    %v3062 = vunpack.c.h.b16 %v2516
    %v3063 = vunpack.c.l.b16 %v2517
    %v3064 = vunpack.c.h.b16 %v2517
    %v3065 = vunpack.c.l.b16 %v2518
    %v3066 = vunpack.c.h.b16 %v2518
    %v3067 = vunpack.c.l.b16 %v2519
    %v3068 = vunpack.c.h.b16 %v2519
    %v3069 = vunpack.c.l.b16 %v2520
    %v3070 = vunpack.c.h.b16 %v2520
    %v3071 = vunpack.c.l.b16 %v2521
    %v3072 = vunpack.c.h.b16 %v2521
    %v3073 = vunpack.c.l.b16 %v2522
    %v3074 = vunpack.c.h.b16 %v2522
    %v3075 = vunpack.c.l.b16 %v2523
    %v3076 = vunpack.c.h.b16 %v2523
    %v3077 = vunpack.c.l.b16 %v2524
    %v3078 = vunpack.c.h.b16 %v2524
    %v3079 = vunpack.c.l.b16 %v2525
    %v3080 = vunpack.c.h.b16 %v2525
    %v3081 = vunpack.c.l.b16 %v2526
    %v3082 = vunpack.c.h.b16 %v2526
    %v3083 = vunpack.c.l.b16 %v2527
    %v3084 = vunpack.c.h.b16 %v2527
    %v3085 = vunpack.c.l.b16 %v2528
    %v3086 = vunpack.c.h.b16 %v2528
    %v3087 = vunpack.c.l.b16 %v2529
    %v3088 = vunpack.c.h.b16 %v2529
    %v3089 = vunpack.c.l.b16 %v2530
    %v3090 = vunpack.c.h.b16 %v2530
    %v3091 = vunpack.c.l.b16 %v2531
    %v3092 = vunpack.c.h.b16 %v2531
    %v3093 = vunpack.c.l.b16 %v2532
    %v3094 = vunpack.c.h.b16 %v2532
    %v3095 = vunpack.c.l.b16 %v2533
    %v3096 = vunpack.c.h.b16 %v2533
    %v3097 = vunpack.c.l.b16 %v2534
    %v3098 = vunpack.c.h.b16 %v2534
    %v3099 = vunpack.c.l.b16 %v2535
    %v3100 = vunpack.c.h.b16 %v2535
    %v3101 = vunpack.c.l.b16 %v2536
    %v3102 = vunpack.c.h.b16 %v2536
    %v3103 = vunpack.c.l.b16 %v2537
    %v3104 = vunpack.c.h.b16 %v2537
    %v3105 = vunpack.c.l.b16 %v2538
    %v3106 = vunpack.c.h.b16 %v2538
    %v3107 = vunpack.c.l.b16 %v2539
    %v3108 = vunpack.c.h.b16 %v2539
    %v3109 = vunpack.c.l.b16 %v2540
    %v3110 = vunpack.c.h.b16 %v2540
    %v3111 = vunpack.c.l.b16 %v2541
    %v3112 = vunpack.c.h.b16 %v2541
    %v3113 = vunpack.c.l.b16 %v2542
    %v3114 = vunpack.c.h.b16 %v2542
    %v3115 = vunpack.c.l.b16 %v2543
    %v3116 = vunpack.c.h.b16 %v2543
    %v3117 = vunpack.c.l.b16 %v2544
    %v3118 = vunpack.c.h.b16 %v2544
    %v3119 = vunpack.c.l.b16 %v2545
    %v3120 = vunpack.c.h.b16 %v2545
    %v3121 = vunpack.c.l.b16 %v2546
    %v3122 = vunpack.c.h.b16 %v2546
    %v3123 = vunpack.c.l.b16 %v2547
    %v3124 = vunpack.c.h.b16 %v2547
    %v3125 = vunpack.c.l.b16 %v2548
    %v3126 = vunpack.c.h.b16 %v2548
    %v3127 = vunpack.c.l.b16 %v2549
    %v3128 = vunpack.c.h.b16 %v2549
    %v3129 = vunpack.c.l.b16 %v2550
    %v3130 = vunpack.c.h.b16 %v2550
    %v3131 = vunpack.c.l.b16 %v2551
    %v3132 = vunpack.c.h.b16 %v2551
    %v3133 = vunpack.c.l.b16 %v2552
    %v3134 = vunpack.c.h.b16 %v2552
    %v3135 = vunpack.c.l.b16 %v2553
    %v3136 = vunpack.c.h.b16 %v2553
    %v3137 = vunpack.c.l.b16 %v2554
    %v3138 = vunpack.c.h.b16 %v2554
    %v3139 = vunpack.c.l.b16 %v2555
    %v3140 = vunpack.c.h.b16 %v2555
    %v3141 = vunpack.c.l.b16 %v2556
    %v3142 = vunpack.c.h.b16 %v2556
    %v3143 = vunpack.c.l.b16 %v2557
    %v3144 = vunpack.c.h.b16 %v2557
    %v3145 = vunpack.c.l.b16 %v2558
    %v3146 = vunpack.c.h.b16 %v2558
    %v3147 = vunpack.c.l.b16 %v2559
    %v3148 = vunpack.c.h.b16 %v2559
    %v3149 = vunpack.c.l.b16 %v2560
    %v3150 = vunpack.c.h.b16 %v2560
    %v3151 = vunpack.c.l.b16 %v2561
    %v3152 = vunpack.c.h.b16 %v2561
    %v3153 = vunpack.c.l.b16 %v2562
    %v3154 = vunpack.c.h.b16 %v2562
    %v3155 = vunpack.c.l.b16 %v2563
    %v3156 = vunpack.c.h.b16 %v2563
    %v3157 = vunpack.c.l.b16 %v2564
    %v3158 = vunpack.c.h.b16 %v2564
    %v3159 = vunpack.c.l.b16 %v2565
    %v3160 = vunpack.c.h.b16 %v2565
    %v3161 = vunpack.c.l.b16 %v2566
    %v3162 = vunpack.c.h.b16 %v2566
    %v3163 = vunpack.c.l.b16 %v2567
    %v3164 = vunpack.c.h.b16 %v2567
    %v3165 = vunpack.c.l.b16 %v2568
    %v3166 = vunpack.c.h.b16 %v2568
    %v3167 = vunpack.c.l.b16 %v2569
    %v3168 = vunpack.c.h.b16 %v2569
    %v3169 = vunpack.c.l.b16 %v2570
    %v3170 = vunpack.c.h.b16 %v2570
    %v3171 = vunpack.c.l.b16 %v2571
    %v3172 = vunpack.c.h.b16 %v2571
    %v3173 = vunpack.c.l.b16 %v2572
    %v3174 = vunpack.c.h.b16 %v2572
    %v3175 = vunpack.c.l.b16 %v2573
    %v3176 = vunpack.c.h.b16 %v2573
    %v3177 = vunpack.c.l.b16 %v2574
    %v3178 = vunpack.c.h.b16 %v2574
    %v3179 = vunpack.c.l.b16 %v2575
    %v3180 = vunpack.c.h.b16 %v2575
    %v3181 = vunpack.c.l.b16 %v2576
    %v3182 = vunpack.c.h.b16 %v2576
    %v3183 = vunpack.c.l.b16 %v2577
    %v3184 = vunpack.c.h.b16 %v2577
    %v3185 = vunpack.c.l.b16 %v2578
    %v3186 = vunpack.c.h.b16 %v2578
    %v3187 = vunpack.c.l.b16 %v2579
    %v3188 = vunpack.c.h.b16 %v2579
    %v3189 = vunpack.c.l.b16 %v2580
    %v3190 = vunpack.c.h.b16 %v2580
    %v3191 = vunpack.c.l.b16 %v2581
    %v3192 = vunpack.c.h.b16 %v2581
    %v3193 = vunpack.c.l.b16 %v2582
    %v3194 = vunpack.c.h.b16 %v2582
    %v3195 = vunpack.c.l.b16 %v2583
    %v3196 = vunpack.c.h.b16 %v2583
    %v3197 = vunpack.c.l.b16 %v2584
    %v3198 = vunpack.c.h.b16 %v2584
    %v3199 = vunpack.c.l.b16 %v2585
    %v3200 = vunpack.c.h.b16 %v2585
    %v3201 = vunpack.c.l.b16 %v2586
    %v3202 = vunpack.c.h.b16 %v2586
    %v3203 = vunpack.c.l.b16 %v2587
    %v3204 = vunpack.c.h.b16 %v2587
    %v3205 = vunpack.c.l.b16 %v2588
    %v3206 = vunpack.c.h.b16 %v2588
    %v3207 = vunpack.c.l.b16 %v2589
    %v3208 = vunpack.c.h.b16 %v2589
    %v3209 = vunpack.c.l.b16 %v2590
    %v3210 = vunpack.c.h.b16 %v2590
    %v3211 = vunpack.c.l.b16 %v2591
    %v3212 = vunpack.c.h.b16 %v2591
    %v3213 = vunpack.c.l.b16 %v2592
    %v3214 = vunpack.c.h.b16 %v2592
    %v3215 = vunpack.c.l.b16 %v2593
    %v3216 = vunpack.c.h.b16 %v2593
    %v3217 = vunpack.c.l.b16 %v2594
    %v3218 = vunpack.c.h.b16 %v2594
    %v3219 = vunpack.c.l.b16 %v2595
    %v3220 = vunpack.c.h.b16 %v2595
    %v3221 = vunpack.c.l.b16 %v2596
    %v3222 = vunpack.c.h.b16 %v2596
    %v3223 = vunpack.c.l.b16 %v2597
    %v3224 = vunpack.c.h.b16 %v2597
    %v3225 = vunpack.c.l.b16 %v2598
    %v3226 = vunpack.c.h.b16 %v2598
    %v3227 = vunpack.c.l.b16 %v2599
    %v3228 = vunpack.c.h.b16 %v2599
    %v3229 = vunpack.c.l.b16 %v2600
    %v3230 = vunpack.c.h.b16 %v2600
    %v3231 = vunpack.c.l.b16 %v2601
    %v3232 = vunpack.c.h.b16 %v2601
    %v3233 = vunpack.c.l.b16 %v2602
    %v3234 = vunpack.c.h.b16 %v2602
    %v3235 = vunpack.c.l.b16 %v2603
    %v3236 = vunpack.c.h.b16 %v2603
    %v3237 = vunpack.c.l.b16 %v2604
    %v3238 = vunpack.c.h.b16 %v2604
    %v3239 = vunpack.c.l.b16 %v2605
    %v3240 = vunpack.c.h.b16 %v2605
    %v3241 = vunpack.c.l.b16 %v2606
    %v3242 = vunpack.c.h.b16 %v2606
    %v3243 = vunpack.c.l.b16 %v2607
    %v3244 = vunpack.c.h.b16 %v2607
    %v3245 = vunpack.c.l.b16 %v2608
    %v3246 = vunpack.c.h.b16 %v2608
    %v3247 = vunpack.c.l.b16 %v2609
    %v3248 = vunpack.c.h.b16 %v2609
    %v3249 = vunpack.c.l.b16 %v2610
    %v3250 = vunpack.c.h.b16 %v2610
    %v3251 = vunpack.c.l.b16 %v2611
    %v3252 = vunpack.c.h.b16 %v2611
    %v3253 = vunpack.c.l.b16 %v2612
    %v3254 = vunpack.c.h.b16 %v2612
    %v3255 = vunpack.c.l.b16 %v2613
    %v3256 = vunpack.c.h.b16 %v2613
    %v3257 = vunpack.c.l.b16 %v2614
    %v3258 = vunpack.c.h.b16 %v2614
    %v3259 = vunpack.c.l.b16 %v2615
    %v3260 = vunpack.c.h.b16 %v2615
    %v3261 = vunpack.c.l.b16 %v2616
    %v3262 = vunpack.c.h.b16 %v2616
    %v3263 = vunpack.c.l.b16 %v2617
    %v3264 = vunpack.c.h.b16 %v2617
    %v3265 = vunpack.c.l.b16 %v2618
    %v3266 = vunpack.c.h.b16 %v2618
    %v3267 = vunpack.c.l.b16 %v2619
    %v3268 = vunpack.c.h.b16 %v2619
    %v3269 = vunpack.c.l.b16 %v2620
    %v3270 = vunpack.c.h.b16 %v2620
    %v3271 = vunpack.c.l.b16 %v2621
    %v3272 = vunpack.c.h.b16 %v2621
    %v3273 = vunpack.c.l.b16 %v2622
    %v3274 = vunpack.c.h.b16 %v2622
    %v3275 = vunpack.c.l.b16 %v2623
    %v3276 = vunpack.c.h.b16 %v2623
    %v3277 = vunpack.c.l.b16 %v2624
    %v3278 = vunpack.c.h.b16 %v2624
    %v3279 = vunpack.c.l.b16 %v2625
    %v3280 = vunpack.c.h.b16 %v2625
    %v3281 = vunpack.c.l.b16 %v2626
    %v3282 = vunpack.c.h.b16 %v2626
    %v3283 = vunpack.c.l.b16 %v2627
    %v3284 = vunpack.c.h.b16 %v2627
    %v3285 = vunpack.c.l.b16 %v2628
    %v3286 = vunpack.c.h.b16 %v2628
    %v3287 = vunpack.c.l.b16 %v2629
    %v3288 = vunpack.c.h.b16 %v2629
    %v3289 = vunpack.c.l.b16 %v2630
    %v3290 = vunpack.c.h.b16 %v2630
    %v3291 = vunpack.c.l.b16 %v2631
    %v3292 = vunpack.c.h.b16 %v2631
    %v3293 = vunpack.c.l.b16 %v2632
    %v3294 = vunpack.c.h.b16 %v2632
    %v3295 = vunpack.c.l.b16 %v2633
    %v3296 = vunpack.c.h.b16 %v2633
    %v3297 = vunpack.c.l.b16 %v2634
    %v3298 = vunpack.c.h.b16 %v2634
    %v3299 = vunpack.c.l.b16 %v2635
    %v3300 = vunpack.c.h.b16 %v2635
    %v3301 = vunpack.c.l.b16 %v2636
    %v3302 = vunpack.c.h.b16 %v2636
    %v3303 = vunpack.c.l.b16 %v2637
    %v3304 = vunpack.c.h.b16 %v2637
    %v3305 = vunpack.c.l.b16 %v2638
    %v3306 = vunpack.c.h.b16 %v2638
    %v3307 = vunpack.c.l.b16 %v2639
    %v3308 = vunpack.c.h.b16 %v2639
    %v3309 = vunpack.c.l.b16 %v2640
    %v3310 = vunpack.c.h.b16 %v2640
    %v3311 = vunpack.c.l.b16 %v2641
    %v3312 = vunpack.c.h.b16 %v2641
    %v3313 = vunpack.c.l.b16 %v2642
    %v3314 = vunpack.c.h.b16 %v2642
    %v3315 = vunpack.c.l.b16 %v2643
    %v3316 = vunpack.c.h.b16 %v2643
    %v3317 = vunpack.c.l.b16 %v2644
    %v3318 = vunpack.c.h.b16 %v2644
    %v3319 = vunpack.c.l.b16 %v2645
    %v3320 = vunpack.c.h.b16 %v2645
    %v3321 = vunpack.c.l.b16 %v2646
    %v3322 = vunpack.c.h.b16 %v2646
    %v3323 = vunpack.c.l.b16 %v2647
    %v3324 = vunpack.c.h.b16 %v2647
    %v3325 = vunpack.c.l.b16 %v2648
    %v3326 = vunpack.c.h.b16 %v2648
    %v3327 = vunpack.c.l.b16 %v2649
    %v3328 = vunpack.c.h.b16 %v2649
    %v3329 = vunpack.c.l.b16 %v2650
    %v3330 = vunpack.c.h.b16 %v2650
    %v3331 = vunpack.c.l.b16 %v2651
    %v3332 = vunpack.c.h.b16 %v2651
    %v3333 = vunpack.c.l.b16 %v2652
    %v3334 = vunpack.c.h.b16 %v2652
    %v3335 = vunpack.c.l.b16 %v2653
    %v3336 = vunpack.c.h.b16 %v2653
    %v3337 = vunpack.c.l.b16 %v2654
    %v3338 = vunpack.c.h.b16 %v2654
    %v3339 = vunpack.c.l.b16 %v2655
    %v3340 = vunpack.c.h.b16 %v2655
    %v3341 = vunpack.c.l.b16 %v2656
    %v3342 = vunpack.c.h.b16 %v2656
    %v3343 = vunpack.c.l.b16 %v2657
    %v3344 = vunpack.c.h.b16 %v2657
    %v3345 = vunpack.c.l.b16 %v2658
    %v3346 = vunpack.c.h.b16 %v2658
    %v3347 = vunpack.c.l.b16 %v2659
    %v3348 = vunpack.c.h.b16 %v2659
    %v3349 = vunpack.c.l.b16 %v2660
    %v3350 = vunpack.c.h.b16 %v2660
    %v3351 = vunpack.c.l.b16 %v2661
    %v3352 = vunpack.c.h.b16 %v2661
    %v3353 = vunpack.c.l.b16 %v2662
    %v3354 = vunpack.c.h.b16 %v2662
    %v3355 = vunpack.c.l.b16 %v2663
    %v3356 = vunpack.c.h.b16 %v2663
    %v3357 = vunpack.c.l.b16 %v2664
    %v3358 = vunpack.c.h.b16 %v2664
    %v3359 = vunpack.c.l.b16 %v2665
    %v3360 = vunpack.c.h.b16 %v2665
    %v3361 = vunpack.c.l.b16 %v2666
    %v3362 = vunpack.c.h.b16 %v2666
    %v3363 = vunpack.c.l.b16 %v2667
    %v3364 = vunpack.c.h.b16 %v2667
    %v3365 = vunpack.c.l.b16 %v2668
    %v3366 = vunpack.c.h.b16 %v2668
    %v3367 = vunpack.c.l.b16 %v2669
    %v3368 = vunpack.c.h.b16 %v2669
    %v3369 = vunpack.c.l.b16 %v2670
    %v3370 = vunpack.c.h.b16 %v2670
    %v3371 = vunpack.c.l.b16 %v2671
    %v3372 = vunpack.c.h.b16 %v2671
    %v3373 = vunpack.c.l.b16 %v2672
    %v3374 = vunpack.c.h.b16 %v2672
    %v3375 = vunpack.c.l.b16 %v2673
    %v3376 = vunpack.c.h.b16 %v2673
    %v3377 = vunpack.c.l.b16 %v2674
    %v3378 = vunpack.c.h.b16 %v2674
    %v3379 = vunpack.c.l.b16 %v2675
    %v3380 = vunpack.c.h.b16 %v2675
    %v3381 = vunpack.c.l.b16 %v2676
    %v3382 = vunpack.c.h.b16 %v2676
    %v3383 = vunpack.c.l.b16 %v2677
    %v3384 = vunpack.c.h.b16 %v2677
    %v3385 = vunpack.c.l.b16 %v2678
    %v3386 = vunpack.c.h.b16 %v2678
    %v3387 = vunpack.c.l.b16 %v2679
    %v3388 = vunpack.c.h.b16 %v2679
    %v3389 = vunpack.c.l.b16 %v2680
    %v3390 = vunpack.c.h.b16 %v2680
    %v3391 = vunpack.c.l.b16 %v2681
    %v3392 = vunpack.c.h.b16 %v2681
    %v3393 = vunpack.c.l.b16 %v2682
    %v3394 = vunpack.c.h.b16 %v2682
    %v3395 = vunpack.c.l.b16 %v2683
    %v3396 = vunpack.c.h.b16 %v2683
    %v3397 = vunpack.c.l.b16 %v2684
    %v3398 = vunpack.c.h.b16 %v2684
    %v3399 = vunpack.c.l.b16 %v2685
    %v3400 = vunpack.c.h.b16 %v2685
    %v3401 = vunpack.c.l.b16 %v2686
    %v3402 = vunpack.c.h.b16 %v2686
    %v3403 = vunpack.c.l.b16 %v2687
    %v3404 = vunpack.c.h.b16 %v2687
    %v3405 = vunpack.c.l.b16 %v2688
    %v3406 = vunpack.c.h.b16 %v2688
    %v3407 = vunpack.c.l.b16 %v2689
    %v3408 = vunpack.c.h.b16 %v2689
    %v3409 = vunpack.c.l.b16 %v2690
    %v3410 = vunpack.c.h.b16 %v2690
    %v3411 = vunpack.c.l.b16 %v2691
    %v3412 = vunpack.c.h.b16 %v2691
    %v3413 = vunpack.c.l.b16 %v2692
    %v3414 = vunpack.c.h.b16 %v2692
    %v3415 = vunpack.c.l.b16 %v2693
    %v3416 = vunpack.c.h.b16 %v2693
    %v3417 = vunpack.c.l.b16 %v2694
    %v3418 = vunpack.c.h.b16 %v2694
    %v3419 = vunpack.c.l.b16 %v2695
    %v3420 = vunpack.c.h.b16 %v2695
    %v3421 = vunpack.c.l.b16 %v2696
    %v3422 = vunpack.c.h.b16 %v2696
    %v3423 = vunpack.c.l.b16 %v2697
    %v3424 = vunpack.c.h.b16 %v2697
    %v3425 = vunpack.c.l.b16 %v2698
    %v3426 = vunpack.c.h.b16 %v2698
    %v3427 = vunpack.c.l.b16 %v2699
    %v3428 = vunpack.c.h.b16 %v2699
    %v3429 = vunpack.c.l.b16 %v2700
    %v3430 = vunpack.c.h.b16 %v2700
    %v3431 = vunpack.c.l.b16 %v2701
    %v3432 = vunpack.c.h.b16 %v2701
    %v3433 = vunpack.c.l.b16 %v2702
    %v3434 = vunpack.c.h.b16 %v2702
    %v3435 = vunpack.c.l.b16 %v2703
    %v3436 = vunpack.c.h.b16 %v2703
    %v3437 = vunpack.c.l.b16 %v2704
    %v3438 = vunpack.c.h.b16 %v2704
    %v3439 = vunpack.c.l.b16 %v2705
    %v3440 = vunpack.c.h.b16 %v2705
    %v3441 = vunpack.c.l.b16 %v2706
    %v3442 = vunpack.c.h.b16 %v2706
    %v3443 = vunpack.c.l.b16 %v2707
    %v3444 = vunpack.c.h.b16 %v2707
    %v3445 = vunpack.c.l.b16 %v2708
    %v3446 = vunpack.c.h.b16 %v2708
    %v3447 = vunpack.c.l.b16 %v2709
    %v3448 = vunpack.c.h.b16 %v2709
    %v3449 = vunpack.c.l.b16 %v2710
    %v3450 = vunpack.c.h.b16 %v2710
    %v3451 = vunpack.c.l.b16 %v2711
    %v3452 = vunpack.c.h.b16 %v2711
    %v3453 = vunpack.c.l.b16 %v2712
    %v3454 = vunpack.c.h.b16 %v2712
    %v3455 = vunpack.c.l.b16 %v2713
    %v3456 = vunpack.c.h.b16 %v2713
    %v3457 = vunpack.c.l.b16 %v2714
    %v3458 = vunpack.c.h.b16 %v2714
    %v3459 = vunpack.c.l.b16 %v2715
    %v3460 = vunpack.c.h.b16 %v2715
    %v3461 = vunpack.c.l.b16 %v2716
    %v3462 = vunpack.c.h.b16 %v2716
    %v3463 = vunpack.c.l.b16 %v2717
    %v3464 = vunpack.c.h.b16 %v2717
    %v3465 = vunpack.c.l.b16 %v2718
    %v3466 = vunpack.c.h.b16 %v2718
    %v3467 = vunpack.c.l.b16 %v2719
    %v3468 = vunpack.c.h.b16 %v2719
    %v3469 = vunpack.c.l.b16 %v2720
    %v3470 = vunpack.c.h.b16 %v2720
    %v3471 = vunpack.c.l.b16 %v2721
    %v3472 = vunpack.c.h.b16 %v2721
    %v3473 = vunpack.c.l.b16 %v2722
    %v3474 = vunpack.c.h.b16 %v2722
    %v3475 = vunpack.c.l.b16 %v2723
    %v3476 = vunpack.c.h.b16 %v2723
    %v3477 = vunpack.c.l.b16 %v2724
    %v3478 = vunpack.c.h.b16 %v2724
    %v3479 = vunpack.c.l.b16 %v2725
    %v3480 = vunpack.c.h.b16 %v2725
    %v3481 = vunpack.c.l.b16 %v2726
    %v3482 = vunpack.c.h.b16 %v2726
    %v3483 = vunpack.c.l.b16 %v2727
    %v3484 = vunpack.c.h.b16 %v2727
    %v3485 = vunpack.c.l.b16 %v2728
    %v3486 = vunpack.c.h.b16 %v2728
    %v3487 = vunpack.c.l.b16 %v2729
    %v3488 = vunpack.c.h.b16 %v2729
    %v3489 = vunpack.c.l.b16 %v2730
    %v3490 = vunpack.c.h.b16 %v2730
    %v3491 = vunpack.c.l.b16 %v2731
    %v3492 = vunpack.c.h.b16 %v2731
    %v3493 = vunpack.c.l.b16 %v2732
    %v3494 = vunpack.c.h.b16 %v2732
    %v3495 = vunpack.c.l.b16 %v2733
    %v3496 = vunpack.c.h.b16 %v2733
    %v3497 = vunpack.c.l.b16 %v2734
    %v3498 = vunpack.c.h.b16 %v2734
    %v3499 = vunpack.c.l.b16 %v2735
    %v3500 = vunpack.c.h.b16 %v2735
    %v3501 = vunpack.c.l.b16 %v2736
    %v3502 = vunpack.c.h.b16 %v2736
    %v3503 = vunpack.c.l.b16 %v2737
    %v3504 = vunpack.c.h.b16 %v2737
    %v3505 = vunpack.c.l.b16 %v2738
    %v3506 = vunpack.c.h.b16 %v2738
    %v3507 = vpack.c.b16 %v2999, %v2995
    %v3508 = vpack.c.b16 %v3000, %v2996
    %v3509 = vpack.c.b16 %v3001, %v2997
    %v3510 = vpack.c.b16 %v3002, %v2998
    %v3511 = vpack.c.b16 %v3007, %v3003
    %v3512 = vpack.c.b16 %v3008, %v3004
    %v3513 = vpack.c.b16 %v3009, %v3005
    %v3514 = vpack.c.b16 %v3010, %v3006
    %v3515 = vpack.c.b16 %v3015, %v3011
    %v3516 = vpack.c.b16 %v3016, %v3012
    %v3517 = vpack.c.b16 %v3017, %v3013
    %v3518 = vpack.c.b16 %v3018, %v3014
    %v3519 = vpack.c.b16 %v3023, %v3019
    %v3520 = vpack.c.b16 %v3024, %v3020
    %v3521 = vpack.c.b16 %v3025, %v3021
    %v3522 = vpack.c.b16 %v3026, %v3022
    %v3523 = vpack.c.b16 %v3031, %v3027
    %v3524 = vpack.c.b16 %v3032, %v3028
    %v3525 = vpack.c.b16 %v3033, %v3029
    %v3526 = vpack.c.b16 %v3034, %v3030
    %v3527 = vpack.c.b16 %v3039, %v3035
    %v3528 = vpack.c.b16 %v3040, %v3036
    %v3529 = vpack.c.b16 %v3041, %v3037
    %v3530 = vpack.c.b16 %v3042, %v3038
    %v3531 = vpack.c.b16 %v3047, %v3043
    %v3532 = vpack.c.b16 %v3048, %v3044
    %v3533 = vpack.c.b16 %v3049, %v3045
    %v3534 = vpack.c.b16 %v3050, %v3046
    %v3535 = vpack.c.b16 %v3055, %v3051
    %v3536 = vpack.c.b16 %v3056, %v3052
    %v3537 = vpack.c.b16 %v3057, %v3053
    %v3538 = vpack.c.b16 %v3058, %v3054
    %v3539 = vpack.c.b16 %v3063, %v3059
    %v3540 = vpack.c.b16 %v3064, %v3060
    %v3541 = vpack.c.b16 %v3065, %v3061
    %v3542 = vpack.c.b16 %v3066, %v3062
    %v3543 = vpack.c.b16 %v3071, %v3067
    %v3544 = vpack.c.b16 %v3072, %v3068
    %v3545 = vpack.c.b16 %v3073, %v3069
    %v3546 = vpack.c.b16 %v3074, %v3070
    %v3547 = vpack.c.b16 %v3079, %v3075
    %v3548 = vpack.c.b16 %v3080, %v3076
    %v3549 = vpack.c.b16 %v3081, %v3077
    %v3550 = vpack.c.b16 %v3082, %v3078
    %v3551 = vpack.c.b16 %v3087, %v3083
    %v3552 = vpack.c.b16 %v3088, %v3084
    %v3553 = vpack.c.b16 %v3089, %v3085
    %v3554 = vpack.c.b16 %v3090, %v3086
    %v3555 = vpack.c.b16 %v3095, %v3091
    %v3556 = vpack.c.b16 %v3096, %v3092
    %v3557 = vpack.c.b16 %v3097, %v3093
    %v3558 = vpack.c.b16 %v3098, %v3094
    %v3559 = vpack.c.b16 %v3103, %v3099
    %v3560 = vpack.c.b16 %v3104, %v3100
    %v3561 = vpack.c.b16 %v3105, %v3101
    %v3562 = vpack.c.b16 %v3106, %v3102
    %v3563 = vpack.c.b16 %v3111, %v3107
    %v3564 = vpack.c.b16 %v3112, %v3108
    %v3565 = vpack.c.b16 %v3113, %v3109
    %v3566 = vpack.c.b16 %v3114, %v3110
    %v3567 = vpack.c.b16 %v3119, %v3115
    %v3568 = vpack.c.b16 %v3120, %v3116
    %v3569 = vpack.c.b16 %v3121, %v3117
    %v3570 = vpack.c.b16 %v3122, %v3118
    %v3571 = vpack.c.b16 %v3127, %v3123
    %v3572 = vpack.c.b16 %v3128, %v3124
    %v3573 = vpack.c.b16 %v3129, %v3125
    %v3574 = vpack.c.b16 %v3130, %v3126
    %v3575 = vpack.c.b16 %v3135, %v3131
    %v3576 = vpack.c.b16 %v3136, %v3132
    %v3577 = vpack.c.b16 %v3137, %v3133
    %v3578 = vpack.c.b16 %v3138, %v3134
    %v3579 = vpack.c.b16 %v3143, %v3139
    %v3580 = vpack.c.b16 %v3144, %v3140
    %v3581 = vpack.c.b16 %v3145, %v3141
    %v3582 = vpack.c.b16 %v3146, %v3142
    %v3583 = vpack.c.b16 %v3151, %v3147
    %v3584 = vpack.c.b16 %v3152, %v3148
    %v3585 = vpack.c.b16 %v3153, %v3149
    %v3586 = vpack.c.b16 %v3154, %v3150
    %v3587 = vpack.c.b16 %v3159, %v3155
    %v3588 = vpack.c.b16 %v3160, %v3156
    %v3589 = vpack.c.b16 %v3161, %v3157
    %v3590 = vpack.c.b16 %v3162, %v3158
    %v3591 = vpack.c.b16 %v3167, %v3163
    %v3592 = vpack.c.b16 %v3168, %v3164
    %v3593 = vpack.c.b16 %v3169, %v3165
    %v3594 = vpack.c.b16 %v3170, %v3166
    %v3595 = vpack.c.b16 %v3175, %v3171
    %v3596 = vpack.c.b16 %v3176, %v3172
    %v3597 = vpack.c.b16 %v3177, %v3173
    %v3598 = vpack.c.b16 %v3178, %v3174
    %v3599 = vpack.c.b16 %v3183, %v3179
    %v3600 = vpack.c.b16 %v3184, %v3180
    %v3601 = vpack.c.b16 %v3185, %v3181
    %v3602 = vpack.c.b16 %v3186, %v3182
    %v3603 = vpack.c.b16 %v3191, %v3187
    %v3604 = vpack.c.b16 %v3192, %v3188
    %v3605 = vpack.c.b16 %v3193, %v3189
    %v3606 = vpack.c.b16 %v3194, %v3190
    %v3607 = vpack.c.b16 %v3199, %v3195
    %v3608 = vpack.c.b16 %v3200, %v3196
    %v3609 = vpack.c.b16 %v3201, %v3197
    %v3610 = vpack.c.b16 %v3202, %v3198
    %v3611 = vpack.c.b16 %v3207, %v3203
    %v3612 = vpack.c.b16 %v3208, %v3204
    %v3613 = vpack.c.b16 %v3209, %v3205
    %v3614 = vpack.c.b16 %v3210, %v3206
    %v3615 = vpack.c.b16 %v3215, %v3211
    %v3616 = vpack.c.b16 %v3216, %v3212
    %v3617 = vpack.c.b16 %v3217, %v3213
    %v3618 = vpack.c.b16 %v3218, %v3214
    %v3619 = vpack.c.b16 %v3223, %v3219
    %v3620 = vpack.c.b16 %v3224, %v3220
    %v3621 = vpack.c.b16 %v3225, %v3221
    %v3622 = vpack.c.b16 %v3226, %v3222
    %v3623 = vpack.c.b16 %v3231, %v3227
    %v3624 = vpack.c.b16 %v3232, %v3228
    %v3625 = vpack.c.b16 %v3233, %v3229
    %v3626 = vpack.c.b16 %v3234, %v3230
    %v3627 = vpack.c.b16 %v3239, %v3235
    %v3628 = vpack.c.b16 %v3240, %v3236
    %v3629 = vpack.c.b16 %v3241, %v3237
    %v3630 = vpack.c.b16 %v3242, %v3238
    %v3631 = vpack.c.b16 %v3247, %v3243
    %v3632 = vpack.c.b16 %v3248, %v3244
    %v3633 = vpack.c.b16 %v3249, %v3245
    %v3634 = vpack.c.b16 %v3250, %v3246
    %v3635 = vpack.c.b16 %v3255, %v3251
    %v3636 = vpack.c.b16 %v3256, %v3252
    %v3637 = vpack.c.b16 %v3257, %v3253
    %v3638 = vpack.c.b16 %v3258, %v3254
    %v3639 = vpack.c.b16 %v3263, %v3259
    %v3640 = vpack.c.b16 %v3264, %v3260
    %v3641 = vpack.c.b16 %v3265, %v3261
    %v3642 = vpack.c.b16 %v3266, %v3262
    %v3643 = vpack.c.b16 %v3271, %v3267
    %v3644 = vpack.c.b16 %v3272, %v3268
    %v3645 = vpack.c.b16 %v3273, %v3269
    %v3646 = vpack.c.b16 %v3274, %v3270
    %v3647 = vpack.c.b16 %v3279, %v3275
    %v3648 = vpack.c.b16 %v3280, %v3276
    %v3649 = vpack.c.b16 %v3281, %v3277
    %v3650 = vpack.c.b16 %v3282, %v3278
    %v3651 = vpack.c.b16 %v3287, %v3283
    %v3652 = vpack.c.b16 %v3288, %v3284
    %v3653 = vpack.c.b16 %v3289, %v3285
    %v3654 = vpack.c.b16 %v3290, %v3286
    %v3655 = vpack.c.b16 %v3295, %v3291
    %v3656 = vpack.c.b16 %v3296, %v3292
    %v3657 = vpack.c.b16 %v3297, %v3293
    %v3658 = vpack.c.b16 %v3298, %v3294
    %v3659 = vpack.c.b16 %v3303, %v3299
    %v3660 = vpack.c.b16 %v3304, %v3300
    %v3661 = vpack.c.b16 %v3305, %v3301
    %v3662 = vpack.c.b16 %v3306, %v3302
    %v3663 = vpack.c.b16 %v3311, %v3307
    %v3664 = vpack.c.b16 %v3312, %v3308
    %v3665 = vpack.c.b16 %v3313, %v3309
    %v3666 = vpack.c.b16 %v3314, %v3310
    %v3667 = vpack.c.b16 %v3319, %v3315
    %v3668 = vpack.c.b16 %v3320, %v3316
    %v3669 = vpack.c.b16 %v3321, %v3317
    %v3670 = vpack.c.b16 %v3322, %v3318
    %v3671 = vpack.c.b16 %v3327, %v3323
    %v3672 = vpack.c.b16 %v3328, %v3324
    %v3673 = vpack.c.b16 %v3329, %v3325
    %v3674 = vpack.c.b16 %v3330, %v3326
    %v3675 = vpack.c.b16 %v3335, %v3331
    %v3676 = vpack.c.b16 %v3336, %v3332
    %v3677 = vpack.c.b16 %v3337, %v3333
    %v3678 = vpack.c.b16 %v3338, %v3334
    %v3679 = vpack.c.b16 %v3343, %v3339
    %v3680 = vpack.c.b16 %v3344, %v3340
    %v3681 = vpack.c.b16 %v3345, %v3341
    %v3682 = vpack.c.b16 %v3346, %v3342
    %v3683 = vpack.c.b16 %v3351, %v3347
    %v3684 = vpack.c.b16 %v3352, %v3348
    %v3685 = vpack.c.b16 %v3353, %v3349
    %v3686 = vpack.c.b16 %v3354, %v3350
    %v3687 = vpack.c.b16 %v3359, %v3355
    %v3688 = vpack.c.b16 %v3360, %v3356
    %v3689 = vpack.c.b16 %v3361, %v3357
    %v3690 = vpack.c.b16 %v3362, %v3358
    %v3691 = vpack.c.b16 %v3367, %v3363
    %v3692 = vpack.c.b16 %v3368, %v3364
    %v3693 = vpack.c.b16 %v3369, %v3365
    %v3694 = vpack.c.b16 %v3370, %v3366
    %v3695 = vpack.c.b16 %v3375, %v3371
    %v3696 = vpack.c.b16 %v3376, %v3372
    %v3697 = vpack.c.b16 %v3377, %v3373
    %v3698 = vpack.c.b16 %v3378, %v3374
    %v3699 = vpack.c.b16 %v3383, %v3379
    %v3700 = vpack.c.b16 %v3384, %v3380
    %v3701 = vpack.c.b16 %v3385, %v3381
    %v3702 = vpack.c.b16 %v3386, %v3382
    %v3703 = vpack.c.b16 %v3391, %v3387
    %v3704 = vpack.c.b16 %v3392, %v3388
    %v3705 = vpack.c.b16 %v3393, %v3389
    %v3706 = vpack.c.b16 %v3394, %v3390
    %v3707 = vpack.c.b16 %v3399, %v3395
    %v3708 = vpack.c.b16 %v3400, %v3396
    %v3709 = vpack.c.b16 %v3401, %v3397
    %v3710 = vpack.c.b16 %v3402, %v3398
    %v3711 = vpack.c.b16 %v3407, %v3403
    %v3712 = vpack.c.b16 %v3408, %v3404
    %v3713 = vpack.c.b16 %v3409, %v3405
    %v3714 = vpack.c.b16 %v3410, %v3406
    %v3715 = vpack.c.b16 %v3415, %v3411
    %v3716 = vpack.c.b16 %v3416, %v3412
    %v3717 = vpack.c.b16 %v3417, %v3413
    %v3718 = vpack.c.b16 %v3418, %v3414
    %v3719 = vpack.c.b16 %v3423, %v3419
    %v3720 = vpack.c.b16 %v3424, %v3420
    %v3721 = vpack.c.b16 %v3425, %v3421
    %v3722 = vpack.c.b16 %v3426, %v3422
    %v3723 = vpack.c.b16 %v3431, %v3427
    %v3724 = vpack.c.b16 %v3432, %v3428
    %v3725 = vpack.c.b16 %v3433, %v3429
    %v3726 = vpack.c.b16 %v3434, %v3430
    %v3727 = vpack.c.b16 %v3439, %v3435
    %v3728 = vpack.c.b16 %v3440, %v3436
    %v3729 = vpack.c.b16 %v3441, %v3437
    %v3730 = vpack.c.b16 %v3442, %v3438
    %v3731 = vpack.c.b16 %v3447, %v3443
    %v3732 = vpack.c.b16 %v3448, %v3444
    %v3733 = vpack.c.b16 %v3449, %v3445
    %v3734 = vpack.c.b16 %v3450, %v3446
    %v3735 = vpack.c.b16 %v3455, %v3451
    %v3736 = vpack.c.b16 %v3456, %v3452
    %v3737 = vpack.c.b16 %v3457, %v3453
    %v3738 = vpack.c.b16 %v3458, %v3454
    %v3739 = vpack.c.b16 %v3463, %v3459
    %v3740 = vpack.c.b16 %v3464, %v3460
    %v3741 = vpack.c.b16 %v3465, %v3461
    %v3742 = vpack.c.b16 %v3466, %v3462
    %v3743 = vpack.c.b16 %v3471, %v3467
    %v3744 = vpack.c.b16 %v3472, %v3468
    %v3745 = vpack.c.b16 %v3473, %v3469
    %v3746 = vpack.c.b16 %v3474, %v3470
    %v3747 = vpack.c.b16 %v3479, %v3475
    %v3748 = vpack.c.b16 %v3480, %v3476
    %v3749 = vpack.c.b16 %v3481, %v3477
    %v3750 = vpack.c.b16 %v3482, %v3478
    %v3751 = vpack.c.b16 %v3487, %v3483
    %v3752 = vpack.c.b16 %v3488, %v3484
    %v3753 = vpack.c.b16 %v3489, %v3485
    %v3754 = vpack.c.b16 %v3490, %v3486
    %v3755 = vpack.c.b16 %v3495, %v3491
    %v3756 = vpack.c.b16 %v3496, %v3492
    %v3757 = vpack.c.b16 %v3497, %v3493
    %v3758 = vpack.c.b16 %v3498, %v3494
    %v3759 = vpack.c.b16 %v3503, %v3499
    %v3760 = vpack.c.b16 %v3504, %v3500
    %v3761 = vpack.c.b16 %v3505, %v3501
    %v3762 = vpack.c.b16 %v3506, %v3502
    %4019 = vmatprep.subr.bf16.mxu0 %v3508
    %4020 = vmatpush1.bf16.msra.mxu0 %v3507
    %4021 = vmatprep.subr.bf16.mxu0 %v3512
    %4022 = vmatpush1.bf16.msra.mxu0 %v3511
    %4023 = vmatprep.subr.bf16.mxu0 %v3516
    %4024 = vmatpush1.bf16.msra.mxu0 %v3515
    %4025 = vmatprep.subr.bf16.mxu0 %v3520
    %4026 = vmatpush1.bf16.msra.mxu0 %v3519
    %4027 = vmatprep.subr.bf16.mxu0 %v3524
    %4028 = vmatpush1.bf16.msra.mxu0 %v3523
    %4029 = vmatprep.subr.bf16.mxu0 %v3528
    %4030 = vmatpush1.bf16.msra.mxu0 %v3527
    %4031 = vmatprep.subr.bf16.mxu0 %v3532
    %4032 = vmatpush1.bf16.msra.mxu0 %v3531
    %4033 = vmatprep.subr.bf16.mxu0 %v3536
    %4034 = vmatpush1.bf16.msra.mxu0 %v3535
    %4035 = vmatprep.subr.bf16.mxu0 %v3540
    %4036 = vmatpush1.bf16.msra.mxu0 %v3539
    %4037 = vmatprep.subr.bf16.mxu0 %v3544
    %4038 = vmatpush1.bf16.msra.mxu0 %v3543
    %4039 = vmatprep.subr.bf16.mxu0 %v3548
    %4040 = vmatpush1.bf16.msra.mxu0 %v3547
    %4041 = vmatprep.subr.bf16.mxu0 %v3552
    %4042 = vmatpush1.bf16.msra.mxu0 %v3551
    %4043 = vmatprep.subr.bf16.mxu0 %v3556
    %4044 = vmatpush1.bf16.msra.mxu0 %v3555
    %4045 = vmatprep.subr.bf16.mxu0 %v3560
    %4046 = vmatpush1.bf16.msra.mxu0 %v3559
    %4047 = vmatprep.subr.bf16.mxu0 %v3564
    %4048 = vmatpush1.bf16.msra.mxu0 %v3563
    %4049 = vmatprep.subr.bf16.mxu0 %v3568
    %4050 = vmatpush1.bf16.msra.mxu0 %v3567
    %4051 = vmatprep.mubr.bf16.mxu0 %v2476
    %4052 = vmatmul.mubr.bf16.gmra.mrb[0].mxu0 %v2475
    %v4053 = vpop.f32.mrb[0].mxu0
    %v4054 = vadd.f32 0.0, %v4053
    %v4055 = vpop.f32.mrb[0].mxu0
    %v4056 = vadd.f32 0.0, %v4055
    %v4057 = vpop.f32.mrb[0].mxu0
    %v4058 = vpop.f32.mrb[0].mxu0
    %4059 = vdwg.mxu0
    %4060 = vmatprep.subr.bf16.mxu0 %v3572
    %4061 = vmatpush1.bf16.msra.mxu0 %v3571
    %4062 = vmatprep.subr.bf16.mxu0 %v3576
    %4063 = vmatpush1.bf16.msra.mxu0 %v3575
    %4064 = vmatprep.subr.bf16.mxu0 %v3580
    %4065 = vmatpush1.bf16.msra.mxu0 %v3579
    %4066 = vmatprep.subr.bf16.mxu0 %v3584
    %4067 = vmatpush1.bf16.msra.mxu0 %v3583
    %4068 = vmatprep.subr.bf16.mxu0 %v3588
    %4069 = vmatpush1.bf16.msra.mxu0 %v3587
    %4070 = vmatprep.subr.bf16.mxu0 %v3592
    %4071 = vmatpush1.bf16.msra.mxu0 %v3591
    %4072 = vmatprep.subr.bf16.mxu0 %v3596
    %4073 = vmatpush1.bf16.msra.mxu0 %v3595
    %4074 = vmatprep.subr.bf16.mxu0 %v3600
    %4075 = vmatpush1.bf16.msra.mxu0 %v3599
    %4076 = vmatprep.subr.bf16.mxu0 %v3604
    %4077 = vmatpush1.bf16.msra.mxu0 %v3603
    %4078 = vmatprep.subr.bf16.mxu0 %v3608
    %4079 = vmatpush1.bf16.msra.mxu0 %v3607
    %4080 = vmatprep.subr.bf16.mxu0 %v3612
    %4081 = vmatpush1.bf16.msra.mxu0 %v3611
    %4082 = vmatprep.subr.bf16.mxu0 %v3616
    %4083 = vmatpush1.bf16.msra.mxu0 %v3615
    %4084 = vmatprep.subr.bf16.mxu0 %v3620
    %4085 = vmatpush1.bf16.msra.mxu0 %v3619
    %4086 = vmatprep.subr.bf16.mxu0 %v3624
    %4087 = vmatpush1.bf16.msra.mxu0 %v3623
    %4088 = vmatprep.subr.bf16.mxu0 %v3628
    %4089 = vmatpush1.bf16.msra.mxu0 %v3627
    %4090 = vmatprep.subr.bf16.mxu0 %v3632
    %4091 = vmatpush1.bf16.msra.mxu0 %v3631
    %4092 = vmatprep.mubr.bf16.mxu0 %v2478
    %4093 = vmatmul.mubr.bf16.gmra.mrb[0].mxu0 %v2477
    %v4094 = vpop.f32.mrb[0].mxu0
    %v4095 = vadd.f32 %v4054, %v4094
    %v4096 = vpop.f32.mrb[0].mxu0
    %v4097 = vadd.f32 %v4056, %v4096
    %v4098 = vpop.f32.mrb[0].mxu0
    %v4099 = vpop.f32.mrb[0].mxu0
    %4100 = vdwg.mxu0
    %4101 = vmatprep.subr.bf16.mxu0 %v3636
    %4102 = vmatpush1.bf16.msra.mxu0 %v3635
    %4103 = vmatprep.subr.bf16.mxu0 %v3640
    %4104 = vmatpush1.bf16.msra.mxu0 %v3639
    %4105 = vmatprep.subr.bf16.mxu0 %v3644
    %4106 = vmatpush1.bf16.msra.mxu0 %v3643
    %4107 = vmatprep.subr.bf16.mxu0 %v3648
    %4108 = vmatpush1.bf16.msra.mxu0 %v3647
    %4109 = vmatprep.subr.bf16.mxu0 %v3652
    %4110 = vmatpush1.bf16.msra.mxu0 %v3651
    %4111 = vmatprep.subr.bf16.mxu0 %v3656
    %4112 = vmatpush1.bf16.msra.mxu0 %v3655
    %4113 = vmatprep.subr.bf16.mxu0 %v3660
    %4114 = vmatpush1.bf16.msra.mxu0 %v3659
    %4115 = vmatprep.subr.bf16.mxu0 %v3664
    %4116 = vmatpush1.bf16.msra.mxu0 %v3663
    %4117 = vmatprep.subr.bf16.mxu0 %v3668
    %4118 = vmatpush1.bf16.msra.mxu0 %v3667
    %4119 = vmatprep.subr.bf16.mxu0 %v3672
    %4120 = vmatpush1.bf16.msra.mxu0 %v3671
    %4121 = vmatprep.subr.bf16.mxu0 %v3676
    %4122 = vmatpush1.bf16.msra.mxu0 %v3675
    %4123 = vmatprep.subr.bf16.mxu0 %v3680
    %4124 = vmatpush1.bf16.msra.mxu0 %v3679
    %4125 = vmatprep.subr.bf16.mxu0 %v3684
    %4126 = vmatpush1.bf16.msra.mxu0 %v3683
    %4127 = vmatprep.subr.bf16.mxu0 %v3688
    %4128 = vmatpush1.bf16.msra.mxu0 %v3687
    %4129 = vmatprep.subr.bf16.mxu0 %v3692
    %4130 = vmatpush1.bf16.msra.mxu0 %v3691
    %4131 = vmatprep.subr.bf16.mxu0 %v3696
    %4132 = vmatpush1.bf16.msra.mxu0 %v3695
    %4133 = vmatprep.mubr.bf16.mxu0 %v2480
    %4134 = vmatmul.mubr.bf16.gmra.mrb[0].mxu0 %v2479
    %v4135 = vpop.f32.mrb[0].mxu0
    %v4136 = vadd.f32 %v4095, %v4135
    %v4137 = vpop.f32.mrb[0].mxu0
    %v4138 = vadd.f32 %v4097, %v4137
    %v4139 = vpop.f32.mrb[0].mxu0
    %v4140 = vpop.f32.mrb[0].mxu0
    %4141 = vdwg.mxu0
    %4142 = vmatprep.subr.bf16.mxu0 %v3700
    %4143 = vmatpush1.bf16.msra.mxu0 %v3699
    %4144 = vmatprep.subr.bf16.mxu0 %v3704
    %4145 = vmatpush1.bf16.msra.mxu0 %v3703
    %4146 = vmatprep.subr.bf16.mxu0 %v3708
    %4147 = vmatpush1.bf16.msra.mxu0 %v3707
    %4148 = vmatprep.subr.bf16.mxu0 %v3712
    %4149 = vmatpush1.bf16.msra.mxu0 %v3711
    %4150 = vmatprep.subr.bf16.mxu0 %v3716
    %4151 = vmatpush1.bf16.msra.mxu0 %v3715
    %4152 = vmatprep.subr.bf16.mxu0 %v3720
    %4153 = vmatpush1.bf16.msra.mxu0 %v3719
    %4154 = vmatprep.subr.bf16.mxu0 %v3724
    %4155 = vmatpush1.bf16.msra.mxu0 %v3723
    %4156 = vmatprep.subr.bf16.mxu0 %v3728
    %4157 = vmatpush1.bf16.msra.mxu0 %v3727
    %4158 = vmatprep.subr.bf16.mxu0 %v3732
    %4159 = vmatpush1.bf16.msra.mxu0 %v3731
    %4160 = vmatprep.subr.bf16.mxu0 %v3736
    %4161 = vmatpush1.bf16.msra.mxu0 %v3735
    %4162 = vmatprep.subr.bf16.mxu0 %v3740
    %4163 = vmatpush1.bf16.msra.mxu0 %v3739
    %4164 = vmatprep.subr.bf16.mxu0 %v3744
    %4165 = vmatpush1.bf16.msra.mxu0 %v3743
    %4166 = vmatprep.subr.bf16.mxu0 %v3748
    %4167 = vmatpush1.bf16.msra.mxu0 %v3747
    %4168 = vmatprep.subr.bf16.mxu0 %v3752
    %4169 = vmatpush1.bf16.msra.mxu0 %v3751
    %4170 = vmatprep.subr.bf16.mxu0 %v3756
    %4171 = vmatpush1.bf16.msra.mxu0 %v3755
    %4172 = vmatprep.subr.bf16.mxu0 %v3760
    %4173 = vmatpush1.bf16.msra.mxu0 %v3759
    %4174 = vmatprep.mubr.bf16.mxu0 %v2482
    %4175 = vmatmul.mubr.bf16.gmra.mrb[0].mxu0 %v2481
    %v4176 = vpop.f32.mrb[0].mxu0
    %v4177 = vadd.f32 %v4136, %v4176
    %v4178 = vpop.f32.mrb[0].mxu0
    %v4179 = vadd.f32 %v4138, %v4178
    %v4180 = vpop.f32.mrb[0].mxu0
    %v4181 = vpop.f32.mrb[0].mxu0
    %4182 = vdwg.mxu0
    %4183 = vmatprep.subr.bf16.mxu0 %v3510
    %4184 = vmatpush1.bf16.msra.mxu0 %v3509
    %4185 = vmatprep.subr.bf16.mxu0 %v3514
    %4186 = vmatpush1.bf16.msra.mxu0 %v3513
    %4187 = vmatprep.subr.bf16.mxu0 %v3518
    %4188 = vmatpush1.bf16.msra.mxu0 %v3517
    %4189 = vmatprep.subr.bf16.mxu0 %v3522
    %4190 = vmatpush1.bf16.msra.mxu0 %v3521
    %4191 = vmatprep.subr.bf16.mxu0 %v3526
    %4192 = vmatpush1.bf16.msra.mxu0 %v3525
    %4193 = vmatprep.subr.bf16.mxu0 %v3530
    %4194 = vmatpush1.bf16.msra.mxu0 %v3529
    %4195 = vmatprep.subr.bf16.mxu0 %v3534
    %4196 = vmatpush1.bf16.msra.mxu0 %v3533
    %4197 = vmatprep.subr.bf16.mxu0 %v3538
    %4198 = vmatpush1.bf16.msra.mxu0 %v3537
    %4199 = vmatprep.subr.bf16.mxu0 %v3542
    %4200 = vmatpush1.bf16.msra.mxu0 %v3541
    %4201 = vmatprep.subr.bf16.mxu0 %v3546
    %4202 = vmatpush1.bf16.msra.mxu0 %v3545
    %4203 = vmatprep.subr.bf16.mxu0 %v3550
    %4204 = vmatpush1.bf16.msra.mxu0 %v3549
    %4205 = vmatprep.subr.bf16.mxu0 %v3554
    %4206 = vmatpush1.bf16.msra.mxu0 %v3553
    %4207 = vmatprep.subr.bf16.mxu0 %v3558
    %4208 = vmatpush1.bf16.msra.mxu0 %v3557
    %4209 = vmatprep.subr.bf16.mxu0 %v3562
    %4210 = vmatpush1.bf16.msra.mxu0 %v3561
    %4211 = vmatprep.subr.bf16.mxu0 %v3566
    %4212 = vmatpush1.bf16.msra.mxu0 %v3565
    %4213 = vmatprep.subr.bf16.mxu0 %v3570
    %4214 = vmatpush1.bf16.msra.mxu0 %v3569
    %4215 = vmatprep.mubr.bf16.mxu0 %v2476
    %4216 = vmatmul.mubr.bf16.gmra.mrb[0].mxu0 %v2475
    %v4217 = vpop.f32.mrb[0].mxu0
    %v4218 = vadd.f32 0.0, %v4217
    %v4219 = vpop.f32.mrb[0].mxu0
    %v4220 = vadd.f32 0.0, %v4219
    %v4221 = vpop.f32.mrb[0].mxu0
    %v4222 = vpop.f32.mrb[0].mxu0
    %4223 = vdwg.mxu0
    %4224 = vmatprep.subr.bf16.mxu0 %v3574
    %4225 = vmatpush1.bf16.msra.mxu0 %v3573
    %4226 = vmatprep.subr.bf16.mxu0 %v3578
    %4227 = vmatpush1.bf16.msra.mxu0 %v3577
    %4228 = vmatprep.subr.bf16.mxu0 %v3582
    %4229 = vmatpush1.bf16.msra.mxu0 %v3581
    %4230 = vmatprep.subr.bf16.mxu0 %v3586
    %4231 = vmatpush1.bf16.msra.mxu0 %v3585
    %4232 = vmatprep.subr.bf16.mxu0 %v3590
    %4233 = vmatpush1.bf16.msra.mxu0 %v3589
    %4234 = vmatprep.subr.bf16.mxu0 %v3594
    %4235 = vmatpush1.bf16.msra.mxu0 %v3593
    %4236 = vmatprep.subr.bf16.mxu0 %v3598
    %4237 = vmatpush1.bf16.msra.mxu0 %v3597
    %4238 = vmatprep.subr.bf16.mxu0 %v3602
    %4239 = vmatpush1.bf16.msra.mxu0 %v3601
    %4240 = vmatprep.subr.bf16.mxu0 %v3606
    %4241 = vmatpush1.bf16.msra.mxu0 %v3605
    %4242 = vmatprep.subr.bf16.mxu0 %v3610
    %4243 = vmatpush1.bf16.msra.mxu0 %v3609
    %4244 = vmatprep.subr.bf16.mxu0 %v3614
    %4245 = vmatpush1.bf16.msra.mxu0 %v3613
    %4246 = vmatprep.subr.bf16.mxu0 %v3618
    %4247 = vmatpush1.bf16.msra.mxu0 %v3617
    %4248 = vmatprep.subr.bf16.mxu0 %v3622
    %4249 = vmatpush1.bf16.msra.mxu0 %v3621
    %4250 = vmatprep.subr.bf16.mxu0 %v3626
    %4251 = vmatpush1.bf16.msra.mxu0 %v3625
    %4252 = vmatprep.subr.bf16.mxu0 %v3630
    %4253 = vmatpush1.bf16.msra.mxu0 %v3629
    %4254 = vmatprep.subr.bf16.mxu0 %v3634
    %4255 = vmatpush1.bf16.msra.mxu0 %v3633
    %4256 = vmatprep.mubr.bf16.mxu0 %v2478
    %4257 = vmatmul.mubr.bf16.gmra.mrb[0].mxu0 %v2477
    %v4258 = vpop.f32.mrb[0].mxu0
    %v4259 = vadd.f32 %v4218, %v4258
    %v4260 = vpop.f32.mrb[0].mxu0
    %v4261 = vadd.f32 %v4220, %v4260
    %v4262 = vpop.f32.mrb[0].mxu0
    %v4263 = vpop.f32.mrb[0].mxu0
    %4264 = vdwg.mxu0
    %4265 = vmatprep.subr.bf16.mxu0 %v3638
    %4266 = vmatpush1.bf16.msra.mxu0 %v3637
    %4267 = vmatprep.subr.bf16.mxu0 %v3642
    %4268 = vmatpush1.bf16.msra.mxu0 %v3641
    %4269 = vmatprep.subr.bf16.mxu0 %v3646
    %4270 = vmatpush1.bf16.msra.mxu0 %v3645
    %4271 = vmatprep.subr.bf16.mxu0 %v3650
    %4272 = vmatpush1.bf16.msra.mxu0 %v3649
    %4273 = vmatprep.subr.bf16.mxu0 %v3654
    %4274 = vmatpush1.bf16.msra.mxu0 %v3653
    %4275 = vmatprep.subr.bf16.mxu0 %v3658
    %4276 = vmatpush1.bf16.msra.mxu0 %v3657
    %4277 = vmatprep.subr.bf16.mxu0 %v3662
    %4278 = vmatpush1.bf16.msra.mxu0 %v3661
    %4279 = vmatprep.subr.bf16.mxu0 %v3666
    %4280 = vmatpush1.bf16.msra.mxu0 %v3665
    %4281 = vmatprep.subr.bf16.mxu0 %v3670
    %4282 = vmatpush1.bf16.msra.mxu0 %v3669
    %4283 = vmatprep.subr.bf16.mxu0 %v3674
    %4284 = vmatpush1.bf16.msra.mxu0 %v3673
    %4285 = vmatprep.subr.bf16.mxu0 %v3678
    %4286 = vmatpush1.bf16.msra.mxu0 %v3677
    %4287 = vmatprep.subr.bf16.mxu0 %v3682
    %4288 = vmatpush1.bf16.msra.mxu0 %v3681
    %4289 = vmatprep.subr.bf16.mxu0 %v3686
    %4290 = vmatpush1.bf16.msra.mxu0 %v3685
    %4291 = vmatprep.subr.bf16.mxu0 %v3690
    %4292 = vmatpush1.bf16.msra.mxu0 %v3689
    %4293 = vmatprep.subr.bf16.mxu0 %v3694
    %4294 = vmatpush1.bf16.msra.mxu0 %v3693
    %4295 = vmatprep.subr.bf16.mxu0 %v3698
    %4296 = vmatpush1.bf16.msra.mxu0 %v3697
    %4297 = vmatprep.mubr.bf16.mxu0 %v2480
    %4298 = vmatmul.mubr.bf16.gmra.mrb[0].mxu0 %v2479
    %v4299 = vpop.f32.mrb[0].mxu0
    %v4300 = vadd.f32 %v4259, %v4299
    %v4301 = vpop.f32.mrb[0].mxu0
    %v4302 = vadd.f32 %v4261, %v4301
    %v4303 = vpop.f32.mrb[0].mxu0
    %v4304 = vpop.f32.mrb[0].mxu0
    %4305 = vdwg.mxu0
    %4306 = vmatprep.subr.bf16.mxu0 %v3702
    %4307 = vmatpush1.bf16.msra.mxu0 %v3701
    %4308 = vmatprep.subr.bf16.mxu0 %v3706
    %4309 = vmatpush1.bf16.msra.mxu0 %v3705
    %4310 = vmatprep.subr.bf16.mxu0 %v3710
    %4311 = vmatpush1.bf16.msra.mxu0 %v3709
    %4312 = vmatprep.subr.bf16.mxu0 %v3714
    %4313 = vmatpush1.bf16.msra.mxu0 %v3713
    %4314 = vmatprep.subr.bf16.mxu0 %v3718
    %4315 = vmatpush1.bf16.msra.mxu0 %v3717
    %4316 = vmatprep.subr.bf16.mxu0 %v3722
    %4317 = vmatpush1.bf16.msra.mxu0 %v3721
    %4318 = vmatprep.subr.bf16.mxu0 %v3726
    %4319 = vmatpush1.bf16.msra.mxu0 %v3725
    %4320 = vmatprep.subr.bf16.mxu0 %v3730
    %4321 = vmatpush1.bf16.msra.mxu0 %v3729
    %4322 = vmatprep.subr.bf16.mxu0 %v3734
    %4323 = vmatpush1.bf16.msra.mxu0 %v3733
    %4324 = vmatprep.subr.bf16.mxu0 %v3738
    %4325 = vmatpush1.bf16.msra.mxu0 %v3737
    %4326 = vmatprep.subr.bf16.mxu0 %v3742
    %4327 = vmatpush1.bf16.msra.mxu0 %v3741
    %4328 = vmatprep.subr.bf16.mxu0 %v3746
    %4329 = vmatpush1.bf16.msra.mxu0 %v3745
    %4330 = vmatprep.subr.bf16.mxu0 %v3750
    %4331 = vmatpush1.bf16.msra.mxu0 %v3749
    %4332 = vmatprep.subr.bf16.mxu0 %v3754
    %4333 = vmatpush1.bf16.msra.mxu0 %v3753
    %4334 = vmatprep.subr.bf16.mxu0 %v3758
    %4335 = vmatpush1.bf16.msra.mxu0 %v3757
    %4336 = vmatprep.subr.bf16.mxu0 %v3762
    %4337 = vmatpush1.bf16.msra.mxu0 %v3761
    %4338 = vmatprep.mubr.bf16.mxu0 %v2482
    %4339 = vmatmul.mubr.bf16.gmra.mrb[0].mxu0 %v2481
    %v4340 = vpop.f32.mrb[0].mxu0
    %v4341 = vadd.f32 %v4300, %v4340
    %v4342 = vpop.f32.mrb[0].mxu0
    %v4343 = vadd.f32 %v4302, %v4342
    %v4344 = vpop.f32.mrb[0].mxu0
    %v4345 = vpop.f32.mrb[0].mxu0
    %4346 = vdwg.mxu0
    %v4347 = vld [vmem:[%s19] sm:$0xf]
    %v4349 = vlaneseq
    %v4350 = vshrl.u32 %v4349, 7
    %v4351 = vsub.s32 0, %v4350
    %v4352 = vrot.slane %v4347, %v4351
    %v4353 = vlaneseq
    %v4354 = vshrl.u32 %v4353, 7
    %v4355 = vsub.s32 1, %v4354
    %v4356 = vrot.slane %v4347, %v4355
    %v4357 = vlaneseq
    %v4358 = vshrl.u32 %v4357, 7
    %v4359 = vsub.s32 2, %v4358
    %v4360 = vrot.slane %v4347, %v4359
    %v4361 = vlaneseq
    %v4362 = vshrl.u32 %v4361, 7
    %v4363 = vsub.s32 3, %v4362
    %v4364 = vrot.slane %v4347, %v4363
    %v4369 = vmul.f32 %v4177, %v4352
    %v4370 = vmul.f32 %v4179, %v4356
    %v4371 = vmul.f32 %v4341, %v4360
    %v4372 = vmul.f32 %v4343, %v4364
    %v4373 = vld [vmem:[%s20] sm:$0xf]
    %v4375 = vlaneseq
    %v4376 = vshrl.u32 %v4375, 7
    %v4377 = vsub.s32 0, %v4376
    %v4378 = vrot.slane %v4373, %v4377
    %v4379 = vlaneseq
    %v4380 = vshrl.u32 %v4379, 7
    %v4381 = vsub.s32 1, %v4380
    %v4382 = vrot.slane %v4373, %v4381
    %v4383 = vlaneseq
    %v4384 = vshrl.u32 %v4383, 7
    %v4385 = vsub.s32 2, %v4384
    %v4386 = vrot.slane %v4373, %v4385
    %v4387 = vlaneseq
    %v4388 = vshrl.u32 %v4387, 7
    %v4389 = vsub.s32 3, %v4388
    %v4390 = vrot.slane %v4373, %v4389
    %v4395 = vadd.f32 %v4369, %v4378
    %v4396 = vadd.f32 %v4370, %v4382
    %v4397 = vadd.f32 %v4371, %v4386
    %v4398 = vadd.f32 %v4372, %v4390
    %v4399 = vmax.f32 %v4395, 0.0
    %v4400 = vmax.f32 %v4396, 0.0
    %v4401 = vmax.f32 %v4397, 0.0
    %v4402 = vmax.f32 %v4398, 0.0
    %v4403 = vpack.c.bf16 %v4399, %v4399
    %v4404 = vpack.c.bf16 %v4400, %v4400
    %v4405 = vpack.c.bf16 %v4401, %v4401
    %v4406 = vpack.c.bf16 %v4402, %v4402
    %v4407 = vld [vmem:[#allocation12] sm:$0xf]
    %v4408 = vld [vmem:[#allocation12 + $0x4] sm:$0xf]
    %v4409 = vld [vmem:[#allocation12 + $0x8] sm:$0xf]
    %v4410 = vld [vmem:[#allocation12 + $0xc] sm:$0xf]
    %v4411 = vld [vmem:[#allocation12 + $0x10] sm:$0xf]
    %v4412 = vld [vmem:[#allocation12 + $0x14] sm:$0xf]
    %v4413 = vld [vmem:[#allocation12 + $0x18] sm:$0xf]
    %v4414 = vld [vmem:[#allocation12 + $0x1c] sm:$0xf]
    %v4415 = vld [vmem:[#allocation12 + $0x20] sm:$0xf]
    %v4416 = vld [vmem:[#allocation12 + $0x24] sm:$0xf]
    %v4417 = vld [vmem:[#allocation12 + $0x28] sm:$0xf]
    %v4418 = vld [vmem:[#allocation12 + $0x2c] sm:$0xf]
    %v4419 = vld [vmem:[#allocation12 + $0x30] sm:$0xf]
    %v4420 = vld [vmem:[#allocation12 + $0x34] sm:$0xf]
    %v4421 = vld [vmem:[#allocation12 + $0x38] sm:$0xf]
    %v4422 = vld [vmem:[#allocation12 + $0x3c] sm:$0xf]
    %v4423 = vld [vmem:[#allocation12 + $0x40] sm:$0xf]
    %v4424 = vld [vmem:[#allocation12 + $0x44] sm:$0xf]
    %v4425 = vld [vmem:[#allocation12 + $0x48] sm:$0xf]
    %v4426 = vld [vmem:[#allocation12 + $0x4c] sm:$0xf]
    %v4427 = vld [vmem:[#allocation12 + $0x50] sm:$0xf]
    %v4428 = vld [vmem:[#allocation12 + $0x54] sm:$0xf]
    %v4429 = vld [vmem:[#allocation12 + $0x58] sm:$0xf]
    %v4430 = vld [vmem:[#allocation12 + $0x5c] sm:$0xf]
    %v4431 = vld [vmem:[#allocation12 + $0x60] sm:$0xf]
    %v4432 = vld [vmem:[#allocation12 + $0x64] sm:$0xf]
    %v4433 = vld [vmem:[#allocation12 + $0x68] sm:$0xf]
    %v4434 = vld [vmem:[#allocation12 + $0x6c] sm:$0xf]
    %v4435 = vld [vmem:[#allocation12 + $0x70] sm:$0xf]
    %v4436 = vld [vmem:[#allocation12 + $0x74] sm:$0xf]
    %v4437 = vld [vmem:[#allocation12 + $0x78] sm:$0xf]
    %v4438 = vld [vmem:[#allocation12 + $0x7c] sm:$0xf]
    %v4439 = vld [vmem:[#allocation12 + $0x80] sm:$0xf]
    %v4440 = vld [vmem:[#allocation12 + $0x84] sm:$0xf]
    %v4441 = vld [vmem:[#allocation12 + $0x88] sm:$0xf]
    %v4442 = vld [vmem:[#allocation12 + $0x8c] sm:$0xf]
    %v4443 = vld [vmem:[#allocation12 + $0x90] sm:$0xf]
    %v4444 = vld [vmem:[#allocation12 + $0x94] sm:$0xf]
    %v4445 = vld [vmem:[#allocation12 + $0x98] sm:$0xf]
    %v4446 = vld [vmem:[#allocation12 + $0x9c] sm:$0xf]
    %v4447 = vld [vmem:[#allocation12 + $0xa0] sm:$0xf]
    %v4448 = vld [vmem:[#allocation12 + $0xa4] sm:$0xf]
    %v4449 = vld [vmem:[#allocation12 + $0xa8] sm:$0xf]
    %v4450 = vld [vmem:[#allocation12 + $0xac] sm:$0xf]
    %v4451 = vld [vmem:[#allocation12 + $0xb0] sm:$0xf]
    %v4452 = vld [vmem:[#allocation12 + $0xb4] sm:$0xf]
    %v4453 = vld [vmem:[#allocation12 + $0xb8] sm:$0xf]
    %v4454 = vld [vmem:[#allocation12 + $0xbc] sm:$0xf]
    %v4455 = vld [vmem:[#allocation12 + $0xc0] sm:$0xf]
    %v4456 = vld [vmem:[#allocation12 + $0xc4] sm:$0xf]
    %v4457 = vld [vmem:[#allocation12 + $0xc8] sm:$0xf]
    %v4458 = vld [vmem:[#allocation12 + $0xcc] sm:$0xf]
    %v4459 = vld [vmem:[#allocation12 + $0xd0] sm:$0xf]
    %v4460 = vld [vmem:[#allocation12 + $0xd4] sm:$0xf]
    %v4461 = vld [vmem:[#allocation12 + $0xd8] sm:$0xf]
    %v4462 = vld [vmem:[#allocation12 + $0xdc] sm:$0xf]
    %v4463 = vld [vmem:[#allocation12 + $0xe0] sm:$0xf]
    %v4464 = vld [vmem:[#allocation12 + $0xe4] sm:$0xf]
    %v4465 = vld [vmem:[#allocation12 + $0xe8] sm:$0xf]
    %v4466 = vld [vmem:[#allocation12 + $0xec] sm:$0xf]
    %v4467 = vld [vmem:[#allocation12 + $0xf0] sm:$0xf]
    %v4468 = vld [vmem:[#allocation12 + $0xf4] sm:$0xf]
    %v4469 = vld [vmem:[#allocation12 + $0xf8] sm:$0xf]
    %v4470 = vld [vmem:[#allocation12 + $0xfc] sm:$0xf]
    %v4535 = vunpack.c.l.b16 %v4407
    %v4536 = vunpack.c.l.b16 %v4408
    %v4537 = vunpack.c.l.b16 %v4409
    %v4538 = vunpack.c.l.b16 %v4410
    %v4539 = vunpack.c.l.b16 %v4411
    %v4540 = vunpack.c.l.b16 %v4412
    %v4541 = vunpack.c.l.b16 %v4413
    %v4542 = vunpack.c.l.b16 %v4414
    %v4543 = vunpack.c.l.b16 %v4415
    %v4544 = vunpack.c.l.b16 %v4416
    %v4545 = vunpack.c.l.b16 %v4417
    %v4546 = vunpack.c.l.b16 %v4418
    %v4547 = vunpack.c.l.b16 %v4419
    %v4548 = vunpack.c.l.b16 %v4420
    %v4549 = vunpack.c.l.b16 %v4421
    %v4550 = vunpack.c.l.b16 %v4422
    %v4551 = vunpack.c.l.b16 %v4423
    %v4552 = vunpack.c.l.b16 %v4424
    %v4553 = vunpack.c.l.b16 %v4425
    %v4554 = vunpack.c.l.b16 %v4426
    %v4555 = vunpack.c.l.b16 %v4427
    %v4556 = vunpack.c.l.b16 %v4428
    %v4557 = vunpack.c.l.b16 %v4429
    %v4558 = vunpack.c.l.b16 %v4430
    %v4559 = vunpack.c.l.b16 %v4431
    %v4560 = vunpack.c.l.b16 %v4432
    %v4561 = vunpack.c.l.b16 %v4433
    %v4562 = vunpack.c.l.b16 %v4434
    %v4563 = vunpack.c.l.b16 %v4435
    %v4564 = vunpack.c.l.b16 %v4436
    %v4565 = vunpack.c.l.b16 %v4437
    %v4566 = vunpack.c.l.b16 %v4438
    %v4567 = vunpack.c.l.b16 %v4439
    %v4568 = vunpack.c.l.b16 %v4440
    %v4569 = vunpack.c.l.b16 %v4441
    %v4570 = vunpack.c.l.b16 %v4442
    %v4571 = vunpack.c.l.b16 %v4443
    %v4572 = vunpack.c.l.b16 %v4444
    %v4573 = vunpack.c.l.b16 %v4445
    %v4574 = vunpack.c.l.b16 %v4446
    %v4575 = vunpack.c.l.b16 %v4447
    %v4576 = vunpack.c.l.b16 %v4448
    %v4577 = vunpack.c.l.b16 %v4449
    %v4578 = vunpack.c.l.b16 %v4450
    %v4579 = vunpack.c.l.b16 %v4451
    %v4580 = vunpack.c.l.b16 %v4452
    %v4581 = vunpack.c.l.b16 %v4453
    %v4582 = vunpack.c.l.b16 %v4454
    %v4583 = vunpack.c.l.b16 %v4455
    %v4584 = vunpack.c.l.b16 %v4456
    %v4585 = vunpack.c.l.b16 %v4457
    %v4586 = vunpack.c.l.b16 %v4458
    %v4587 = vunpack.c.l.b16 %v4459
    %v4588 = vunpack.c.l.b16 %v4460
    %v4589 = vunpack.c.l.b16 %v4461
    %v4590 = vunpack.c.l.b16 %v4462
    %v4591 = vunpack.c.l.b16 %v4463
    %v4592 = vunpack.c.l.b16 %v4464
    %v4593 = vunpack.c.l.b16 %v4465
    %v4594 = vunpack.c.l.b16 %v4466
    %v4595 = vunpack.c.l.b16 %v4467
    %v4596 = vunpack.c.l.b16 %v4468
    %v4597 = vunpack.c.l.b16 %v4469
    %v4598 = vunpack.c.l.b16 %v4470
    %v4599 = vpack.c.b16 %v4536, %v4535
    %v4600 = vpack.c.b16 %v4538, %v4537
    %v4601 = vpack.c.b16 %v4540, %v4539
    %v4602 = vpack.c.b16 %v4542, %v4541
    %v4603 = vpack.c.b16 %v4544, %v4543
    %v4604 = vpack.c.b16 %v4546, %v4545
    %v4605 = vpack.c.b16 %v4548, %v4547
    %v4606 = vpack.c.b16 %v4550, %v4549
    %v4607 = vpack.c.b16 %v4552, %v4551
    %v4608 = vpack.c.b16 %v4554, %v4553
    %v4609 = vpack.c.b16 %v4556, %v4555
    %v4610 = vpack.c.b16 %v4558, %v4557
    %v4611 = vpack.c.b16 %v4560, %v4559
    %v4612 = vpack.c.b16 %v4562, %v4561
    %v4613 = vpack.c.b16 %v4564, %v4563
    %v4614 = vpack.c.b16 %v4566, %v4565
    %v4615 = vpack.c.b16 %v4568, %v4567
    %v4616 = vpack.c.b16 %v4570, %v4569
    %v4617 = vpack.c.b16 %v4572, %v4571
    %v4618 = vpack.c.b16 %v4574, %v4573
    %v4619 = vpack.c.b16 %v4576, %v4575
    %v4620 = vpack.c.b16 %v4578, %v4577
    %v4621 = vpack.c.b16 %v4580, %v4579
    %v4622 = vpack.c.b16 %v4582, %v4581
    %v4623 = vpack.c.b16 %v4584, %v4583
    %v4624 = vpack.c.b16 %v4586, %v4585
    %v4625 = vpack.c.b16 %v4588, %v4587
    %v4626 = vpack.c.b16 %v4590, %v4589
    %v4627 = vpack.c.b16 %v4592, %v4591
    %v4628 = vpack.c.b16 %v4594, %v4593
    %v4629 = vpack.c.b16 %v4596, %v4595
    %v4630 = vpack.c.b16 %v4598, %v4597
    %4663 = vmatprep.subr.bf16.mxu0 0
    %4664 = vmatpush1.bf16.msra.mxu0 %v4599
    %4665 = vmatprep.subr.bf16.mxu0 0
    %4666 = vmatpush1.bf16.msra.mxu0 %v4600
    %4667 = vmatprep.subr.bf16.mxu0 0
    %4668 = vmatpush1.bf16.msra.mxu0 %v4601
    %4669 = vmatprep.subr.bf16.mxu0 0
    %4670 = vmatpush1.bf16.msra.mxu0 %v4602
    %4671 = vmatprep.subr.bf16.mxu0 0
    %4672 = vmatpush1.bf16.msra.mxu0 %v4603
    %4673 = vmatprep.subr.bf16.mxu0 0
    %4674 = vmatpush1.bf16.msra.mxu0 %v4604
    %4675 = vmatprep.subr.bf16.mxu0 0
    %4676 = vmatpush1.bf16.msra.mxu0 %v4605
    %4677 = vmatprep.subr.bf16.mxu0 0
    %4678 = vmatpush1.bf16.msra.mxu0 %v4606
    %4679 = vmatprep.subr.bf16.mxu0 0
    %4680 = vmatpush1.bf16.msra.mxu0 %v4607
    %4681 = vmatprep.subr.bf16.mxu0 0
    %4682 = vmatpush1.bf16.msra.mxu0 %v4608
    %4683 = vmatprep.subr.bf16.mxu0 0
    %4684 = vmatpush1.bf16.msra.mxu0 %v4609
    %4685 = vmatprep.subr.bf16.mxu0 0
    %4686 = vmatpush1.bf16.msra.mxu0 %v4610
    %4687 = vmatprep.subr.bf16.mxu0 0
    %4688 = vmatpush1.bf16.msra.mxu0 %v4611
    %4689 = vmatprep.subr.bf16.mxu0 0
    %4690 = vmatpush1.bf16.msra.mxu0 %v4612
    %4691 = vmatprep.subr.bf16.mxu0 0
    %4692 = vmatpush1.bf16.msra.mxu0 %v4613
    %4693 = vmatprep.subr.bf16.mxu0 0
    %4694 = vmatpush1.bf16.msra.mxu0 %v4614
    %4695 = vmatprep.mubr.bf16.mxu0 %v4404
    %4696 = vmatmul.mubr.bf16.gmra.mrb[0].mxu0 %v4403
    %v4697 = vpop.f32.mrb[0].mxu0
    %v4698 = vadd.f32 0.0, %v4697
    %v4699 = vpop.f32.mrb[0].mxu0
    %v4700 = vpop.f32.mrb[0].mxu0
    %v4701 = vpop.f32.mrb[0].mxu0
    %4702 = vdwg.mxu0
    %4703 = vmatprep.subr.bf16.mxu0 0
    %4704 = vmatpush1.bf16.msra.mxu0 %v4615
    %4705 = vmatprep.subr.bf16.mxu0 0
    %4706 = vmatpush1.bf16.msra.mxu0 %v4616
    %4707 = vmatprep.subr.bf16.mxu0 0
    %4708 = vmatpush1.bf16.msra.mxu0 %v4617
    %4709 = vmatprep.subr.bf16.mxu0 0
    %4710 = vmatpush1.bf16.msra.mxu0 %v4618
    %4711 = vmatprep.subr.bf16.mxu0 0
    %4712 = vmatpush1.bf16.msra.mxu0 %v4619
    %4713 = vmatprep.subr.bf16.mxu0 0
    %4714 = vmatpush1.bf16.msra.mxu0 %v4620
    %4715 = vmatprep.subr.bf16.mxu0 0
    %4716 = vmatpush1.bf16.msra.mxu0 %v4621
    %4717 = vmatprep.subr.bf16.mxu0 0
    %4718 = vmatpush1.bf16.msra.mxu0 %v4622
    %4719 = vmatprep.subr.bf16.mxu0 0
    %4720 = vmatpush1.bf16.msra.mxu0 %v4623
    %4721 = vmatprep.subr.bf16.mxu0 0
    %4722 = vmatpush1.bf16.msra.mxu0 %v4624
    %4723 = vmatprep.subr.bf16.mxu0 0
    %4724 = vmatpush1.bf16.msra.mxu0 %v4625
    %4725 = vmatprep.subr.bf16.mxu0 0
    %4726 = vmatpush1.bf16.msra.mxu0 %v4626
    %4727 = vmatprep.subr.bf16.mxu0 0
    %4728 = vmatpush1.bf16.msra.mxu0 %v4627
    %4729 = vmatprep.subr.bf16.mxu0 0
    %4730 = vmatpush1.bf16.msra.mxu0 %v4628
    %4731 = vmatprep.subr.bf16.mxu0 0
    %4732 = vmatpush1.bf16.msra.mxu0 %v4629
    %4733 = vmatprep.subr.bf16.mxu0 0
    %4734 = vmatpush1.bf16.msra.mxu0 %v4630
    %4735 = vmatprep.mubr.bf16.mxu0 %v4406
    %4736 = vmatmul.mubr.bf16.gmra.mrb[0].mxu0 %v4405
    %v4737 = vpop.f32.mrb[0].mxu0
    %v4738 = vadd.f32 %v4698, %v4737
    %v4739 = vpop.f32.mrb[0].mxu0
    %v4740 = vpop.f32.mrb[0].mxu0
    %v4741 = vpop.f32.mrb[0].mxu0
    %4742 = vdwg.mxu0
    %v4743 = vld [vmem:[%s22] sm:$0x1]
    %v4745 = vlaneseq
    %v4746 = vshrl.u32 %v4745, 7
    %v4747 = vsub.s32 0, %v4746
    %v4748 = vrot.slane %v4743, %v4747
    %v4750 = vmul.f32 %v4738, %v4748
    %v4751 = vld [vmem:[%s23] sm:$0x1]
    %v4753 = vlaneseq
    %v4754 = vshrl.u32 %v4753, 7
    %v4755 = vsub.s32 0, %v4754
    %v4756 = vrot.slane %v4751, %v4755
    %v4758 = vadd.f32 %v4750, %v4756
    %v4759 = vmax.f32 %v4758, 0.0
    %v4760 = vpack.c.bf16 %v4759, %v4759
    %v4761 = vld [vmem:[%s24] sm:$0xf]
    %v4762 = vld [vmem:[%s24 + $0x4] sm:$0xf]
    %v4763 = vld [vmem:[%s24 + $0x8] sm:$0xf]
    %v4764 = vld [vmem:[%s24 + $0xc] sm:$0xf]
    %v4765 = vld [vmem:[%s24 + $0x10] sm:$0xf]
    %v4766 = vld [vmem:[%s24 + $0x14] sm:$0xf]
    %v4767 = vld [vmem:[%s24 + $0x18] sm:$0xf]
    %v4768 = vld [vmem:[%s24 + $0x1c] sm:$0xf]
    %v4769 = vld [vmem:[%s24 + $0x20] sm:$0xf]
    %v4770 = vld [vmem:[%s24 + $0x24] sm:$0xf]
    %v4771 = vld [vmem:[%s24 + $0x28] sm:$0xf]
    %v4772 = vld [vmem:[%s24 + $0x2c] sm:$0xf]
    %v4773 = vld [vmem:[%s24 + $0x30] sm:$0xf]
    %v4774 = vld [vmem:[%s24 + $0x34] sm:$0xf]
    %v4775 = vld [vmem:[%s24 + $0x38] sm:$0xf]
    %v4776 = vld [vmem:[%s24 + $0x3c] sm:$0xf]
    %v4777 = vld [vmem:[%s25] sm:$0x1]
    %v4779 = vlaneseq
    %v4780 = vshrl.u32 %v4779, 7
    %v4781 = vsub.s32 0, %v4780
    %v4782 = vrot.slane %v4777, %v4781
    %v4800 = vunpack.c.l.b16 %v4761
    %v4801 = vunpack.c.l.b16 %v4762
    %v4802 = vunpack.c.l.b16 %v4763
    %v4803 = vunpack.c.l.b16 %v4764
    %v4804 = vunpack.c.l.b16 %v4765
    %v4805 = vunpack.c.l.b16 %v4766
    %v4806 = vunpack.c.l.b16 %v4767
    %v4807 = vunpack.c.l.b16 %v4768
    %v4808 = vunpack.c.l.b16 %v4769
    %v4809 = vunpack.c.l.b16 %v4770
    %v4810 = vunpack.c.l.b16 %v4771
    %v4811 = vunpack.c.l.b16 %v4772
    %v4812 = vunpack.c.l.b16 %v4773
    %v4813 = vunpack.c.l.b16 %v4774
    %v4814 = vunpack.c.l.b16 %v4775
    %v4815 = vunpack.c.l.b16 %v4776
    %v4816 = vpack.c.b16 %v4801, %v4800
    %v4817 = vpack.c.b16 %v4803, %v4802
    %v4818 = vpack.c.b16 %v4805, %v4804
    %v4819 = vpack.c.b16 %v4807, %v4806
    %v4820 = vpack.c.b16 %v4809, %v4808
    %v4821 = vpack.c.b16 %v4811, %v4810
    %v4822 = vpack.c.b16 %v4813, %v4812
    %v4823 = vpack.c.b16 %v4815, %v4814
    %4832 = vmatprep.subr.bf16.mxu0 0
    %4833 = vmatpush1.bf16.msra.mxu0 %v4816
    %4834 = vmatprep.subr.bf16.mxu0 0
    %4835 = vmatpush1.bf16.msra.mxu0 %v4817
    %4836 = vmatprep.subr.bf16.mxu0 0
    %4837 = vmatpush1.bf16.msra.mxu0 %v4818
    %4838 = vmatprep.subr.bf16.mxu0 0
    %4839 = vmatpush1.bf16.msra.mxu0 %v4819
    %4840 = vmatprep.subr.bf16.mxu0 0
    %4841 = vmatpush1.bf16.msra.mxu0 %v4820
    %4842 = vmatprep.subr.bf16.mxu0 0
    %4843 = vmatpush1.bf16.msra.mxu0 %v4821
    %4844 = vmatprep.subr.bf16.mxu0 0
    %4845 = vmatpush1.bf16.msra.mxu0 %v4822
    %4846 = vmatprep.subr.bf16.mxu0 0
    %4847 = vmatpush1.bf16.msra.mxu0 %v4823
    %4848 = vmatprep.subr.bf16.mxu0 0
    %4849 = vmatpush1.bf16.msra.mxu0 0
    %4850 = vmatprep.subr.bf16.mxu0 0
    %4851 = vmatpush1.bf16.msra.mxu0 0
    %4852 = vmatprep.subr.bf16.mxu0 0
    %4853 = vmatpush1.bf16.msra.mxu0 0
    %4854 = vmatprep.subr.bf16.mxu0 0
    %4855 = vmatpush1.bf16.msra.mxu0 0
    %4856 = vmatprep.subr.bf16.mxu0 0
    %4857 = vmatpush1.bf16.msra.mxu0 0
    %4858 = vmatprep.subr.bf16.mxu0 0
    %4859 = vmatpush1.bf16.msra.mxu0 0
    %4860 = vmatprep.subr.bf16.mxu0 0
    %4861 = vmatpush1.bf16.msra.mxu0 0
    %4862 = vmatprep.subr.bf16.mxu0 0
    %4863 = vmatpush1.bf16.msra.mxu0 0
    %4864 = vmatprep.mubr.bf16.mxu0 0
    %4865 = vmatmul.mubr.bf16.gmra.mrb[0].mxu0 %v4760
    %v4866 = vpop.f32.mrb[0].mxu0
    %v4867 = vadd.f32 %v4782, %v4866
    %v4868 = vpop.f32.mrb[0].mxu0
    %v4869 = vpop.f32.mrb[0].mxu0
    %v4870 = vpop.f32.mrb[0].mxu0
    %4871 = vdwg.mxu0
    %vm4872 = vcmask 1041408
    %v4873 = vsel %vm4872, %v4867, -inf
    %4874 = vmax.xlane.f32.xlu0 %v4873
    %v4875 = vpop.xlane.xlu0 %4874
    %v4876 = vsub.f32 %v4867, %v4875
    %v4877 = vmul.f32 %v4876, 1.442695
    %v4878 = vpow.pop %v4877
    %v4879 = vsel %vm4872, %v4878, 0.0
    %4880 = vadd.xlane.f32.xlu0 %v4879
    %v4881 = vpop.xlane.xlu0 %4880
    %v4882 = vlog2.pop %v4881
    %v4883 = vmul.f32 %v4882, 0.6931472
    %v4884 = vsub.f32 %v4876, %v4883
    %4885 = vst [vmem:[#allocation14] sm:$0x3] %v4884
    // Predicated region
    $region130: #{tpu_custom_call.1} parent=1 // pred_check
      _
    $region131: #{tpu_custom_call.1} parent=1 // pred_check_branch
      %4887 = sbr.rel (0) target = $region133
    $region132: #{tpu_custom_call.1} parent=1 // pred_region
      %s4889 = ssub.s32 32, 32
      %4890 = vsyncadd [#allocation5], %s4889
      %s4892 = sshll.u32 [#allocation14], 4
      %s4893 = int_to_ptr.vmem [resolvable:$true] %s4892
      %4895 = dma.vmem_to_hbm [thread:$0]  %s4893, 32, %s26, [#allocation5]
    $region133: #{tpu_custom_call.1} parent=1 // pred_fallthru
      _
    // Predicated region
    $region134: #{tpu_custom_call.1} parent=1 // pred_check
      _
    $region135: #{tpu_custom_call.1} parent=1 // pred_check_branch
      %4897 = sbr.rel (0) target = $region137
    $region136: #{tpu_custom_call.1} parent=1 // pred_region
      %4898 = dma.done [#allocation5], 32
    $region137: #{tpu_custom_call.1} parent=1 // pred_fallthru
      _
    %4899 = vsyncpa [#allocation4], 1
    %4900 = vsyncpa [#allocation7], 1
    %4901 = vsyncpa [#allocation10], 1
    %4902 = vsyncpa [#allocation13], 1
    %4903 = vsyncpa [#allocation5], 1

</llo_original>
